<compile_context>
chip_gen: v6e
topology: v6e:2x2x1
jax: 0.10.0
libtpu: 0.0.40
codegen_flags: <defaults>
</compile_context>

<pallas_src>
import functools

import jax
import jax.numpy as jnp
from jax.experimental import pallas as pl
from jax.experimental.pallas import tpu as pltpu


def _tagrnn_kernel(x_ref,
                   wih_f_ref, whh_f_ref, b_f_ref,
                   wih_b_ref, whh_b_ref, b_b_ref,
                   wout_f_ref, wout_b_ref, bout_ref,
                   o_ref,
                   *, activate, unroll):
    # Per batch-block shapes:
    #   x_ref:      (T, TB, I)        bf16, time-major input (I == num_tags)
    #   wih_*:      (I, 4*Hd)         bf16 (transposed in wrapper)
    #   whh_*:      (Hd, 4*Hd)        bf16
    #   b_*:        (1, 4*Hd)         f32  (b_ih + b_hh)
    #   wout_f/b:   (Hd, num_tags)    bf16 (halves of out.weight.T)
    #   bout:       (1, num_tags)     f32
    #   o_ref:      (T, TB, num_tags) f32
    T, TB, _ = x_ref.shape
    Hd = whh_f_ref.shape[0]
    H4 = 4 * Hd

    # Hoist weight / bias loads (and the bias broadcast) out of the loop.
    wih_f = wih_f_ref[...]
    whh_f = whh_f_ref[...]
    wih_b = wih_b_ref[...]
    whh_b = whh_b_ref[...]
    wout_f = wout_f_ref[...]
    wout_b = wout_b_ref[...]
    bias_f = jnp.broadcast_to(b_f_ref[...], (TB, H4))
    bias_b = jnp.broadcast_to(b_b_ref[...], (TB, H4))

    # Output accumulator lives directly in o_ref; output bias added in epilogue.
    o_ref[...] = jnp.zeros_like(o_ref)

    def cell(gates, c):
        # PyTorch LSTM gate order: i, f, g, o.  Gate math stays f32
        # (v5e VPU/EUP have no bf16).
        i = jax.nn.sigmoid(gates[:, 0:Hd])
        f = jax.nn.sigmoid(gates[:, Hd:2 * Hd])
        g = jnp.tanh(gates[:, 2 * Hd:3 * Hd])
        o = jax.nn.sigmoid(gates[:, 3 * Hd:4 * Hd])
        c_new = f * c + i * g
        h_new = o * jnp.tanh(c_new)
        return h_new, c_new

    h0 = jnp.zeros((TB, Hd), jnp.bfloat16)   # h carried as bf16 MXU operand
    c0 = jnp.zeros((TB, Hd), jnp.float32)    # cell state stays f32

    def body(s, carry):
        hf, cf, hb, cb = carry
        tb = T - 1 - s
        # Interleaved directions: the four gate matmuls below form independent
        # MXU chains, so their result latencies overlap instead of serializing.
        gf = (jnp.dot(x_ref[s], wih_f, preferred_element_type=jnp.float32)
              + jnp.dot(hf, whh_f, preferred_element_type=jnp.float32)
              + bias_f)
        gb = (jnp.dot(x_ref[tb], wih_b, preferred_element_type=jnp.float32)
              + jnp.dot(hb, whh_b, preferred_element_type=jnp.float32)
              + bias_b)
        hf_new, cf_new = cell(gf, cf)
        hb_new, cb_new = cell(gb, cb)
        hf_new = hf_new.astype(jnp.bfloat16)
        hb_new = hb_new.astype(jnp.bfloat16)
        # Output projection per direction, accumulated straight into the row it
        # belongs to: no (T,B,2Hd) hidden buffer, no lane-axis concat, no
        # post-loop reshape/matmul.
        o_ref[s] = o_ref[s] + jnp.dot(hf_new, wout_f,
                                      preferred_element_type=jnp.float32)
        o_ref[tb] = o_ref[tb] + jnp.dot(hb_new, wout_b,
                                        preferred_element_type=jnp.float32)
        return (hf_new, cf_new, hb_new, cb_new)

    jax.lax.fori_loop(0, T, body, (h0, c0, h0, c0), unroll=unroll)

    # Epilogue: output bias + activation.  (mask is applied outside the kernel)
    logits = o_ref[...] + bout_ref[...]
    if activate == 'sm':
        m = jnp.max(logits, axis=-1, keepdims=True)
        e = jnp.exp(logits - m)
        act = e * pl.reciprocal(jnp.sum(e, axis=-1, keepdims=True), approx=False)
    elif activate == 'logsm':
        m = jnp.max(logits, axis=-1, keepdims=True)
        lse = jnp.log(jnp.sum(jnp.exp(logits - m), axis=-1, keepdims=True)) + m
        act = logits - lse
    else:
        act = logits
    o_ref[...] = act


def make_params(key, num_tags, hidden_size):
    """Deterministic synthetic parameters matching the nn.Module shapes."""
    Hd = hidden_size // 2           # per-direction hidden (bidirectional)
    k_lstm = 1.0 / float(Hd) ** 0.5
    k_out = 1.0 / float(hidden_size) ** 0.5
    keys = jax.random.split(key, 10)

    def u(k, shape, scale):
        return jax.random.uniform(k, shape, jnp.float32, -scale, scale)

    return dict(
        wih_f=u(keys[0], (4 * Hd, num_tags), k_lstm),
        whh_f=u(keys[1], (4 * Hd, Hd), k_lstm),
        bih_f=u(keys[2], (4 * Hd,), k_lstm),
        bhh_f=u(keys[3], (4 * Hd,), k_lstm),
        wih_b=u(keys[4], (4 * Hd, num_tags), k_lstm),
        whh_b=u(keys[5], (4 * Hd, Hd), k_lstm),
        bih_b=u(keys[6], (4 * Hd,), k_lstm),
        bhh_b=u(keys[7], (4 * Hd,), k_lstm),
        wout=u(keys[8], (num_tags, hidden_size), k_out),
        bout=u(keys[9], (num_tags,), k_out),
    )


def tagrnn_forward(y_in, mask, params, activate='logsm'):
    # y_in: (B, T, num_tags), mask: (B, T) -> out: (B, T, num_tags)
    # TODO(synk): taglm_worddp=0 -> nn.Dropout is identity in eval/with p=0; skipped.
    B, T, I = y_in.shape
    Hd = params['whh_f'].shape[1]
    H4 = 4 * Hd
    num_tags = params['wout'].shape[0]

    # Time-major bf16 input (MXU operand).  The transpose stays in XLA.
    x_tm = jnp.transpose(y_in, (1, 0, 2)).astype(jnp.bfloat16)      # (T, B, I)

    # Pack weights: MXU operands in bf16, biases (added post-accumulation) f32.
    wih_f = params['wih_f'].T.astype(jnp.bfloat16)                  # (I, 4Hd)
    whh_f = params['whh_f'].T.astype(jnp.bfloat16)                  # (Hd, 4Hd)
    b_f = (params['bih_f'] + params['bhh_f']).reshape(1, H4).astype(jnp.float32)
    wih_b = params['wih_b'].T.astype(jnp.bfloat16)
    whh_b = params['whh_b'].T.astype(jnp.bfloat16)
    b_b = (params['bih_b'] + params['bhh_b']).reshape(1, H4).astype(jnp.float32)
    wout_t = params['wout'].T                                       # (2Hd, tags)
    wout_f = wout_t[:Hd].astype(jnp.bfloat16)                       # (Hd, tags)
    wout_b = wout_t[Hd:].astype(jnp.bfloat16)                       # (Hd, tags)
    bout = params['bout'].reshape(1, num_tags).astype(jnp.float32)

    # Batch tiling (parallel grid axis -> megacore sharding / VMEM bound).
    # Block B-dim must be a multiple of 8 or equal to the full batch.
    if B % 8 == 0:
        TB = min(B, 32)
        if B % TB != 0:
            TB = 8
    else:
        TB = B
    grid = (B // TB,)

    def full_spec(arr):
        nd = arr.ndim
        return pl.BlockSpec(arr.shape, lambda b, nd=nd: (0,) * nd)

    in_specs = [
        pl.BlockSpec((T, TB, I), lambda b: (0, b, 0)),
        full_spec(wih_f), full_spec(whh_f), full_spec(b_f),
        full_spec(wih_b), full_spec(whh_b), full_spec(b_b),
        full_spec(wout_f), full_spec(wout_b), full_spec(bout),
    ]
    out_spec = pl.BlockSpec((T, TB, num_tags), lambda b: (0, b, 0))

    # Explicit scoped-VMEM budget: double-buffered per-block I/O + weights + slack.
    est = (2 * (T * TB * I * 2 + T * TB * num_tags * 4)
           + 4 * (I * H4 * 2 + Hd * H4 * 2 + H4 * 4)
           + 4 * Hd * num_tags * 2 + 2 * num_tags * 4
           + (8 << 20))
    vmem_limit = int(min(128 * 1024 * 1024, max(est, 32 * 1024 * 1024)))

    unroll = int(min(T, 8))

    out_tm = pl.pallas_call(
        functools.partial(_tagrnn_kernel, activate=activate, unroll=unroll),
        out_shape=jax.ShapeDtypeStruct((T, B, num_tags), jnp.float32),
        grid=grid,
        in_specs=in_specs,
        out_specs=out_spec,
        compiler_params=pltpu.CompilerParams(
            dimension_semantics=("parallel",),
            vmem_limit_bytes=vmem_limit),
    )(x_tm, wih_f, whh_f, b_f, wih_b, whh_b, b_b, wout_f, wout_b, bout)

    # Mask multiply + back to batch-first; XLA fuses these into the transpose.
    return jnp.transpose(out_tm, (1, 0, 2)) * mask.astype(jnp.float32)[:, :, None]


def tagrnn_reference(y_in, mask, params, activate='logsm'):
    """Pure-JAX f32 reference mirroring torch semantics (for verification only)."""
    B, T, I = y_in.shape
    Hd = params['whh_f'].shape[1]

    def run_dir(wih, whh, bih, bhh, reverse):
        xs = jnp.transpose(y_in.astype(jnp.float32), (1, 0, 2))
        if reverse:
            xs = xs[::-1]

        def step(carry, x_t):
            h, c = carry
            gates = x_t @ wih.T + h @ whh.T + bih + bhh
            i = jax.nn.sigmoid(gates[:, :Hd])
            f = jax.nn.sigmoid(gates[:, Hd:2 * Hd])
            g = jnp.tanh(gates[:, 2 * Hd:3 * Hd])
            o = jax.nn.sigmoid(gates[:, 3 * Hd:])
            c = f * c + i * g
            h = o * jnp.tanh(c)
            return (h, c), h

        h0 = jnp.zeros((B, Hd), jnp.float32)
        c0 = jnp.zeros((B, Hd), jnp.float32)
        _, hs = jax.lax.scan(step, (h0, c0), xs)
        if reverse:
            hs = hs[::-1]
        return jnp.transpose(hs, (1, 0, 2))

    hf = run_dir(params['wih_f'], params['whh_f'], params['bih_f'], params['bhh_f'], False)
    hb = run_dir(params['wih_b'], params['whh_b'], params['bih_b'], params['bhh_b'], True)
    h = jnp.concatenate([hf, hb], axis=-1)
    logits = h @ params['wout'].T + params['bout']
    if activate == 'sm':
        act = jax.nn.softmax(logits, axis=2)
    elif activate == 'logsm':
        act = jax.nn.log_softmax(logits, axis=2)
    else:
        act = logits
    return act * mask.astype(jnp.float32)[:, :, None]


if __name__ == "__main__":
    key = jax.random.PRNGKey(0)
    B, T, num_tags, hidden = 2, 8, 8, 32   # taglm_hidden_size=32 -> 16 per direction

    k_x, k_p = jax.random.split(key, 2)
    y_in = jax.random.normal(k_x, (B, T, num_tags), jnp.float32)
    lengths = jnp.array([T, T - 3])
    mask = jnp.arange(T)[None, :] < lengths[:, None]     # (B, T) bool

    params = make_params(k_p, num_tags, hidden)

    out = tagrnn_forward(y_in, mask, params, activate='logsm')
    out = jax.block_until_ready(out)

    ref = tagrnn_reference(y_in, mask, params, activate='logsm')
    assert out.shape == (B, T, num_tags)
    assert bool(jnp.all(jnp.isfinite(out)))
    # bf16 MXU operands raise the error floor vs the f32 reference.
    max_err = float(jnp.max(jnp.abs(out - ref)))
    assert max_err < 5e-2, f"mismatch vs reference: {max_err}"

    print("KERNEL_OK")
</pallas_src>

<mosaic_0001>
module attributes {stable_mosaic.version = 11 : i64} {
  func.func @_tagrnn_kernel(%arg0: i32, %arg1: memref<8x2x8xbf16, #tpu.memory_space<vmem>>, %arg2: memref<8x64xbf16, #tpu.memory_space<vmem>>, %arg3: memref<16x64xbf16, #tpu.memory_space<vmem>>, %arg4: memref<1x64xf32, #tpu.memory_space<vmem>>, %arg5: memref<8x64xbf16, #tpu.memory_space<vmem>>, %arg6: memref<16x64xbf16, #tpu.memory_space<vmem>>, %arg7: memref<1x64xf32, #tpu.memory_space<vmem>>, %arg8: memref<16x8xbf16, #tpu.memory_space<vmem>>, %arg9: memref<16x8xbf16, #tpu.memory_space<vmem>>, %arg10: memref<1x8xf32, #tpu.memory_space<vmem>>, %arg11: memref<8x2x8xf32, #tpu.memory_space<vmem>>) attributes {dimension_semantics = [#tpu.dimension_semantics<parallel>], iteration_bounds = array<i64: 1>, scalar_prefetch = 0 : i64, scratch_operands = 0 : i64, tpu.core_type = #tpu.core_type<tc>, window_params = [{transform_indices = @transform_0, window_bounds = array<i64: 8, 2, 8>}, {pipeline_mode = #tpu.pipeline_mode<synchronous>, transform_indices = @transform_1, window_bounds = array<i64: 8, 64>}, {pipeline_mode = #tpu.pipeline_mode<synchronous>, transform_indices = @transform_2, window_bounds = array<i64: 16, 64>}, {pipeline_mode = #tpu.pipeline_mode<synchronous>, transform_indices = @transform_3, window_bounds = array<i64: 1, 64>}, {pipeline_mode = #tpu.pipeline_mode<synchronous>, transform_indices = @transform_4, window_bounds = array<i64: 8, 64>}, {pipeline_mode = #tpu.pipeline_mode<synchronous>, transform_indices = @transform_5, window_bounds = array<i64: 16, 64>}, {pipeline_mode = #tpu.pipeline_mode<synchronous>, transform_indices = @transform_6, window_bounds = array<i64: 1, 64>}, {pipeline_mode = #tpu.pipeline_mode<synchronous>, transform_indices = @transform_7, window_bounds = array<i64: 16, 8>}, {pipeline_mode = #tpu.pipeline_mode<synchronous>, transform_indices = @transform_8, window_bounds = array<i64: 16, 8>}, {pipeline_mode = #tpu.pipeline_mode<synchronous>, transform_indices = @transform_9, window_bounds = array<i64: 1, 8>}, {transform_indices = @transform_10, window_bounds = array<i64: 8, 2, 8>}]} {
    %c0 = arith.constant 0 : index
    %c0_0 = arith.constant 0 : index
    %0 = vector.load %arg2[%c0, %c0_0] : memref<8x64xbf16, #tpu.memory_space<vmem>>, vector<8x64xbf16>
    %c0_1 = arith.constant 0 : index
    %c0_2 = arith.constant 0 : index
    %1 = vector.load %arg3[%c0_1, %c0_2] : memref<16x64xbf16, #tpu.memory_space<vmem>>, vector<16x64xbf16>
    %c0_3 = arith.constant 0 : index
    %c0_4 = arith.constant 0 : index
    %2 = vector.load %arg5[%c0_3, %c0_4] : memref<8x64xbf16, #tpu.memory_space<vmem>>, vector<8x64xbf16>
    %c0_5 = arith.constant 0 : index
    %c0_6 = arith.constant 0 : index
    %3 = vector.load %arg6[%c0_5, %c0_6] : memref<16x64xbf16, #tpu.memory_space<vmem>>, vector<16x64xbf16>
    %c0_7 = arith.constant 0 : index
    %c0_8 = arith.constant 0 : index
    %4 = vector.load %arg8[%c0_7, %c0_8] : memref<16x8xbf16, #tpu.memory_space<vmem>>, vector<16x8xbf16>
    %c0_9 = arith.constant 0 : index
    %c0_10 = arith.constant 0 : index
    %5 = vector.load %arg9[%c0_9, %c0_10] : memref<16x8xbf16, #tpu.memory_space<vmem>>, vector<16x8xbf16>
    %c0_11 = arith.constant 0 : index
    %c0_12 = arith.constant 0 : index
    %6 = vector.load %arg4[%c0_11, %c0_12] : memref<1x64xf32, #tpu.memory_space<vmem>>, vector<1x64xf32>
    %7 = vector.shape_cast %6 : vector<1x64xf32> to vector<1x64xf32>
    %8 = vector.broadcast %7 : vector<1x64xf32> to vector<2x64xf32>
    %c0_13 = arith.constant 0 : index
    %c0_14 = arith.constant 0 : index
    %9 = vector.load %arg7[%c0_13, %c0_14] : memref<1x64xf32, #tpu.memory_space<vmem>>, vector<1x64xf32>
    %10 = vector.shape_cast %9 : vector<1x64xf32> to vector<1x64xf32>
    %11 = vector.broadcast %10 : vector<1x64xf32> to vector<2x64xf32>
    %cst = arith.constant 0.000000e+00 : f32
    %12 = vector.broadcast %cst : f32 to vector<8x2x8xf32>
    %c0_15 = arith.constant 0 : index
    %c0_16 = arith.constant 0 : index
    %c0_17 = arith.constant 0 : index
    %13 = vector.load %arg11[%c0_15, %c0_16, %c0_17] : memref<8x2x8xf32, #tpu.memory_space<vmem>>, vector<8x2x8xf32>
    tpu.vector_store %arg11[%c0_15, %c0_16, %c0_17], %12 {strides = array<i32>} : memref<8x2x8xf32, #tpu.memory_space<vmem>>, vector<8x2x8xf32>,
    %cst_18 = arith.constant 0.000000e+00 : bf16
    %14 = vector.broadcast %cst_18 : bf16 to vector<2x16xbf16>
    %cst_19 = arith.constant 0.000000e+00 : f32
    %15 = vector.broadcast %cst_19 : f32 to vector<2x16xf32>
    %c0_i32 = arith.constant 0 : i32
    %c7_i32 = arith.constant 7 : i32
    %16 = arith.subi %c7_i32, %c0_i32 : i32
    %17 = arith.index_cast %c0_i32 : i32 to index
    %c0_20 = arith.constant 0 : index
    %c0_21 = arith.constant 0 : index
    %18 = vector.load %arg1[%17, %c0_20, %c0_21] : memref<8x2x8xbf16, #tpu.memory_space<vmem>>, vector<1x2x8xbf16>
    %19 = vector.shape_cast %18 : vector<1x2x8xbf16> to vector<2x8xbf16>
    %cst_22 = arith.constant dense<0.000000e+00> : vector<2x64xf32>
    %20 = tpu.matmul %19, %0, %cst_22 {dimension_numbers = #tpu.dot_dimension_numbers<[1], [0], [0], [1], [0, 0, 1, 1], [], []>} : vector<2x8xbf16>, vector<8x64xbf16>, vector<2x64xf32> -> vector<2x64xf32>
    %cst_23 = arith.constant dense<0.000000e+00> : vector<2x64xf32>
    %21 = tpu.matmul %14, %1, %cst_23 {dimension_numbers = #tpu.dot_dimension_numbers<[1], [0], [0], [1], [0, 0, 1, 1], [], []>} : vector<2x16xbf16>, vector<16x64xbf16>, vector<2x64xf32> -> vector<2x64xf32>
    %22 = arith.addf %20, %21 : vector<2x64xf32>
    %23 = arith.addf %22, %8 : vector<2x64xf32>
    %24 = arith.index_cast %16 : i32 to index
    %c0_24 = arith.constant 0 : index
    %c0_25 = arith.constant 0 : index
    %25 = vector.load %arg1[%24, %c0_24, %c0_25] : memref<8x2x8xbf16, #tpu.memory_space<vmem>>, vector<1x2x8xbf16>
    %26 = vector.shape_cast %25 : vector<1x2x8xbf16> to vector<2x8xbf16>
    %cst_26 = arith.constant dense<0.000000e+00> : vector<2x64xf32>
    %27 = tpu.matmul %26, %2, %cst_26 {dimension_numbers = #tpu.dot_dimension_numbers<[1], [0], [0], [1], [0, 0, 1, 1], [], []>} : vector<2x8xbf16>, vector<8x64xbf16>, vector<2x64xf32> -> vector<2x64xf32>
    %cst_27 = arith.constant dense<0.000000e+00> : vector<2x64xf32>
    %28 = tpu.matmul %14, %3, %cst_27 {dimension_numbers = #tpu.dot_dimension_numbers<[1], [0], [0], [1], [0, 0, 1, 1], [], []>} : vector<2x16xbf16>, vector<16x64xbf16>, vector<2x64xf32> -> vector<2x64xf32>
    %29 = arith.addf %27, %28 : vector<2x64xf32>
    %30 = arith.addf %29, %11 : vector<2x64xf32>
    %31 = vector.extract_strided_slice %23 {offsets = [0, 0], sizes = [2, 16], strides = [1, 1]} : vector<2x64xf32> to vector<2x16xf32>
    %32 = arith.negf %31 : vector<2x16xf32>
    %33 = math.exp %32 : vector<2x16xf32>
    %cst_28 = arith.constant 1.000000e+00 : f32
    %34 = vector.broadcast %cst_28 : f32 to vector<2x16xf32>
    %35 = arith.addf %34, %33 : vector<2x16xf32>
    %36 = arith.divf %34, %35 : vector<2x16xf32>
    %37 = vector.extract_strided_slice %23 {offsets = [0, 16], sizes = [2, 16], strides = [1, 1]} : vector<2x64xf32> to vector<2x16xf32>
    %38 = arith.negf %37 : vector<2x16xf32>
    %39 = math.exp %38 : vector<2x16xf32>
    %cst_29 = arith.constant 1.000000e+00 : f32
    %40 = vector.broadcast %cst_29 : f32 to vector<2x16xf32>
    %41 = arith.addf %40, %39 : vector<2x16xf32>
    %42 = arith.divf %40, %41 : vector<2x16xf32>
    %43 = vector.extract_strided_slice %23 {offsets = [0, 32], sizes = [2, 16], strides = [1, 1]} : vector<2x64xf32> to vector<2x16xf32>
    %44 = math.tanh %43 : vector<2x16xf32>
    %45 = vector.extract_strided_slice %23 {offsets = [0, 48], sizes = [2, 16], strides = [1, 1]} : vector<2x64xf32> to vector<2x16xf32>
    %46 = arith.negf %45 : vector<2x16xf32>
    %47 = math.exp %46 : vector<2x16xf32>
    %cst_30 = arith.constant 1.000000e+00 : f32
    %48 = vector.broadcast %cst_30 : f32 to vector<2x16xf32>
    %49 = arith.addf %48, %47 : vector<2x16xf32>
    %50 = arith.divf %48, %49 : vector<2x16xf32>
    %51 = arith.mulf %42, %15 : vector<2x16xf32>
    %52 = arith.mulf %36, %44 : vector<2x16xf32>
    %53 = arith.addf %51, %52 : vector<2x16xf32>
    %54 = math.tanh %53 : vector<2x16xf32>
    %55 = arith.mulf %50, %54 : vector<2x16xf32>
    %56 = vector.extract_strided_slice %30 {offsets = [0, 0], sizes = [2, 16], strides = [1, 1]} : vector<2x64xf32> to vector<2x16xf32>
    %57 = arith.negf %56 : vector<2x16xf32>
    %58 = math.exp %57 : vector<2x16xf32>
    %cst_31 = arith.constant 1.000000e+00 : f32
    %59 = vector.broadcast %cst_31 : f32 to vector<2x16xf32>
    %60 = arith.addf %59, %58 : vector<2x16xf32>
    %61 = arith.divf %59, %60 : vector<2x16xf32>
    %62 = vector.extract_strided_slice %30 {offsets = [0, 16], sizes = [2, 16], strides = [1, 1]} : vector<2x64xf32> to vector<2x16xf32>
    %63 = arith.negf %62 : vector<2x16xf32>
    %64 = math.exp %63 : vector<2x16xf32>
    %cst_32 = arith.constant 1.000000e+00 : f32
    %65 = vector.broadcast %cst_32 : f32 to vector<2x16xf32>
    %66 = arith.addf %65, %64 : vector<2x16xf32>
    %67 = arith.divf %65, %66 : vector<2x16xf32>
    %68 = vector.extract_strided_slice %30 {offsets = [0, 32], sizes = [2, 16], strides = [1, 1]} : vector<2x64xf32> to vector<2x16xf32>
    %69 = math.tanh %68 : vector<2x16xf32>
    %70 = vector.extract_strided_slice %30 {offsets = [0, 48], sizes = [2, 16], strides = [1, 1]} : vector<2x64xf32> to vector<2x16xf32>
    %71 = arith.negf %70 : vector<2x16xf32>
    %72 = math.exp %71 : vector<2x16xf32>
    %cst_33 = arith.constant 1.000000e+00 : f32
    %73 = vector.broadcast %cst_33 : f32 to vector<2x16xf32>
    %74 = arith.addf %73, %72 : vector<2x16xf32>
    %75 = arith.divf %73, %74 : vector<2x16xf32>
    %76 = arith.mulf %67, %15 : vector<2x16xf32>
    %77 = arith.mulf %61, %69 : vector<2x16xf32>
    %78 = arith.addf %76, %77 : vector<2x16xf32>
    %79 = math.tanh %78 : vector<2x16xf32>
    %80 = arith.mulf %75, %79 : vector<2x16xf32>
    %81 = arith.truncf %55 : vector<2x16xf32> to vector<2x16xbf16>
    %82 = arith.truncf %80 : vector<2x16xf32> to vector<2x16xbf16>
    %83 = arith.index_cast %c0_i32 : i32 to index
    %c0_34 = arith.constant 0 : index
    %c0_35 = arith.constant 0 : index
    %84 = vector.load %arg11[%83, %c0_34, %c0_35] : memref<8x2x8xf32, #tpu.memory_space<vmem>>, vector<1x2x8xf32>
    %85 = vector.shape_cast %84 : vector<1x2x8xf32> to vector<2x8xf32>
    %cst_36 = arith.constant dense<0.000000e+00> : vector<2x8xf32>
    %86 = tpu.matmul %81, %4, %cst_36 {dimension_numbers = #tpu.dot_dimension_numbers<[1], [0], [0], [1], [0, 0, 1, 1], [], []>} : vector<2x16xbf16>, vector<16x8xbf16>, vector<2x8xf32> -> vector<2x8xf32>
    %87 = arith.addf %85, %86 : vector<2x8xf32>
    %88 = arith.index_cast %c0_i32 : i32 to index
    %c0_37 = arith.constant 0 : index
    %c0_38 = arith.constant 0 : index
    %89 = vector.load %arg11[%88, %c0_37, %c0_38] : memref<8x2x8xf32, #tpu.memory_space<vmem>>, vector<1x2x8xf32>
    %90 = vector.shape_cast %89 : vector<1x2x8xf32> to vector<2x8xf32>
    %91 = vector.shape_cast %87 : vector<2x8xf32> to vector<1x2x8xf32>
    tpu.vector_store %arg11[%88, %c0_37, %c0_38], %91 {strides = array<i32>} : memref<8x2x8xf32, #tpu.memory_space<vmem>>, vector<1x2x8xf32>,
    %92 = arith.index_cast %16 : i32 to index
    %c0_39 = arith.constant 0 : index
    %c0_40 = arith.constant 0 : index
    %93 = vector.load %arg11[%92, %c0_39, %c0_40] : memref<8x2x8xf32, #tpu.memory_space<vmem>>, vector<1x2x8xf32>
    %94 = vector.shape_cast %93 : vector<1x2x8xf32> to vector<2x8xf32>
    %cst_41 = arith.constant dense<0.000000e+00> : vector<2x8xf32>
    %95 = tpu.matmul %82, %5, %cst_41 {dimension_numbers = #tpu.dot_dimension_numbers<[1], [0], [0], [1], [0, 0, 1, 1], [], []>} : vector<2x16xbf16>, vector<16x8xbf16>, vector<2x8xf32> -> vector<2x8xf32>
    %96 = arith.addf %94, %95 : vector<2x8xf32>
    %97 = arith.index_cast %16 : i32 to index
    %c0_42 = arith.constant 0 : index
    %c0_43 = arith.constant 0 : index
    %98 = vector.load %arg11[%97, %c0_42, %c0_43] : memref<8x2x8xf32, #tpu.memory_space<vmem>>, vector<1x2x8xf32>
    %99 = vector.shape_cast %98 : vector<1x2x8xf32> to vector<2x8xf32>
    %100 = vector.shape_cast %96 : vector<2x8xf32> to vector<1x2x8xf32>
    tpu.vector_store %arg11[%97, %c0_42, %c0_43], %100 {strides = array<i32>} : memref<8x2x8xf32, #tpu.memory_space<vmem>>, vector<1x2x8xf32>,
    %c1_i32 = arith.constant 1 : i32
    %c7_i32_44 = arith.constant 7 : i32
    %101 = arith.subi %c7_i32_44, %c1_i32 : i32
    %102 = arith.index_cast %c1_i32 : i32 to index
    %c0_45 = arith.constant 0 : index
    %c0_46 = arith.constant 0 : index
    %103 = vector.load %arg1[%102, %c0_45, %c0_46] : memref<8x2x8xbf16, #tpu.memory_space<vmem>>, vector<1x2x8xbf16>
    %104 = vector.shape_cast %103 : vector<1x2x8xbf16> to vector<2x8xbf16>
    %cst_47 = arith.constant dense<0.000000e+00> : vector<2x64xf32>
    %105 = tpu.matmul %104, %0, %cst_47 {dimension_numbers = #tpu.dot_dimension_numbers<[1], [0], [0], [1], [0, 0, 1, 1], [], []>} : vector<2x8xbf16>, vector<8x64xbf16>, vector<2x64xf32> -> vector<2x64xf32>
    %cst_48 = arith.constant dense<0.000000e+00> : vector<2x64xf32>
    %106 = tpu.matmul %81, %1, %cst_48 {dimension_numbers = #tpu.dot_dimension_numbers<[1], [0], [0], [1], [0, 0, 1, 1], [], []>} : vector<2x16xbf16>, vector<16x64xbf16>, vector<2x64xf32> -> vector<2x64xf32>
    %107 = arith.addf %105, %106 : vector<2x64xf32>
    %108 = arith.addf %107, %8 : vector<2x64xf32>
    %109 = arith.index_cast %101 : i32 to index
    %c0_49 = arith.constant 0 : index
    %c0_50 = arith.constant 0 : index
    %110 = vector.load %arg1[%109, %c0_49, %c0_50] : memref<8x2x8xbf16, #tpu.memory_space<vmem>>, vector<1x2x8xbf16>
    %111 = vector.shape_cast %110 : vector<1x2x8xbf16> to vector<2x8xbf16>
    %cst_51 = arith.constant dense<0.000000e+00> : vector<2x64xf32>
    %112 = tpu.matmul %111, %2, %cst_51 {dimension_numbers = #tpu.dot_dimension_numbers<[1], [0], [0], [1], [0, 0, 1, 1], [], []>} : vector<2x8xbf16>, vector<8x64xbf16>, vector<2x64xf32> -> vector<2x64xf32>
    %cst_52 = arith.constant dense<0.000000e+00> : vector<2x64xf32>
    %113 = tpu.matmul %82, %3, %cst_52 {dimension_numbers = #tpu.dot_dimension_numbers<[1], [0], [0], [1], [0, 0, 1, 1], [], []>} : vector<2x16xbf16>, vector<16x64xbf16>, vector<2x64xf32> -> vector<2x64xf32>
    %114 = arith.addf %112, %113 : vector<2x64xf32>
    %115 = arith.addf %114, %11 : vector<2x64xf32>
    %116 = vector.extract_strided_slice %108 {offsets = [0, 0], sizes = [2, 16], strides = [1, 1]} : vector<2x64xf32> to vector<2x16xf32>
    %117 = arith.negf %116 : vector<2x16xf32>
    %118 = math.exp %117 : vector<2x16xf32>
    %cst_53 = arith.constant 1.000000e+00 : f32
    %119 = vector.broadcast %cst_53 : f32 to vector<2x16xf32>
    %120 = arith.addf %119, %118 : vector<2x16xf32>
    %121 = arith.divf %119, %120 : vector<2x16xf32>
    %122 = vector.extract_strided_slice %108 {offsets = [0, 16], sizes = [2, 16], strides = [1, 1]} : vector<2x64xf32> to vector<2x16xf32>
    %123 = arith.negf %122 : vector<2x16xf32>
    %124 = math.exp %123 : vector<2x16xf32>
    %cst_54 = arith.constant 1.000000e+00 : f32
    %125 = vector.broadcast %cst_54 : f32 to vector<2x16xf32>
    %126 = arith.addf %125, %124 : vector<2x16xf32>
    %127 = arith.divf %125, %126 : vector<2x16xf32>
    %128 = vector.extract_strided_slice %108 {offsets = [0, 32], sizes = [2, 16], strides = [1, 1]} : vector<2x64xf32> to vector<2x16xf32>
    %129 = math.tanh %128 : vector<2x16xf32>
    %130 = vector.extract_strided_slice %108 {offsets = [0, 48], sizes = [2, 16], strides = [1, 1]} : vector<2x64xf32> to vector<2x16xf32>
    %131 = arith.negf %130 : vector<2x16xf32>
    %132 = math.exp %131 : vector<2x16xf32>
    %cst_55 = arith.constant 1.000000e+00 : f32
    %133 = vector.broadcast %cst_55 : f32 to vector<2x16xf32>
    %134 = arith.addf %133, %132 : vector<2x16xf32>
    %135 = arith.divf %133, %134 : vector<2x16xf32>
    %136 = arith.mulf %127, %53 : vector<2x16xf32>
    %137 = arith.mulf %121, %129 : vector<2x16xf32>
    %138 = arith.addf %136, %137 : vector<2x16xf32>
    %139 = math.tanh %138 : vector<2x16xf32>
    %140 = arith.mulf %135, %139 : vector<2x16xf32>
    %141 = vector.extract_strided_slice %115 {offsets = [0, 0], sizes = [2, 16], strides = [1, 1]} : vector<2x64xf32> to vector<2x16xf32>
    %142 = arith.negf %141 : vector<2x16xf32>
    %143 = math.exp %142 : vector<2x16xf32>
    %cst_56 = arith.constant 1.000000e+00 : f32
    %144 = vector.broadcast %cst_56 : f32 to vector<2x16xf32>
    %145 = arith.addf %144, %143 : vector<2x16xf32>
    %146 = arith.divf %144, %145 : vector<2x16xf32>
    %147 = vector.extract_strided_slice %115 {offsets = [0, 16], sizes = [2, 16], strides = [1, 1]} : vector<2x64xf32> to vector<2x16xf32>
    %148 = arith.negf %147 : vector<2x16xf32>
    %149 = math.exp %148 : vector<2x16xf32>
    %cst_57 = arith.constant 1.000000e+00 : f32
    %150 = vector.broadcast %cst_57 : f32 to vector<2x16xf32>
    %151 = arith.addf %150, %149 : vector<2x16xf32>
    %152 = arith.divf %150, %151 : vector<2x16xf32>
    %153 = vector.extract_strided_slice %115 {offsets = [0, 32], sizes = [2, 16], strides = [1, 1]} : vector<2x64xf32> to vector<2x16xf32>
    %154 = math.tanh %153 : vector<2x16xf32>
    %155 = vector.extract_strided_slice %115 {offsets = [0, 48], sizes = [2, 16], strides = [1, 1]} : vector<2x64xf32> to vector<2x16xf32>
    %156 = arith.negf %155 : vector<2x16xf32>
    %157 = math.exp %156 : vector<2x16xf32>
    %cst_58 = arith.constant 1.000000e+00 : f32
    %158 = vector.broadcast %cst_58 : f32 to vector<2x16xf32>
    %159 = arith.addf %158, %157 : vector<2x16xf32>
    %160 = arith.divf %158, %159 : vector<2x16xf32>
    %161 = arith.mulf %152, %78 : vector<2x16xf32>
    %162 = arith.mulf %146, %154 : vector<2x16xf32>
    %163 = arith.addf %161, %162 : vector<2x16xf32>
    %164 = math.tanh %163 : vector<2x16xf32>
    %165 = arith.mulf %160, %164 : vector<2x16xf32>
    %166 = arith.truncf %140 : vector<2x16xf32> to vector<2x16xbf16>
    %167 = arith.truncf %165 : vector<2x16xf32> to vector<2x16xbf16>
    %168 = arith.index_cast %c1_i32 : i32 to index
    %c0_59 = arith.constant 0 : index
    %c0_60 = arith.constant 0 : index
    %169 = vector.load %arg11[%168, %c0_59, %c0_60] : memref<8x2x8xf32, #tpu.memory_space<vmem>>, vector<1x2x8xf32>
    %170 = vector.shape_cast %169 : vector<1x2x8xf32> to vector<2x8xf32>
    %cst_61 = arith.constant dense<0.000000e+00> : vector<2x8xf32>
    %171 = tpu.matmul %166, %4, %cst_61 {dimension_numbers = #tpu.dot_dimension_numbers<[1], [0], [0], [1], [0, 0, 1, 1], [], []>} : vector<2x16xbf16>, vector<16x8xbf16>, vector<2x8xf32> -> vector<2x8xf32>
    %172 = arith.addf %170, %171 : vector<2x8xf32>
    %173 = arith.index_cast %c1_i32 : i32 to index
    %c0_62 = arith.constant 0 : index
    %c0_63 = arith.constant 0 : index
    %174 = vector.load %arg11[%173, %c0_62, %c0_63] : memref<8x2x8xf32, #tpu.memory_space<vmem>>, vector<1x2x8xf32>
    %175 = vector.shape_cast %174 : vector<1x2x8xf32> to vector<2x8xf32>
    %176 = vector.shape_cast %172 : vector<2x8xf32> to vector<1x2x8xf32>
    tpu.vector_store %arg11[%173, %c0_62, %c0_63], %176 {strides = array<i32>} : memref<8x2x8xf32, #tpu.memory_space<vmem>>, vector<1x2x8xf32>,
    %177 = arith.index_cast %101 : i32 to index
    %c0_64 = arith.constant 0 : index
    %c0_65 = arith.constant 0 : index
    %178 = vector.load %arg11[%177, %c0_64, %c0_65] : memref<8x2x8xf32, #tpu.memory_space<vmem>>, vector<1x2x8xf32>
    %179 = vector.shape_cast %178 : vector<1x2x8xf32> to vector<2x8xf32>
    %cst_66 = arith.constant dense<0.000000e+00> : vector<2x8xf32>
    %180 = tpu.matmul %167, %5, %cst_66 {dimension_numbers = #tpu.dot_dimension_numbers<[1], [0], [0], [1], [0, 0, 1, 1], [], []>} : vector<2x16xbf16>, vector<16x8xbf16>, vector<2x8xf32> -> vector<2x8xf32>
    %181 = arith.addf %179, %180 : vector<2x8xf32>
    %182 = arith.index_cast %101 : i32 to index
    %c0_67 = arith.constant 0 : index
    %c0_68 = arith.constant 0 : index
    %183 = vector.load %arg11[%182, %c0_67, %c0_68] : memref<8x2x8xf32, #tpu.memory_space<vmem>>, vector<1x2x8xf32>
    %184 = vector.shape_cast %183 : vector<1x2x8xf32> to vector<2x8xf32>
    %185 = vector.shape_cast %181 : vector<2x8xf32> to vector<1x2x8xf32>
    tpu.vector_store %arg11[%182, %c0_67, %c0_68], %185 {strides = array<i32>} : memref<8x2x8xf32, #tpu.memory_space<vmem>>, vector<1x2x8xf32>,
    %c2_i32 = arith.constant 2 : i32
    %c7_i32_69 = arith.constant 7 : i32
    %186 = arith.subi %c7_i32_69, %c2_i32 : i32
    %187 = arith.index_cast %c2_i32 : i32 to index
    %c0_70 = arith.constant 0 : index
    %c0_71 = arith.constant 0 : index
    %188 = vector.load %arg1[%187, %c0_70, %c0_71] : memref<8x2x8xbf16, #tpu.memory_space<vmem>>, vector<1x2x8xbf16>
    %189 = vector.shape_cast %188 : vector<1x2x8xbf16> to vector<2x8xbf16>
    %cst_72 = arith.constant dense<0.000000e+00> : vector<2x64xf32>
    %190 = tpu.matmul %189, %0, %cst_72 {dimension_numbers = #tpu.dot_dimension_numbers<[1], [0], [0], [1], [0, 0, 1, 1], [], []>} : vector<2x8xbf16>, vector<8x64xbf16>, vector<2x64xf32> -> vector<2x64xf32>
    %cst_73 = arith.constant dense<0.000000e+00> : vector<2x64xf32>
    %191 = tpu.matmul %166, %1, %cst_73 {dimension_numbers = #tpu.dot_dimension_numbers<[1], [0], [0], [1], [0, 0, 1, 1], [], []>} : vector<2x16xbf16>, vector<16x64xbf16>, vector<2x64xf32> -> vector<2x64xf32>
    %192 = arith.addf %190, %191 : vector<2x64xf32>
    %193 = arith.addf %192, %8 : vector<2x64xf32>
    %194 = arith.index_cast %186 : i32 to index
    %c0_74 = arith.constant 0 : index
    %c0_75 = arith.constant 0 : index
    %195 = vector.load %arg1[%194, %c0_74, %c0_75] : memref<8x2x8xbf16, #tpu.memory_space<vmem>>, vector<1x2x8xbf16>
    %196 = vector.shape_cast %195 : vector<1x2x8xbf16> to vector<2x8xbf16>
    %cst_76 = arith.constant dense<0.000000e+00> : vector<2x64xf32>
    %197 = tpu.matmul %196, %2, %cst_76 {dimension_numbers = #tpu.dot_dimension_numbers<[1], [0], [0], [1], [0, 0, 1, 1], [], []>} : vector<2x8xbf16>, vector<8x64xbf16>, vector<2x64xf32> -> vector<2x64xf32>
    %cst_77 = arith.constant dense<0.000000e+00> : vector<2x64xf32>
    %198 = tpu.matmul %167, %3, %cst_77 {dimension_numbers = #tpu.dot_dimension_numbers<[1], [0], [0], [1], [0, 0, 1, 1], [], []>} : vector<2x16xbf16>, vector<16x64xbf16>, vector<2x64xf32> -> vector<2x64xf32>
    %199 = arith.addf %197, %198 : vector<2x64xf32>
    %200 = arith.addf %199, %11 : vector<2x64xf32>
    %201 = vector.extract_strided_slice %193 {offsets = [0, 0], sizes = [2, 16], strides = [1, 1]} : vector<2x64xf32> to vector<2x16xf32>
    %202 = arith.negf %201 : vector<2x16xf32>
    %203 = math.exp %202 : vector<2x16xf32>
    %cst_78 = arith.constant 1.000000e+00 : f32
    %204 = vector.broadcast %cst_78 : f32 to vector<2x16xf32>
    %205 = arith.addf %204, %203 : vector<2x16xf32>
    %206 = arith.divf %204, %205 : vector<2x16xf32>
    %207 = vector.extract_strided_slice %193 {offsets = [0, 16], sizes = [2, 16], strides = [1, 1]} : vector<2x64xf32> to vector<2x16xf32>
    %208 = arith.negf %207 : vector<2x16xf32>
    %209 = math.exp %208 : vector<2x16xf32>
    %cst_79 = arith.constant 1.000000e+00 : f32
    %210 = vector.broadcast %cst_79 : f32 to vector<2x16xf32>
    %211 = arith.addf %210, %209 : vector<2x16xf32>
    %212 = arith.divf %210, %211 : vector<2x16xf32>
    %213 = vector.extract_strided_slice %193 {offsets = [0, 32], sizes = [2, 16], strides = [1, 1]} : vector<2x64xf32> to vector<2x16xf32>
    %214 = math.tanh %213 : vector<2x16xf32>
    %215 = vector.extract_strided_slice %193 {offsets = [0, 48], sizes = [2, 16], strides = [1, 1]} : vector<2x64xf32> to vector<2x16xf32>
    %216 = arith.negf %215 : vector<2x16xf32>
    %217 = math.exp %216 : vector<2x16xf32>
    %cst_80 = arith.constant 1.000000e+00 : f32
    %218 = vector.broadcast %cst_80 : f32 to vector<2x16xf32>
    %219 = arith.addf %218, %217 : vector<2x16xf32>
    %220 = arith.divf %218, %219 : vector<2x16xf32>
    %221 = arith.mulf %212, %138 : vector<2x16xf32>
    %222 = arith.mulf %206, %214 : vector<2x16xf32>
    %223 = arith.addf %221, %222 : vector<2x16xf32>
    %224 = math.tanh %223 : vector<2x16xf32>
    %225 = arith.mulf %220, %224 : vector<2x16xf32>
    %226 = vector.extract_strided_slice %200 {offsets = [0, 0], sizes = [2, 16], strides = [1, 1]} : vector<2x64xf32> to vector<2x16xf32>
    %227 = arith.negf %226 : vector<2x16xf32>
    %228 = math.exp %227 : vector<2x16xf32>
    %cst_81 = arith.constant 1.000000e+00 : f32
    %229 = vector.broadcast %cst_81 : f32 to vector<2x16xf32>
    %230 = arith.addf %229, %228 : vector<2x16xf32>
    %231 = arith.divf %229, %230 : vector<2x16xf32>
    %232 = vector.extract_strided_slice %200 {offsets = [0, 16], sizes = [2, 16], strides = [1, 1]} : vector<2x64xf32> to vector<2x16xf32>
    %233 = arith.negf %232 : vector<2x16xf32>
    %234 = math.exp %233 : vector<2x16xf32>
    %cst_82 = arith.constant 1.000000e+00 : f32
    %235 = vector.broadcast %cst_82 : f32 to vector<2x16xf32>
    %236 = arith.addf %235, %234 : vector<2x16xf32>
    %237 = arith.divf %235, %236 : vector<2x16xf32>
    %238 = vector.extract_strided_slice %200 {offsets = [0, 32], sizes = [2, 16], strides = [1, 1]} : vector<2x64xf32> to vector<2x16xf32>
    %239 = math.tanh %238 : vector<2x16xf32>
    %240 = vector.extract_strided_slice %200 {offsets = [0, 48], sizes = [2, 16], strides = [1, 1]} : vector<2x64xf32> to vector<2x16xf32>
    %241 = arith.negf %240 : vector<2x16xf32>
    %242 = math.exp %241 : vector<2x16xf32>
    %cst_83 = arith.constant 1.000000e+00 : f32
    %243 = vector.broadcast %cst_83 : f32 to vector<2x16xf32>
    %244 = arith.addf %243, %242 : vector<2x16xf32>
    %245 = arith.divf %243, %244 : vector<2x16xf32>
    %246 = arith.mulf %237, %163 : vector<2x16xf32>
    %247 = arith.mulf %231, %239 : vector<2x16xf32>
    %248 = arith.addf %246, %247 : vector<2x16xf32>
    %249 = math.tanh %248 : vector<2x16xf32>
    %250 = arith.mulf %245, %249 : vector<2x16xf32>
    %251 = arith.truncf %225 : vector<2x16xf32> to vector<2x16xbf16>
    %252 = arith.truncf %250 : vector<2x16xf32> to vector<2x16xbf16>
    %253 = arith.index_cast %c2_i32 : i32 to index
    %c0_84 = arith.constant 0 : index
    %c0_85 = arith.constant 0 : index
    %254 = vector.load %arg11[%253, %c0_84, %c0_85] : memref<8x2x8xf32, #tpu.memory_space<vmem>>, vector<1x2x8xf32>
    %255 = vector.shape_cast %254 : vector<1x2x8xf32> to vector<2x8xf32>
    %cst_86 = arith.constant dense<0.000000e+00> : vector<2x8xf32>
    %256 = tpu.matmul %251, %4, %cst_86 {dimension_numbers = #tpu.dot_dimension_numbers<[1], [0], [0], [1], [0, 0, 1, 1], [], []>} : vector<2x16xbf16>, vector<16x8xbf16>, vector<2x8xf32> -> vector<2x8xf32>
    %257 = arith.addf %255, %256 : vector<2x8xf32>
    %258 = arith.index_cast %c2_i32 : i32 to index
    %c0_87 = arith.constant 0 : index
    %c0_88 = arith.constant 0 : index
    %259 = vector.load %arg11[%258, %c0_87, %c0_88] : memref<8x2x8xf32, #tpu.memory_space<vmem>>, vector<1x2x8xf32>
    %260 = vector.shape_cast %259 : vector<1x2x8xf32> to vector<2x8xf32>
    %261 = vector.shape_cast %257 : vector<2x8xf32> to vector<1x2x8xf32>
    tpu.vector_store %arg11[%258, %c0_87, %c0_88], %261 {strides = array<i32>} : memref<8x2x8xf32, #tpu.memory_space<vmem>>, vector<1x2x8xf32>,
    %262 = arith.index_cast %186 : i32 to index
    %c0_89 = arith.constant 0 : index
    %c0_90 = arith.constant 0 : index
    %263 = vector.load %arg11[%262, %c0_89, %c0_90] : memref<8x2x8xf32, #tpu.memory_space<vmem>>, vector<1x2x8xf32>
    %264 = vector.shape_cast %263 : vector<1x2x8xf32> to vector<2x8xf32>
    %cst_91 = arith.constant dense<0.000000e+00> : vector<2x8xf32>
    %265 = tpu.matmul %252, %5, %cst_91 {dimension_numbers = #tpu.dot_dimension_numbers<[1], [0], [0], [1], [0, 0, 1, 1], [], []>} : vector<2x16xbf16>, vector<16x8xbf16>, vector<2x8xf32> -> vector<2x8xf32>
    %266 = arith.addf %264, %265 : vector<2x8xf32>
    %267 = arith.index_cast %186 : i32 to index
    %c0_92 = arith.constant 0 : index
    %c0_93 = arith.constant 0 : index
    %268 = vector.load %arg11[%267, %c0_92, %c0_93] : memref<8x2x8xf32, #tpu.memory_space<vmem>>, vector<1x2x8xf32>
    %269 = vector.shape_cast %268 : vector<1x2x8xf32> to vector<2x8xf32>
    %270 = vector.shape_cast %266 : vector<2x8xf32> to vector<1x2x8xf32>
    tpu.vector_store %arg11[%267, %c0_92, %c0_93], %270 {strides = array<i32>} : memref<8x2x8xf32, #tpu.memory_space<vmem>>, vector<1x2x8xf32>,
    %c3_i32 = arith.constant 3 : i32
    %c7_i32_94 = arith.constant 7 : i32
    %271 = arith.subi %c7_i32_94, %c3_i32 : i32
    %272 = arith.index_cast %c3_i32 : i32 to index
    %c0_95 = arith.constant 0 : index
    %c0_96 = arith.constant 0 : index
    %273 = vector.load %arg1[%272, %c0_95, %c0_96] : memref<8x2x8xbf16, #tpu.memory_space<vmem>>, vector<1x2x8xbf16>
    %274 = vector.shape_cast %273 : vector<1x2x8xbf16> to vector<2x8xbf16>
    %cst_97 = arith.constant dense<0.000000e+00> : vector<2x64xf32>
    %275 = tpu.matmul %274, %0, %cst_97 {dimension_numbers = #tpu.dot_dimension_numbers<[1], [0], [0], [1], [0, 0, 1, 1], [], []>} : vector<2x8xbf16>, vector<8x64xbf16>, vector<2x64xf32> -> vector<2x64xf32>
    %cst_98 = arith.constant dense<0.000000e+00> : vector<2x64xf32>
    %276 = tpu.matmul %251, %1, %cst_98 {dimension_numbers = #tpu.dot_dimension_numbers<[1], [0], [0], [1], [0, 0, 1, 1], [], []>} : vector<2x16xbf16>, vector<16x64xbf16>, vector<2x64xf32> -> vector<2x64xf32>
    %277 = arith.addf %275, %276 : vector<2x64xf32>
    %278 = arith.addf %277, %8 : vector<2x64xf32>
    %279 = arith.index_cast %271 : i32 to index
    %c0_99 = arith.constant 0 : index
    %c0_100 = arith.constant 0 : index
    %280 = vector.load %arg1[%279, %c0_99, %c0_100] : memref<8x2x8xbf16, #tpu.memory_space<vmem>>, vector<1x2x8xbf16>
    %281 = vector.shape_cast %280 : vector<1x2x8xbf16> to vector<2x8xbf16>
    %cst_101 = arith.constant dense<0.000000e+00> : vector<2x64xf32>
    %282 = tpu.matmul %281, %2, %cst_101 {dimension_numbers = #tpu.dot_dimension_numbers<[1], [0], [0], [1], [0, 0, 1, 1], [], []>} : vector<2x8xbf16>, vector<8x64xbf16>, vector<2x64xf32> -> vector<2x64xf32>
    %cst_102 = arith.constant dense<0.000000e+00> : vector<2x64xf32>
    %283 = tpu.matmul %252, %3, %cst_102 {dimension_numbers = #tpu.dot_dimension_numbers<[1], [0], [0], [1], [0, 0, 1, 1], [], []>} : vector<2x16xbf16>, vector<16x64xbf16>, vector<2x64xf32> -> vector<2x64xf32>
    %284 = arith.addf %282, %283 : vector<2x64xf32>
    %285 = arith.addf %284, %11 : vector<2x64xf32>
    %286 = vector.extract_strided_slice %278 {offsets = [0, 0], sizes = [2, 16], strides = [1, 1]} : vector<2x64xf32> to vector<2x16xf32>
    %287 = arith.negf %286 : vector<2x16xf32>
    %288 = math.exp %287 : vector<2x16xf32>
    %cst_103 = arith.constant 1.000000e+00 : f32
    %289 = vector.broadcast %cst_103 : f32 to vector<2x16xf32>
    %290 = arith.addf %289, %288 : vector<2x16xf32>
    %291 = arith.divf %289, %290 : vector<2x16xf32>
    %292 = vector.extract_strided_slice %278 {offsets = [0, 16], sizes = [2, 16], strides = [1, 1]} : vector<2x64xf32> to vector<2x16xf32>
    %293 = arith.negf %292 : vector<2x16xf32>
    %294 = math.exp %293 : vector<2x16xf32>
    %cst_104 = arith.constant 1.000000e+00 : f32
    %295 = vector.broadcast %cst_104 : f32 to vector<2x16xf32>
    %296 = arith.addf %295, %294 : vector<2x16xf32>
    %297 = arith.divf %295, %296 : vector<2x16xf32>
    %298 = vector.extract_strided_slice %278 {offsets = [0, 32], sizes = [2, 16], strides = [1, 1]} : vector<2x64xf32> to vector<2x16xf32>
    %299 = math.tanh %298 : vector<2x16xf32>
    %300 = vector.extract_strided_slice %278 {offsets = [0, 48], sizes = [2, 16], strides = [1, 1]} : vector<2x64xf32> to vector<2x16xf32>
    %301 = arith.negf %300 : vector<2x16xf32>
    %302 = math.exp %301 : vector<2x16xf32>
    %cst_105 = arith.constant 1.000000e+00 : f32
    %303 = vector.broadcast %cst_105 : f32 to vector<2x16xf32>
    %304 = arith.addf %303, %302 : vector<2x16xf32>
    %305 = arith.divf %303, %304 : vector<2x16xf32>
    %306 = arith.mulf %297, %223 : vector<2x16xf32>
    %307 = arith.mulf %291, %299 : vector<2x16xf32>
    %308 = arith.addf %306, %307 : vector<2x16xf32>
    %309 = math.tanh %308 : vector<2x16xf32>
    %310 = arith.mulf %305, %309 : vector<2x16xf32>
    %311 = vector.extract_strided_slice %285 {offsets = [0, 0], sizes = [2, 16], strides = [1, 1]} : vector<2x64xf32> to vector<2x16xf32>
    %312 = arith.negf %311 : vector<2x16xf32>
    %313 = math.exp %312 : vector<2x16xf32>
    %cst_106 = arith.constant 1.000000e+00 : f32
    %314 = vector.broadcast %cst_106 : f32 to vector<2x16xf32>
    %315 = arith.addf %314, %313 : vector<2x16xf32>
    %316 = arith.divf %314, %315 : vector<2x16xf32>
    %317 = vector.extract_strided_slice %285 {offsets = [0, 16], sizes = [2, 16], strides = [1, 1]} : vector<2x64xf32> to vector<2x16xf32>
    %318 = arith.negf %317 : vector<2x16xf32>
    %319 = math.exp %318 : vector<2x16xf32>
    %cst_107 = arith.constant 1.000000e+00 : f32
    %320 = vector.broadcast %cst_107 : f32 to vector<2x16xf32>
    %321 = arith.addf %320, %319 : vector<2x16xf32>
    %322 = arith.divf %320, %321 : vector<2x16xf32>
    %323 = vector.extract_strided_slice %285 {offsets = [0, 32], sizes = [2, 16], strides = [1, 1]} : vector<2x64xf32> to vector<2x16xf32>
    %324 = math.tanh %323 : vector<2x16xf32>
    %325 = vector.extract_strided_slice %285 {offsets = [0, 48], sizes = [2, 16], strides = [1, 1]} : vector<2x64xf32> to vector<2x16xf32>
    %326 = arith.negf %325 : vector<2x16xf32>
    %327 = math.exp %326 : vector<2x16xf32>
    %cst_108 = arith.constant 1.000000e+00 : f32
    %328 = vector.broadcast %cst_108 : f32 to vector<2x16xf32>
    %329 = arith.addf %328, %327 : vector<2x16xf32>
    %330 = arith.divf %328, %329 : vector<2x16xf32>
    %331 = arith.mulf %322, %248 : vector<2x16xf32>
    %332 = arith.mulf %316, %324 : vector<2x16xf32>
    %333 = arith.addf %331, %332 : vector<2x16xf32>
    %334 = math.tanh %333 : vector<2x16xf32>
    %335 = arith.mulf %330, %334 : vector<2x16xf32>
    %336 = arith.truncf %310 : vector<2x16xf32> to vector<2x16xbf16>
    %337 = arith.truncf %335 : vector<2x16xf32> to vector<2x16xbf16>
    %338 = arith.index_cast %c3_i32 : i32 to index
    %c0_109 = arith.constant 0 : index
    %c0_110 = arith.constant 0 : index
    %339 = vector.load %arg11[%338, %c0_109, %c0_110] : memref<8x2x8xf32, #tpu.memory_space<vmem>>, vector<1x2x8xf32>
    %340 = vector.shape_cast %339 : vector<1x2x8xf32> to vector<2x8xf32>
    %cst_111 = arith.constant dense<0.000000e+00> : vector<2x8xf32>
    %341 = tpu.matmul %336, %4, %cst_111 {dimension_numbers = #tpu.dot_dimension_numbers<[1], [0], [0], [1], [0, 0, 1, 1], [], []>} : vector<2x16xbf16>, vector<16x8xbf16>, vector<2x8xf32> -> vector<2x8xf32>
    %342 = arith.addf %340, %341 : vector<2x8xf32>
    %343 = arith.index_cast %c3_i32 : i32 to index
    %c0_112 = arith.constant 0 : index
    %c0_113 = arith.constant 0 : index
    %344 = vector.load %arg11[%343, %c0_112, %c0_113] : memref<8x2x8xf32, #tpu.memory_space<vmem>>, vector<1x2x8xf32>
    %345 = vector.shape_cast %344 : vector<1x2x8xf32> to vector<2x8xf32>
    %346 = vector.shape_cast %342 : vector<2x8xf32> to vector<1x2x8xf32>
    tpu.vector_store %arg11[%343, %c0_112, %c0_113], %346 {strides = array<i32>} : memref<8x2x8xf32, #tpu.memory_space<vmem>>, vector<1x2x8xf32>,
    %347 = arith.index_cast %271 : i32 to index
    %c0_114 = arith.constant 0 : index
    %c0_115 = arith.constant 0 : index
    %348 = vector.load %arg11[%347, %c0_114, %c0_115] : memref<8x2x8xf32, #tpu.memory_space<vmem>>, vector<1x2x8xf32>
    %349 = vector.shape_cast %348 : vector<1x2x8xf32> to vector<2x8xf32>
    %cst_116 = arith.constant dense<0.000000e+00> : vector<2x8xf32>
    %350 = tpu.matmul %337, %5, %cst_116 {dimension_numbers = #tpu.dot_dimension_numbers<[1], [0], [0], [1], [0, 0, 1, 1], [], []>} : vector<2x16xbf16>, vector<16x8xbf16>, vector<2x8xf32> -> vector<2x8xf32>
    %351 = arith.addf %349, %350 : vector<2x8xf32>
    %352 = arith.index_cast %271 : i32 to index
    %c0_117 = arith.constant 0 : index
    %c0_118 = arith.constant 0 : index
    %353 = vector.load %arg11[%352, %c0_117, %c0_118] : memref<8x2x8xf32, #tpu.memory_space<vmem>>, vector<1x2x8xf32>
    %354 = vector.shape_cast %353 : vector<1x2x8xf32> to vector<2x8xf32>
    %355 = vector.shape_cast %351 : vector<2x8xf32> to vector<1x2x8xf32>
    tpu.vector_store %arg11[%352, %c0_117, %c0_118], %355 {strides = array<i32>} : memref<8x2x8xf32, #tpu.memory_space<vmem>>, vector<1x2x8xf32>,
    %c4_i32 = arith.constant 4 : i32
    %c7_i32_119 = arith.constant 7 : i32
    %356 = arith.subi %c7_i32_119, %c4_i32 : i32
    %357 = arith.index_cast %c4_i32 : i32 to index
    %c0_120 = arith.constant 0 : index
    %c0_121 = arith.constant 0 : index
    %358 = vector.load %arg1[%357, %c0_120, %c0_121] : memref<8x2x8xbf16, #tpu.memory_space<vmem>>, vector<1x2x8xbf16>
    %359 = vector.shape_cast %358 : vector<1x2x8xbf16> to vector<2x8xbf16>
    %cst_122 = arith.constant dense<0.000000e+00> : vector<2x64xf32>
    %360 = tpu.matmul %359, %0, %cst_122 {dimension_numbers = #tpu.dot_dimension_numbers<[1], [0], [0], [1], [0, 0, 1, 1], [], []>} : vector<2x8xbf16>, vector<8x64xbf16>, vector<2x64xf32> -> vector<2x64xf32>
    %cst_123 = arith.constant dense<0.000000e+00> : vector<2x64xf32>
    %361 = tpu.matmul %336, %1, %cst_123 {dimension_numbers = #tpu.dot_dimension_numbers<[1], [0], [0], [1], [0, 0, 1, 1], [], []>} : vector<2x16xbf16>, vector<16x64xbf16>, vector<2x64xf32> -> vector<2x64xf32>
    %362 = arith.addf %360, %361 : vector<2x64xf32>
    %363 = arith.addf %362, %8 : vector<2x64xf32>
    %364 = arith.index_cast %356 : i32 to index
    %c0_124 = arith.constant 0 : index
    %c0_125 = arith.constant 0 : index
    %365 = vector.load %arg1[%364, %c0_124, %c0_125] : memref<8x2x8xbf16, #tpu.memory_space<vmem>>, vector<1x2x8xbf16>
    %366 = vector.shape_cast %365 : vector<1x2x8xbf16> to vector<2x8xbf16>
    %cst_126 = arith.constant dense<0.000000e+00> : vector<2x64xf32>
    %367 = tpu.matmul %366, %2, %cst_126 {dimension_numbers = #tpu.dot_dimension_numbers<[1], [0], [0], [1], [0, 0, 1, 1], [], []>} : vector<2x8xbf16>, vector<8x64xbf16>, vector<2x64xf32> -> vector<2x64xf32>
    %cst_127 = arith.constant dense<0.000000e+00> : vector<2x64xf32>
    %368 = tpu.matmul %337, %3, %cst_127 {dimension_numbers = #tpu.dot_dimension_numbers<[1], [0], [0], [1], [0, 0, 1, 1], [], []>} : vector<2x16xbf16>, vector<16x64xbf16>, vector<2x64xf32> -> vector<2x64xf32>
    %369 = arith.addf %367, %368 : vector<2x64xf32>
    %370 = arith.addf %369, %11 : vector<2x64xf32>
    %371 = vector.extract_strided_slice %363 {offsets = [0, 0], sizes = [2, 16], strides = [1, 1]} : vector<2x64xf32> to vector<2x16xf32>
    %372 = arith.negf %371 : vector<2x16xf32>
    %373 = math.exp %372 : vector<2x16xf32>
    %cst_128 = arith.constant 1.000000e+00 : f32
    %374 = vector.broadcast %cst_128 : f32 to vector<2x16xf32>
    %375 = arith.addf %374, %373 : vector<2x16xf32>
    %376 = arith.divf %374, %375 : vector<2x16xf32>
    %377 = vector.extract_strided_slice %363 {offsets = [0, 16], sizes = [2, 16], strides = [1, 1]} : vector<2x64xf32> to vector<2x16xf32>
    %378 = arith.negf %377 : vector<2x16xf32>
    %379 = math.exp %378 : vector<2x16xf32>
    %cst_129 = arith.constant 1.000000e+00 : f32
    %380 = vector.broadcast %cst_129 : f32 to vector<2x16xf32>
    %381 = arith.addf %380, %379 : vector<2x16xf32>
    %382 = arith.divf %380, %381 : vector<2x16xf32>
    %383 = vector.extract_strided_slice %363 {offsets = [0, 32], sizes = [2, 16], strides = [1, 1]} : vector<2x64xf32> to vector<2x16xf32>
    %384 = math.tanh %383 : vector<2x16xf32>
    %385 = vector.extract_strided_slice %363 {offsets = [0, 48], sizes = [2, 16], strides = [1, 1]} : vector<2x64xf32> to vector<2x16xf32>
    %386 = arith.negf %385 : vector<2x16xf32>
    %387 = math.exp %386 : vector<2x16xf32>
    %cst_130 = arith.constant 1.000000e+00 : f32
    %388 = vector.broadcast %cst_130 : f32 to vector<2x16xf32>
    %389 = arith.addf %388, %387 : vector<2x16xf32>
    %390 = arith.divf %388, %389 : vector<2x16xf32>
    %391 = arith.mulf %382, %308 : vector<2x16xf32>
    %392 = arith.mulf %376, %384 : vector<2x16xf32>
    %393 = arith.addf %391, %392 : vector<2x16xf32>
    %394 = math.tanh %393 : vector<2x16xf32>
    %395 = arith.mulf %390, %394 : vector<2x16xf32>
    %396 = vector.extract_strided_slice %370 {offsets = [0, 0], sizes = [2, 16], strides = [1, 1]} : vector<2x64xf32> to vector<2x16xf32>
    %397 = arith.negf %396 : vector<2x16xf32>
    %398 = math.exp %397 : vector<2x16xf32>
    %cst_131 = arith.constant 1.000000e+00 : f32
    %399 = vector.broadcast %cst_131 : f32 to vector<2x16xf32>
    %400 = arith.addf %399, %398 : vector<2x16xf32>
    %401 = arith.divf %399, %400 : vector<2x16xf32>
    %402 = vector.extract_strided_slice %370 {offsets = [0, 16], sizes = [2, 16], strides = [1, 1]} : vector<2x64xf32> to vector<2x16xf32>
    %403 = arith.negf %402 : vector<2x16xf32>
    %404 = math.exp %403 : vector<2x16xf32>
    %cst_132 = arith.constant 1.000000e+00 : f32
    %405 = vector.broadcast %cst_132 : f32 to vector<2x16xf32>
    %406 = arith.addf %405, %404 : vector<2x16xf32>
    %407 = arith.divf %405, %406 : vector<2x16xf32>
    %408 = vector.extract_strided_slice %370 {offsets = [0, 32], sizes = [2, 16], strides = [1, 1]} : vector<2x64xf32> to vector<2x16xf32>
    %409 = math.tanh %408 : vector<2x16xf32>
    %410 = vector.extract_strided_slice %370 {offsets = [0, 48], sizes = [2, 16], strides = [1, 1]} : vector<2x64xf32> to vector<2x16xf32>
    %411 = arith.negf %410 : vector<2x16xf32>
    %412 = math.exp %411 : vector<2x16xf32>
    %cst_133 = arith.constant 1.000000e+00 : f32
    %413 = vector.broadcast %cst_133 : f32 to vector<2x16xf32>
    %414 = arith.addf %413, %412 : vector<2x16xf32>
    %415 = arith.divf %413, %414 : vector<2x16xf32>
    %416 = arith.mulf %407, %333 : vector<2x16xf32>
    %417 = arith.mulf %401, %409 : vector<2x16xf32>
    %418 = arith.addf %416, %417 : vector<2x16xf32>
    %419 = math.tanh %418 : vector<2x16xf32>
    %420 = arith.mulf %415, %419 : vector<2x16xf32>
    %421 = arith.truncf %395 : vector<2x16xf32> to vector<2x16xbf16>
    %422 = arith.truncf %420 : vector<2x16xf32> to vector<2x16xbf16>
    %423 = arith.index_cast %c4_i32 : i32 to index
    %c0_134 = arith.constant 0 : index
    %c0_135 = arith.constant 0 : index
    %424 = vector.load %arg11[%423, %c0_134, %c0_135] : memref<8x2x8xf32, #tpu.memory_space<vmem>>, vector<1x2x8xf32>
    %425 = vector.shape_cast %424 : vector<1x2x8xf32> to vector<2x8xf32>
    %cst_136 = arith.constant dense<0.000000e+00> : vector<2x8xf32>
    %426 = tpu.matmul %421, %4, %cst_136 {dimension_numbers = #tpu.dot_dimension_numbers<[1], [0], [0], [1], [0, 0, 1, 1], [], []>} : vector<2x16xbf16>, vector<16x8xbf16>, vector<2x8xf32> -> vector<2x8xf32>
    %427 = arith.addf %425, %426 : vector<2x8xf32>
    %428 = arith.index_cast %c4_i32 : i32 to index
    %c0_137 = arith.constant 0 : index
    %c0_138 = arith.constant 0 : index
    %429 = vector.load %arg11[%428, %c0_137, %c0_138] : memref<8x2x8xf32, #tpu.memory_space<vmem>>, vector<1x2x8xf32>
    %430 = vector.shape_cast %429 : vector<1x2x8xf32> to vector<2x8xf32>
    %431 = vector.shape_cast %427 : vector<2x8xf32> to vector<1x2x8xf32>
    tpu.vector_store %arg11[%428, %c0_137, %c0_138], %431 {strides = array<i32>} : memref<8x2x8xf32, #tpu.memory_space<vmem>>, vector<1x2x8xf32>,
    %432 = arith.index_cast %356 : i32 to index
    %c0_139 = arith.constant 0 : index
    %c0_140 = arith.constant 0 : index
    %433 = vector.load %arg11[%432, %c0_139, %c0_140] : memref<8x2x8xf32, #tpu.memory_space<vmem>>, vector<1x2x8xf32>
    %434 = vector.shape_cast %433 : vector<1x2x8xf32> to vector<2x8xf32>
    %cst_141 = arith.constant dense<0.000000e+00> : vector<2x8xf32>
    %435 = tpu.matmul %422, %5, %cst_141 {dimension_numbers = #tpu.dot_dimension_numbers<[1], [0], [0], [1], [0, 0, 1, 1], [], []>} : vector<2x16xbf16>, vector<16x8xbf16>, vector<2x8xf32> -> vector<2x8xf32>
    %436 = arith.addf %434, %435 : vector<2x8xf32>
    %437 = arith.index_cast %356 : i32 to index
    %c0_142 = arith.constant 0 : index
    %c0_143 = arith.constant 0 : index
    %438 = vector.load %arg11[%437, %c0_142, %c0_143] : memref<8x2x8xf32, #tpu.memory_space<vmem>>, vector<1x2x8xf32>
    %439 = vector.shape_cast %438 : vector<1x2x8xf32> to vector<2x8xf32>
    %440 = vector.shape_cast %436 : vector<2x8xf32> to vector<1x2x8xf32>
    tpu.vector_store %arg11[%437, %c0_142, %c0_143], %440 {strides = array<i32>} : memref<8x2x8xf32, #tpu.memory_space<vmem>>, vector<1x2x8xf32>,
    %c5_i32 = arith.constant 5 : i32
    %c7_i32_144 = arith.constant 7 : i32
    %441 = arith.subi %c7_i32_144, %c5_i32 : i32
    %442 = arith.index_cast %c5_i32 : i32 to index
    %c0_145 = arith.constant 0 : index
    %c0_146 = arith.constant 0 : index
    %443 = vector.load %arg1[%442, %c0_145, %c0_146] : memref<8x2x8xbf16, #tpu.memory_space<vmem>>, vector<1x2x8xbf16>
    %444 = vector.shape_cast %443 : vector<1x2x8xbf16> to vector<2x8xbf16>
    %cst_147 = arith.constant dense<0.000000e+00> : vector<2x64xf32>
    %445 = tpu.matmul %444, %0, %cst_147 {dimension_numbers = #tpu.dot_dimension_numbers<[1], [0], [0], [1], [0, 0, 1, 1], [], []>} : vector<2x8xbf16>, vector<8x64xbf16>, vector<2x64xf32> -> vector<2x64xf32>
    %cst_148 = arith.constant dense<0.000000e+00> : vector<2x64xf32>
    %446 = tpu.matmul %421, %1, %cst_148 {dimension_numbers = #tpu.dot_dimension_numbers<[1], [0], [0], [1], [0, 0, 1, 1], [], []>} : vector<2x16xbf16>, vector<16x64xbf16>, vector<2x64xf32> -> vector<2x64xf32>
    %447 = arith.addf %445, %446 : vector<2x64xf32>
    %448 = arith.addf %447, %8 : vector<2x64xf32>
    %449 = arith.index_cast %441 : i32 to index
    %c0_149 = arith.constant 0 : index
    %c0_150 = arith.constant 0 : index
    %450 = vector.load %arg1[%449, %c0_149, %c0_150] : memref<8x2x8xbf16, #tpu.memory_space<vmem>>, vector<1x2x8xbf16>
    %451 = vector.shape_cast %450 : vector<1x2x8xbf16> to vector<2x8xbf16>
    %cst_151 = arith.constant dense<0.000000e+00> : vector<2x64xf32>
    %452 = tpu.matmul %451, %2, %cst_151 {dimension_numbers = #tpu.dot_dimension_numbers<[1], [0], [0], [1], [0, 0, 1, 1], [], []>} : vector<2x8xbf16>, vector<8x64xbf16>, vector<2x64xf32> -> vector<2x64xf32>
    %cst_152 = arith.constant dense<0.000000e+00> : vector<2x64xf32>
    %453 = tpu.matmul %422, %3, %cst_152 {dimension_numbers = #tpu.dot_dimension_numbers<[1], [0], [0], [1], [0, 0, 1, 1], [], []>} : vector<2x16xbf16>, vector<16x64xbf16>, vector<2x64xf32> -> vector<2x64xf32>
    %454 = arith.addf %452, %453 : vector<2x64xf32>
    %455 = arith.addf %454, %11 : vector<2x64xf32>
    %456 = vector.extract_strided_slice %448 {offsets = [0, 0], sizes = [2, 16], strides = [1, 1]} : vector<2x64xf32> to vector<2x16xf32>
    %457 = arith.negf %456 : vector<2x16xf32>
    %458 = math.exp %457 : vector<2x16xf32>
    %cst_153 = arith.constant 1.000000e+00 : f32
    %459 = vector.broadcast %cst_153 : f32 to vector<2x16xf32>
    %460 = arith.addf %459, %458 : vector<2x16xf32>
    %461 = arith.divf %459, %460 : vector<2x16xf32>
    %462 = vector.extract_strided_slice %448 {offsets = [0, 16], sizes = [2, 16], strides = [1, 1]} : vector<2x64xf32> to vector<2x16xf32>
    %463 = arith.negf %462 : vector<2x16xf32>
    %464 = math.exp %463 : vector<2x16xf32>
    %cst_154 = arith.constant 1.000000e+00 : f32
    %465 = vector.broadcast %cst_154 : f32 to vector<2x16xf32>
    %466 = arith.addf %465, %464 : vector<2x16xf32>
    %467 = arith.divf %465, %466 : vector<2x16xf32>
    %468 = vector.extract_strided_slice %448 {offsets = [0, 32], sizes = [2, 16], strides = [1, 1]} : vector<2x64xf32> to vector<2x16xf32>
    %469 = math.tanh %468 : vector<2x16xf32>
    %470 = vector.extract_strided_slice %448 {offsets = [0, 48], sizes = [2, 16], strides = [1, 1]} : vector<2x64xf32> to vector<2x16xf32>
    %471 = arith.negf %470 : vector<2x16xf32>
    %472 = math.exp %471 : vector<2x16xf32>
    %cst_155 = arith.constant 1.000000e+00 : f32
    %473 = vector.broadcast %cst_155 : f32 to vector<2x16xf32>
    %474 = arith.addf %473, %472 : vector<2x16xf32>
    %475 = arith.divf %473, %474 : vector<2x16xf32>
    %476 = arith.mulf %467, %393 : vector<2x16xf32>
    %477 = arith.mulf %461, %469 : vector<2x16xf32>
    %478 = arith.addf %476, %477 : vector<2x16xf32>
    %479 = math.tanh %478 : vector<2x16xf32>
    %480 = arith.mulf %475, %479 : vector<2x16xf32>
    %481 = vector.extract_strided_slice %455 {offsets = [0, 0], sizes = [2, 16], strides = [1, 1]} : vector<2x64xf32> to vector<2x16xf32>
    %482 = arith.negf %481 : vector<2x16xf32>
    %483 = math.exp %482 : vector<2x16xf32>
    %cst_156 = arith.constant 1.000000e+00 : f32
    %484 = vector.broadcast %cst_156 : f32 to vector<2x16xf32>
    %485 = arith.addf %484, %483 : vector<2x16xf32>
    %486 = arith.divf %484, %485 : vector<2x16xf32>
    %487 = vector.extract_strided_slice %455 {offsets = [0, 16], sizes = [2, 16], strides = [1, 1]} : vector<2x64xf32> to vector<2x16xf32>
    %488 = arith.negf %487 : vector<2x16xf32>
    %489 = math.exp %488 : vector<2x16xf32>
    %cst_157 = arith.constant 1.000000e+00 : f32
    %490 = vector.broadcast %cst_157 : f32 to vector<2x16xf32>
    %491 = arith.addf %490, %489 : vector<2x16xf32>
    %492 = arith.divf %490, %491 : vector<2x16xf32>
    %493 = vector.extract_strided_slice %455 {offsets = [0, 32], sizes = [2, 16], strides = [1, 1]} : vector<2x64xf32> to vector<2x16xf32>
    %494 = math.tanh %493 : vector<2x16xf32>
    %495 = vector.extract_strided_slice %455 {offsets = [0, 48], sizes = [2, 16], strides = [1, 1]} : vector<2x64xf32> to vector<2x16xf32>
    %496 = arith.negf %495 : vector<2x16xf32>
    %497 = math.exp %496 : vector<2x16xf32>
    %cst_158 = arith.constant 1.000000e+00 : f32
    %498 = vector.broadcast %cst_158 : f32 to vector<2x16xf32>
    %499 = arith.addf %498, %497 : vector<2x16xf32>
    %500 = arith.divf %498, %499 : vector<2x16xf32>
    %501 = arith.mulf %492, %418 : vector<2x16xf32>
    %502 = arith.mulf %486, %494 : vector<2x16xf32>
    %503 = arith.addf %501, %502 : vector<2x16xf32>
    %504 = math.tanh %503 : vector<2x16xf32>
    %505 = arith.mulf %500, %504 : vector<2x16xf32>
    %506 = arith.truncf %480 : vector<2x16xf32> to vector<2x16xbf16>
    %507 = arith.truncf %505 : vector<2x16xf32> to vector<2x16xbf16>
    %508 = arith.index_cast %c5_i32 : i32 to index
    %c0_159 = arith.constant 0 : index
    %c0_160 = arith.constant 0 : index
    %509 = vector.load %arg11[%508, %c0_159, %c0_160] : memref<8x2x8xf32, #tpu.memory_space<vmem>>, vector<1x2x8xf32>
    %510 = vector.shape_cast %509 : vector<1x2x8xf32> to vector<2x8xf32>
    %cst_161 = arith.constant dense<0.000000e+00> : vector<2x8xf32>
    %511 = tpu.matmul %506, %4, %cst_161 {dimension_numbers = #tpu.dot_dimension_numbers<[1], [0], [0], [1], [0, 0, 1, 1], [], []>} : vector<2x16xbf16>, vector<16x8xbf16>, vector<2x8xf32> -> vector<2x8xf32>
    %512 = arith.addf %510, %511 : vector<2x8xf32>
    %513 = arith.index_cast %c5_i32 : i32 to index
    %c0_162 = arith.constant 0 : index
    %c0_163 = arith.constant 0 : index
    %514 = vector.load %arg11[%513, %c0_162, %c0_163] : memref<8x2x8xf32, #tpu.memory_space<vmem>>, vector<1x2x8xf32>
    %515 = vector.shape_cast %514 : vector<1x2x8xf32> to vector<2x8xf32>
    %516 = vector.shape_cast %512 : vector<2x8xf32> to vector<1x2x8xf32>
    tpu.vector_store %arg11[%513, %c0_162, %c0_163], %516 {strides = array<i32>} : memref<8x2x8xf32, #tpu.memory_space<vmem>>, vector<1x2x8xf32>,
    %517 = arith.index_cast %441 : i32 to index
    %c0_164 = arith.constant 0 : index
    %c0_165 = arith.constant 0 : index
    %518 = vector.load %arg11[%517, %c0_164, %c0_165] : memref<8x2x8xf32, #tpu.memory_space<vmem>>, vector<1x2x8xf32>
    %519 = vector.shape_cast %518 : vector<1x2x8xf32> to vector<2x8xf32>
    %cst_166 = arith.constant dense<0.000000e+00> : vector<2x8xf32>
    %520 = tpu.matmul %507, %5, %cst_166 {dimension_numbers = #tpu.dot_dimension_numbers<[1], [0], [0], [1], [0, 0, 1, 1], [], []>} : vector<2x16xbf16>, vector<16x8xbf16>, vector<2x8xf32> -> vector<2x8xf32>
    %521 = arith.addf %519, %520 : vector<2x8xf32>
    %522 = arith.index_cast %441 : i32 to index
    %c0_167 = arith.constant 0 : index
    %c0_168 = arith.constant 0 : index
    %523 = vector.load %arg11[%522, %c0_167, %c0_168] : memref<8x2x8xf32, #tpu.memory_space<vmem>>, vector<1x2x8xf32>
    %524 = vector.shape_cast %523 : vector<1x2x8xf32> to vector<2x8xf32>
    %525 = vector.shape_cast %521 : vector<2x8xf32> to vector<1x2x8xf32>
    tpu.vector_store %arg11[%522, %c0_167, %c0_168], %525 {strides = array<i32>} : memref<8x2x8xf32, #tpu.memory_space<vmem>>, vector<1x2x8xf32>,
    %c6_i32 = arith.constant 6 : i32
    %c7_i32_169 = arith.constant 7 : i32
    %526 = arith.subi %c7_i32_169, %c6_i32 : i32
    %527 = arith.index_cast %c6_i32 : i32 to index
    %c0_170 = arith.constant 0 : index
    %c0_171 = arith.constant 0 : index
    %528 = vector.load %arg1[%527, %c0_170, %c0_171] : memref<8x2x8xbf16, #tpu.memory_space<vmem>>, vector<1x2x8xbf16>
    %529 = vector.shape_cast %528 : vector<1x2x8xbf16> to vector<2x8xbf16>
    %cst_172 = arith.constant dense<0.000000e+00> : vector<2x64xf32>
    %530 = tpu.matmul %529, %0, %cst_172 {dimension_numbers = #tpu.dot_dimension_numbers<[1], [0], [0], [1], [0, 0, 1, 1], [], []>} : vector<2x8xbf16>, vector<8x64xbf16>, vector<2x64xf32> -> vector<2x64xf32>
    %cst_173 = arith.constant dense<0.000000e+00> : vector<2x64xf32>
    %531 = tpu.matmul %506, %1, %cst_173 {dimension_numbers = #tpu.dot_dimension_numbers<[1], [0], [0], [1], [0, 0, 1, 1], [], []>} : vector<2x16xbf16>, vector<16x64xbf16>, vector<2x64xf32> -> vector<2x64xf32>
    %532 = arith.addf %530, %531 : vector<2x64xf32>
    %533 = arith.addf %532, %8 : vector<2x64xf32>
    %534 = arith.index_cast %526 : i32 to index
    %c0_174 = arith.constant 0 : index
    %c0_175 = arith.constant 0 : index
    %535 = vector.load %arg1[%534, %c0_174, %c0_175] : memref<8x2x8xbf16, #tpu.memory_space<vmem>>, vector<1x2x8xbf16>
    %536 = vector.shape_cast %535 : vector<1x2x8xbf16> to vector<2x8xbf16>
    %cst_176 = arith.constant dense<0.000000e+00> : vector<2x64xf32>
    %537 = tpu.matmul %536, %2, %cst_176 {dimension_numbers = #tpu.dot_dimension_numbers<[1], [0], [0], [1], [0, 0, 1, 1], [], []>} : vector<2x8xbf16>, vector<8x64xbf16>, vector<2x64xf32> -> vector<2x64xf32>
    %cst_177 = arith.constant dense<0.000000e+00> : vector<2x64xf32>
    %538 = tpu.matmul %507, %3, %cst_177 {dimension_numbers = #tpu.dot_dimension_numbers<[1], [0], [0], [1], [0, 0, 1, 1], [], []>} : vector<2x16xbf16>, vector<16x64xbf16>, vector<2x64xf32> -> vector<2x64xf32>
    %539 = arith.addf %537, %538 : vector<2x64xf32>
    %540 = arith.addf %539, %11 : vector<2x64xf32>
    %541 = vector.extract_strided_slice %533 {offsets = [0, 0], sizes = [2, 16], strides = [1, 1]} : vector<2x64xf32> to vector<2x16xf32>
    %542 = arith.negf %541 : vector<2x16xf32>
    %543 = math.exp %542 : vector<2x16xf32>
    %cst_178 = arith.constant 1.000000e+00 : f32
    %544 = vector.broadcast %cst_178 : f32 to vector<2x16xf32>
    %545 = arith.addf %544, %543 : vector<2x16xf32>
    %546 = arith.divf %544, %545 : vector<2x16xf32>
    %547 = vector.extract_strided_slice %533 {offsets = [0, 16], sizes = [2, 16], strides = [1, 1]} : vector<2x64xf32> to vector<2x16xf32>
    %548 = arith.negf %547 : vector<2x16xf32>
    %549 = math.exp %548 : vector<2x16xf32>
    %cst_179 = arith.constant 1.000000e+00 : f32
    %550 = vector.broadcast %cst_179 : f32 to vector<2x16xf32>
    %551 = arith.addf %550, %549 : vector<2x16xf32>
    %552 = arith.divf %550, %551 : vector<2x16xf32>
    %553 = vector.extract_strided_slice %533 {offsets = [0, 32], sizes = [2, 16], strides = [1, 1]} : vector<2x64xf32> to vector<2x16xf32>
    %554 = math.tanh %553 : vector<2x16xf32>
    %555 = vector.extract_strided_slice %533 {offsets = [0, 48], sizes = [2, 16], strides = [1, 1]} : vector<2x64xf32> to vector<2x16xf32>
    %556 = arith.negf %555 : vector<2x16xf32>
    %557 = math.exp %556 : vector<2x16xf32>
    %cst_180 = arith.constant 1.000000e+00 : f32
    %558 = vector.broadcast %cst_180 : f32 to vector<2x16xf32>
    %559 = arith.addf %558, %557 : vector<2x16xf32>
    %560 = arith.divf %558, %559 : vector<2x16xf32>
    %561 = arith.mulf %552, %478 : vector<2x16xf32>
    %562 = arith.mulf %546, %554 : vector<2x16xf32>
    %563 = arith.addf %561, %562 : vector<2x16xf32>
    %564 = math.tanh %563 : vector<2x16xf32>
    %565 = arith.mulf %560, %564 : vector<2x16xf32>
    %566 = vector.extract_strided_slice %540 {offsets = [0, 0], sizes = [2, 16], strides = [1, 1]} : vector<2x64xf32> to vector<2x16xf32>
    %567 = arith.negf %566 : vector<2x16xf32>
    %568 = math.exp %567 : vector<2x16xf32>
    %cst_181 = arith.constant 1.000000e+00 : f32
    %569 = vector.broadcast %cst_181 : f32 to vector<2x16xf32>
    %570 = arith.addf %569, %568 : vector<2x16xf32>
    %571 = arith.divf %569, %570 : vector<2x16xf32>
    %572 = vector.extract_strided_slice %540 {offsets = [0, 16], sizes = [2, 16], strides = [1, 1]} : vector<2x64xf32> to vector<2x16xf32>
    %573 = arith.negf %572 : vector<2x16xf32>
    %574 = math.exp %573 : vector<2x16xf32>
    %cst_182 = arith.constant 1.000000e+00 : f32
    %575 = vector.broadcast %cst_182 : f32 to vector<2x16xf32>
    %576 = arith.addf %575, %574 : vector<2x16xf32>
    %577 = arith.divf %575, %576 : vector<2x16xf32>
    %578 = vector.extract_strided_slice %540 {offsets = [0, 32], sizes = [2, 16], strides = [1, 1]} : vector<2x64xf32> to vector<2x16xf32>
    %579 = math.tanh %578 : vector<2x16xf32>
    %580 = vector.extract_strided_slice %540 {offsets = [0, 48], sizes = [2, 16], strides = [1, 1]} : vector<2x64xf32> to vector<2x16xf32>
    %581 = arith.negf %580 : vector<2x16xf32>
    %582 = math.exp %581 : vector<2x16xf32>
    %cst_183 = arith.constant 1.000000e+00 : f32
    %583 = vector.broadcast %cst_183 : f32 to vector<2x16xf32>
    %584 = arith.addf %583, %582 : vector<2x16xf32>
    %585 = arith.divf %583, %584 : vector<2x16xf32>
    %586 = arith.mulf %577, %503 : vector<2x16xf32>
    %587 = arith.mulf %571, %579 : vector<2x16xf32>
    %588 = arith.addf %586, %587 : vector<2x16xf32>
    %589 = math.tanh %588 : vector<2x16xf32>
    %590 = arith.mulf %585, %589 : vector<2x16xf32>
    %591 = arith.truncf %565 : vector<2x16xf32> to vector<2x16xbf16>
    %592 = arith.truncf %590 : vector<2x16xf32> to vector<2x16xbf16>
    %593 = arith.index_cast %c6_i32 : i32 to index
    %c0_184 = arith.constant 0 : index
    %c0_185 = arith.constant 0 : index
    %594 = vector.load %arg11[%593, %c0_184, %c0_185] : memref<8x2x8xf32, #tpu.memory_space<vmem>>, vector<1x2x8xf32>
    %595 = vector.shape_cast %594 : vector<1x2x8xf32> to vector<2x8xf32>
    %cst_186 = arith.constant dense<0.000000e+00> : vector<2x8xf32>
    %596 = tpu.matmul %591, %4, %cst_186 {dimension_numbers = #tpu.dot_dimension_numbers<[1], [0], [0], [1], [0, 0, 1, 1], [], []>} : vector<2x16xbf16>, vector<16x8xbf16>, vector<2x8xf32> -> vector<2x8xf32>
    %597 = arith.addf %595, %596 : vector<2x8xf32>
    %598 = arith.index_cast %c6_i32 : i32 to index
    %c0_187 = arith.constant 0 : index
    %c0_188 = arith.constant 0 : index
    %599 = vector.load %arg11[%598, %c0_187, %c0_188] : memref<8x2x8xf32, #tpu.memory_space<vmem>>, vector<1x2x8xf32>
    %600 = vector.shape_cast %599 : vector<1x2x8xf32> to vector<2x8xf32>
    %601 = vector.shape_cast %597 : vector<2x8xf32> to vector<1x2x8xf32>
    tpu.vector_store %arg11[%598, %c0_187, %c0_188], %601 {strides = array<i32>} : memref<8x2x8xf32, #tpu.memory_space<vmem>>, vector<1x2x8xf32>,
    %602 = arith.index_cast %526 : i32 to index
    %c0_189 = arith.constant 0 : index
    %c0_190 = arith.constant 0 : index
    %603 = vector.load %arg11[%602, %c0_189, %c0_190] : memref<8x2x8xf32, #tpu.memory_space<vmem>>, vector<1x2x8xf32>
    %604 = vector.shape_cast %603 : vector<1x2x8xf32> to vector<2x8xf32>
    %cst_191 = arith.constant dense<0.000000e+00> : vector<2x8xf32>
    %605 = tpu.matmul %592, %5, %cst_191 {dimension_numbers = #tpu.dot_dimension_numbers<[1], [0], [0], [1], [0, 0, 1, 1], [], []>} : vector<2x16xbf16>, vector<16x8xbf16>, vector<2x8xf32> -> vector<2x8xf32>
    %606 = arith.addf %604, %605 : vector<2x8xf32>
    %607 = arith.index_cast %526 : i32 to index
    %c0_192 = arith.constant 0 : index
    %c0_193 = arith.constant 0 : index
    %608 = vector.load %arg11[%607, %c0_192, %c0_193] : memref<8x2x8xf32, #tpu.memory_space<vmem>>, vector<1x2x8xf32>
    %609 = vector.shape_cast %608 : vector<1x2x8xf32> to vector<2x8xf32>
    %610 = vector.shape_cast %606 : vector<2x8xf32> to vector<1x2x8xf32>
    tpu.vector_store %arg11[%607, %c0_192, %c0_193], %610 {strides = array<i32>} : memref<8x2x8xf32, #tpu.memory_space<vmem>>, vector<1x2x8xf32>,
    %c7_i32_194 = arith.constant 7 : i32
    %c7_i32_195 = arith.constant 7 : i32
    %611 = arith.subi %c7_i32_195, %c7_i32_194 : i32
    %612 = arith.index_cast %c7_i32_194 : i32 to index
    %c0_196 = arith.constant 0 : index
    %c0_197 = arith.constant 0 : index
    %613 = vector.load %arg1[%612, %c0_196, %c0_197] : memref<8x2x8xbf16, #tpu.memory_space<vmem>>, vector<1x2x8xbf16>
    %614 = vector.shape_cast %613 : vector<1x2x8xbf16> to vector<2x8xbf16>
    %cst_198 = arith.constant dense<0.000000e+00> : vector<2x64xf32>
    %615 = tpu.matmul %614, %0, %cst_198 {dimension_numbers = #tpu.dot_dimension_numbers<[1], [0], [0], [1], [0, 0, 1, 1], [], []>} : vector<2x8xbf16>, vector<8x64xbf16>, vector<2x64xf32> -> vector<2x64xf32>
    %cst_199 = arith.constant dense<0.000000e+00> : vector<2x64xf32>
    %616 = tpu.matmul %591, %1, %cst_199 {dimension_numbers = #tpu.dot_dimension_numbers<[1], [0], [0], [1], [0, 0, 1, 1], [], []>} : vector<2x16xbf16>, vector<16x64xbf16>, vector<2x64xf32> -> vector<2x64xf32>
    %617 = arith.addf %615, %616 : vector<2x64xf32>
    %618 = arith.addf %617, %8 : vector<2x64xf32>
    %619 = arith.index_cast %611 : i32 to index
    %c0_200 = arith.constant 0 : index
    %c0_201 = arith.constant 0 : index
    %620 = vector.load %arg1[%619, %c0_200, %c0_201] : memref<8x2x8xbf16, #tpu.memory_space<vmem>>, vector<1x2x8xbf16>
    %621 = vector.shape_cast %620 : vector<1x2x8xbf16> to vector<2x8xbf16>
    %cst_202 = arith.constant dense<0.000000e+00> : vector<2x64xf32>
    %622 = tpu.matmul %621, %2, %cst_202 {dimension_numbers = #tpu.dot_dimension_numbers<[1], [0], [0], [1], [0, 0, 1, 1], [], []>} : vector<2x8xbf16>, vector<8x64xbf16>, vector<2x64xf32> -> vector<2x64xf32>
    %cst_203 = arith.constant dense<0.000000e+00> : vector<2x64xf32>
    %623 = tpu.matmul %592, %3, %cst_203 {dimension_numbers = #tpu.dot_dimension_numbers<[1], [0], [0], [1], [0, 0, 1, 1], [], []>} : vector<2x16xbf16>, vector<16x64xbf16>, vector<2x64xf32> -> vector<2x64xf32>
    %624 = arith.addf %622, %623 : vector<2x64xf32>
    %625 = arith.addf %624, %11 : vector<2x64xf32>
    %626 = vector.extract_strided_slice %618 {offsets = [0, 0], sizes = [2, 16], strides = [1, 1]} : vector<2x64xf32> to vector<2x16xf32>
    %627 = arith.negf %626 : vector<2x16xf32>
    %628 = math.exp %627 : vector<2x16xf32>
    %cst_204 = arith.constant 1.000000e+00 : f32
    %629 = vector.broadcast %cst_204 : f32 to vector<2x16xf32>
    %630 = arith.addf %629, %628 : vector<2x16xf32>
    %631 = arith.divf %629, %630 : vector<2x16xf32>
    %632 = vector.extract_strided_slice %618 {offsets = [0, 16], sizes = [2, 16], strides = [1, 1]} : vector<2x64xf32> to vector<2x16xf32>
    %633 = arith.negf %632 : vector<2x16xf32>
    %634 = math.exp %633 : vector<2x16xf32>
    %cst_205 = arith.constant 1.000000e+00 : f32
    %635 = vector.broadcast %cst_205 : f32 to vector<2x16xf32>
    %636 = arith.addf %635, %634 : vector<2x16xf32>
    %637 = arith.divf %635, %636 : vector<2x16xf32>
    %638 = vector.extract_strided_slice %618 {offsets = [0, 32], sizes = [2, 16], strides = [1, 1]} : vector<2x64xf32> to vector<2x16xf32>
    %639 = math.tanh %638 : vector<2x16xf32>
    %640 = vector.extract_strided_slice %618 {offsets = [0, 48], sizes = [2, 16], strides = [1, 1]} : vector<2x64xf32> to vector<2x16xf32>
    %641 = arith.negf %640 : vector<2x16xf32>
    %642 = math.exp %641 : vector<2x16xf32>
    %cst_206 = arith.constant 1.000000e+00 : f32
    %643 = vector.broadcast %cst_206 : f32 to vector<2x16xf32>
    %644 = arith.addf %643, %642 : vector<2x16xf32>
    %645 = arith.divf %643, %644 : vector<2x16xf32>
    %646 = arith.mulf %637, %563 : vector<2x16xf32>
    %647 = arith.mulf %631, %639 : vector<2x16xf32>
    %648 = arith.addf %646, %647 : vector<2x16xf32>
    %649 = math.tanh %648 : vector<2x16xf32>
    %650 = arith.mulf %645, %649 : vector<2x16xf32>
    %651 = vector.extract_strided_slice %625 {offsets = [0, 0], sizes = [2, 16], strides = [1, 1]} : vector<2x64xf32> to vector<2x16xf32>
    %652 = arith.negf %651 : vector<2x16xf32>
    %653 = math.exp %652 : vector<2x16xf32>
    %cst_207 = arith.constant 1.000000e+00 : f32
    %654 = vector.broadcast %cst_207 : f32 to vector<2x16xf32>
    %655 = arith.addf %654, %653 : vector<2x16xf32>
    %656 = arith.divf %654, %655 : vector<2x16xf32>
    %657 = vector.extract_strided_slice %625 {offsets = [0, 16], sizes = [2, 16], strides = [1, 1]} : vector<2x64xf32> to vector<2x16xf32>
    %658 = arith.negf %657 : vector<2x16xf32>
    %659 = math.exp %658 : vector<2x16xf32>
    %cst_208 = arith.constant 1.000000e+00 : f32
    %660 = vector.broadcast %cst_208 : f32 to vector<2x16xf32>
    %661 = arith.addf %660, %659 : vector<2x16xf32>
    %662 = arith.divf %660, %661 : vector<2x16xf32>
    %663 = vector.extract_strided_slice %625 {offsets = [0, 32], sizes = [2, 16], strides = [1, 1]} : vector<2x64xf32> to vector<2x16xf32>
    %664 = math.tanh %663 : vector<2x16xf32>
    %665 = vector.extract_strided_slice %625 {offsets = [0, 48], sizes = [2, 16], strides = [1, 1]} : vector<2x64xf32> to vector<2x16xf32>
    %666 = arith.negf %665 : vector<2x16xf32>
    %667 = math.exp %666 : vector<2x16xf32>
    %cst_209 = arith.constant 1.000000e+00 : f32
    %668 = vector.broadcast %cst_209 : f32 to vector<2x16xf32>
    %669 = arith.addf %668, %667 : vector<2x16xf32>
    %670 = arith.divf %668, %669 : vector<2x16xf32>
    %671 = arith.mulf %662, %588 : vector<2x16xf32>
    %672 = arith.mulf %656, %664 : vector<2x16xf32>
    %673 = arith.addf %671, %672 : vector<2x16xf32>
    %674 = math.tanh %673 : vector<2x16xf32>
    %675 = arith.mulf %670, %674 : vector<2x16xf32>
    %676 = arith.truncf %650 : vector<2x16xf32> to vector<2x16xbf16>
    %677 = arith.truncf %675 : vector<2x16xf32> to vector<2x16xbf16>
    %678 = arith.index_cast %c7_i32_194 : i32 to index
    %c0_210 = arith.constant 0 : index
    %c0_211 = arith.constant 0 : index
    %679 = vector.load %arg11[%678, %c0_210, %c0_211] : memref<8x2x8xf32, #tpu.memory_space<vmem>>, vector<1x2x8xf32>
    %680 = vector.shape_cast %679 : vector<1x2x8xf32> to vector<2x8xf32>
    %cst_212 = arith.constant dense<0.000000e+00> : vector<2x8xf32>
    %681 = tpu.matmul %676, %4, %cst_212 {dimension_numbers = #tpu.dot_dimension_numbers<[1], [0], [0], [1], [0, 0, 1, 1], [], []>} : vector<2x16xbf16>, vector<16x8xbf16>, vector<2x8xf32> -> vector<2x8xf32>
    %682 = arith.addf %680, %681 : vector<2x8xf32>
    %683 = arith.index_cast %c7_i32_194 : i32 to index
    %c0_213 = arith.constant 0 : index
    %c0_214 = arith.constant 0 : index
    %684 = vector.load %arg11[%683, %c0_213, %c0_214] : memref<8x2x8xf32, #tpu.memory_space<vmem>>, vector<1x2x8xf32>
    %685 = vector.shape_cast %684 : vector<1x2x8xf32> to vector<2x8xf32>
    %686 = vector.shape_cast %682 : vector<2x8xf32> to vector<1x2x8xf32>
    tpu.vector_store %arg11[%683, %c0_213, %c0_214], %686 {strides = array<i32>} : memref<8x2x8xf32, #tpu.memory_space<vmem>>, vector<1x2x8xf32>,
    %687 = arith.index_cast %611 : i32 to index
    %c0_215 = arith.constant 0 : index
    %c0_216 = arith.constant 0 : index
    %688 = vector.load %arg11[%687, %c0_215, %c0_216] : memref<8x2x8xf32, #tpu.memory_space<vmem>>, vector<1x2x8xf32>
    %689 = vector.shape_cast %688 : vector<1x2x8xf32> to vector<2x8xf32>
    %cst_217 = arith.constant dense<0.000000e+00> : vector<2x8xf32>
    %690 = tpu.matmul %677, %5, %cst_217 {dimension_numbers = #tpu.dot_dimension_numbers<[1], [0], [0], [1], [0, 0, 1, 1], [], []>} : vector<2x16xbf16>, vector<16x8xbf16>, vector<2x8xf32> -> vector<2x8xf32>
    %691 = arith.addf %689, %690 : vector<2x8xf32>
    %692 = arith.index_cast %611 : i32 to index
    %c0_218 = arith.constant 0 : index
    %c0_219 = arith.constant 0 : index
    %693 = vector.load %arg11[%692, %c0_218, %c0_219] : memref<8x2x8xf32, #tpu.memory_space<vmem>>, vector<1x2x8xf32>
    %694 = vector.shape_cast %693 : vector<1x2x8xf32> to vector<2x8xf32>
    %695 = vector.shape_cast %691 : vector<2x8xf32> to vector<1x2x8xf32>
    tpu.vector_store %arg11[%692, %c0_218, %c0_219], %695 {strides = array<i32>} : memref<8x2x8xf32, #tpu.memory_space<vmem>>, vector<1x2x8xf32>,
    %c8_i32 = arith.constant 8 : i32
    %c0_220 = arith.constant 0 : index
    %c0_221 = arith.constant 0 : index
    %c0_222 = arith.constant 0 : index
    %696 = vector.load %arg11[%c0_220, %c0_221, %c0_222] : memref<8x2x8xf32, #tpu.memory_space<vmem>>, vector<8x2x8xf32>
    %c0_223 = arith.constant 0 : index
    %c0_224 = arith.constant 0 : index
    %697 = vector.load %arg10[%c0_223, %c0_224] : memref<1x8xf32, #tpu.memory_space<vmem>>, vector<1x8xf32>
    %698 = vector.shape_cast %697 : vector<1x8xf32> to vector<1x1x8xf32>
    %699 = vector.broadcast %698 : vector<1x1x8xf32> to vector<8x2x8xf32>
    %700 = arith.addf %696, %699 : vector<8x2x8xf32>
    %cst_225 = arith.constant dense<0xFF800000> : vector<8x2xf32>
    %701 = vector.multi_reduction <maximumf>, %700, %cst_225 [2] : vector<8x2x8xf32> to vector<8x2xf32>
    %702 = vector.shape_cast %701 : vector<8x2xf32> to vector<8x2x1xf32>
    %703 = vector.broadcast %702 : vector<8x2x1xf32> to vector<8x2x8xf32>
    %704 = arith.subf %700, %703 : vector<8x2x8xf32>
    %705 = math.exp %704 : vector<8x2x8xf32>
    %cst_226 = arith.constant dense<0.000000e+00> : vector<8x2xf32>
    %706 = vector.multi_reduction <add>, %705, %cst_226 [2] : vector<8x2x8xf32> to vector<8x2xf32>
    %707 = vector.shape_cast %706 : vector<8x2xf32> to vector<8x2x1xf32>
    %708 = math.log %707 : vector<8x2x1xf32>
    %709 = arith.addf %708, %702 : vector<8x2x1xf32>
    %710 = vector.broadcast %709 : vector<8x2x1xf32> to vector<8x2x8xf32>
    %711 = arith.subf %700, %710 : vector<8x2x8xf32>
    %c0_227 = arith.constant 0 : index
    %c0_228 = arith.constant 0 : index
    %c0_229 = arith.constant 0 : index
    %712 = vector.load %arg11[%c0_227, %c0_228, %c0_229] : memref<8x2x8xf32, #tpu.memory_space<vmem>>, vector<8x2x8xf32>
    tpu.vector_store %arg11[%c0_227, %c0_228, %c0_229], %711 {strides = array<i32>} : memref<8x2x8xf32, #tpu.memory_space<vmem>>, vector<8x2x8xf32>,
    return
  }
  func.func @transform_0(%arg0: i32) -> (i32, i32, i32) {
    %c0_i32 = arith.constant 0 : i32
    %c0_i32_0 = arith.constant 0 : i32
    %c0_i32_1 = arith.constant 0 : i32
    return %c0_i32, %arg0, %c0_i32_0 : i32, i32, i32
  }
  func.func @transform_1(%arg0: i32) -> (i32, i32) {
    %c0_i32 = arith.constant 0 : i32
    %c0_i32_0 = arith.constant 0 : i32
    %c0_i32_1 = arith.constant 0 : i32
    return %c0_i32, %c0_i32_0 : i32, i32
  }
  func.func @transform_2(%arg0: i32) -> (i32, i32) {
    %c0_i32 = arith.constant 0 : i32
    %c0_i32_0 = arith.constant 0 : i32
    %c0_i32_1 = arith.constant 0 : i32
    return %c0_i32, %c0_i32_0 : i32, i32
  }
  func.func @transform_3(%arg0: i32) -> (i32, i32) {
    %c0_i32 = arith.constant 0 : i32
    %c0_i32_0 = arith.constant 0 : i32
    %c0_i32_1 = arith.constant 0 : i32
    return %c0_i32, %c0_i32_0 : i32, i32
  }
  func.func @transform_4(%arg0: i32) -> (i32, i32) {
    %c0_i32 = arith.constant 0 : i32
    %c0_i32_0 = arith.constant 0 : i32
    %c0_i32_1 = arith.constant 0 : i32
    return %c0_i32, %c0_i32_0 : i32, i32
  }
  func.func @transform_5(%arg0: i32) -> (i32, i32) {
    %c0_i32 = arith.constant 0 : i32
    %c0_i32_0 = arith.constant 0 : i32
    %c0_i32_1 = arith.constant 0 : i32
    return %c0_i32, %c0_i32_0 : i32, i32
  }
  func.func @transform_6(%arg0: i32) -> (i32, i32) {
    %c0_i32 = arith.constant 0 : i32
    %c0_i32_0 = arith.constant 0 : i32
    %c0_i32_1 = arith.constant 0 : i32
    return %c0_i32, %c0_i32_0 : i32, i32
  }
  func.func @transform_7(%arg0: i32) -> (i32, i32) {
    %c0_i32 = arith.constant 0 : i32
    %c0_i32_0 = arith.constant 0 : i32
    %c0_i32_1 = arith.constant 0 : i32
    return %c0_i32, %c0_i32_0 : i32, i32
  }
  func.func @transform_8(%arg0: i32) -> (i32, i32) {
    %c0_i32 = arith.constant 0 : i32
    %c0_i32_0 = arith.constant 0 : i32
    %c0_i32_1 = arith.constant 0 : i32
    return %c0_i32, %c0_i32_0 : i32, i32
  }
  func.func @transform_9(%arg0: i32) -> (i32, i32) {
    %c0_i32 = arith.constant 0 : i32
    %c0_i32_0 = arith.constant 0 : i32
    %c0_i32_1 = arith.constant 0 : i32
    return %c0_i32, %c0_i32_0 : i32, i32
  }
  func.func @transform_10(%arg0: i32) -> (i32, i32, i32) {
    %c0_i32 = arith.constant 0 : i32
    %c0_i32_0 = arith.constant 0 : i32
    %c0_i32_1 = arith.constant 0 : i32
    return %c0_i32, %arg0, %c0_i32_0 : i32, i32, i32
  }
}

</mosaic_0001>

<llo_original>
// kernel: tpu_custom_call.1
$region0: #{tpu_custom_call.1}
  #allocation0 [shape = 'u32[]', space=smem, size = 0x4, offset = 0x4, fixed_abs, tag = 'smem constant byte address 0x4 - core index']
  #allocation1 [shape = 'u32[144,128]{1,0:T(1,128)}', space=vmem, size = 0x12000, scoped, tag = 'internal scratch']
  %s0 = inlined_call_operand.vmem [shape: bf16[8,2,8], index: 0, kind: input, shape index: {}]
  %s1 = inlined_call_operand.hbm [shape: bf16[8,64], index: 1, kind: input, shape index: {}]
  %s2 = inlined_call_operand.vmem [shape: bf16[16,64], index: 2, kind: input, shape index: {}]
  %s3 = inlined_call_operand.vmem [shape: f32[1,64], index: 3, kind: input, shape index: {}]
  %s4 = inlined_call_operand.hbm [shape: bf16[8,64], index: 4, kind: input, shape index: {}]
  %s5 = inlined_call_operand.vmem [shape: bf16[16,64], index: 5, kind: input, shape index: {}]
  %s6 = inlined_call_operand.vmem [shape: f32[1,64], index: 6, kind: input, shape index: {}]
  %s7 = inlined_call_operand.vmem [shape: bf16[16,8], index: 7, kind: input, shape index: {}]
  %s8 = inlined_call_operand.vmem [shape: bf16[16,8], index: 8, kind: input, shape index: {}]
  %s9 = inlined_call_operand.vmem [shape: f32[1,8], index: 9, kind: input, shape index: {}]
  %s10 = inlined_call_operand.hbm [shape: f32[8,2,8], index: 10, kind: output, shape index: {}]
  %s11 = sld [smem:[#allocation0]]
  $region58: #{tpu_custom_call.1} parent=0
    _
  %s13 = ssub.s32 1, %s11
  %s14 = scalar_select 0, %s13, %s11
  $region1: #{tpu_custom_call.1} parent=0
    #allocation2 [shape = 'u8[2048]{0}', space=vmem, size = 0x800, scoped, tag = 'input window, operand 1, single buffered']
    #allocation3 [shape = 's32[1]{0}', space=sflag, size = 0x4, scoped, tag = 'scoped memory for tpu_custom_call.1']
    #allocation4 [shape = 's32[1]{0}', space=sflag, size = 0x4, scoped, tag = 'scoped memory for tpu_custom_call.1']
    #allocation5 [shape = 'u8[2048]{0}', space=vmem, size = 0x800, scoped, tag = 'input window, operand 4, single buffered']
    #allocation6 [shape = 's32[1]{0}', space=sflag, size = 0x4, scoped, tag = 'scoped memory for tpu_custom_call.1']
    #allocation7 [shape = 'u8[8192]{0}', space=vmem, size = 0x2000, scoped, tag = 'output window, operand 0, single buffered']
    %15 = vsyncpa [#allocation3], 0
    %16 = vsyncpa [#allocation6], 0
    %17 = vsyncpa [#allocation4], 0
    // Predicated region
    $region2: #{tpu_custom_call.1} parent=1 // pred_check
      _
    $region3: #{tpu_custom_call.1} parent=1 // pred_check_branch
      %19 = sbr.rel (0) target = $region5
    $region4: #{tpu_custom_call.1} parent=1 // pred_region
      _
    $region5: #{tpu_custom_call.1} parent=1 // pred_fallthru
      _
    // Predicated region
    $region6: #{tpu_custom_call.1} parent=1 // pred_check
      _
    $region7: #{tpu_custom_call.1} parent=1 // pred_check_branch
      %21 = sbr.rel (0) target = $region9
    $region8: #{tpu_custom_call.1} parent=1 // pred_region
      %s23 = ssub.s32 64, 64
      %24 = vsyncadd [#allocation3], %s23
      %s26 = sshll.u32 [#allocation2], 4
      %s27 = int_to_ptr.vmem [resolvable:$true] %s26
      %29 = dma.hbm_to_vmem [thread:$0]  %s1, 64, %s27, [#allocation3]
    $region9: #{tpu_custom_call.1} parent=1 // pred_fallthru
      _
    // Predicated region
    $region10: #{tpu_custom_call.1} parent=1 // pred_check
      _
    $region11: #{tpu_custom_call.1} parent=1 // pred_check_branch
      %31 = sbr.rel (0) target = $region13
    $region12: #{tpu_custom_call.1} parent=1 // pred_region
      _
    $region13: #{tpu_custom_call.1} parent=1 // pred_fallthru
      _
    // Predicated region
    $region14: #{tpu_custom_call.1} parent=1 // pred_check
      _
    $region15: #{tpu_custom_call.1} parent=1 // pred_check_branch
      %33 = sbr.rel (0) target = $region17
    $region16: #{tpu_custom_call.1} parent=1 // pred_region
      _
    $region17: #{tpu_custom_call.1} parent=1 // pred_fallthru
      _
    // Predicated region
    $region18: #{tpu_custom_call.1} parent=1 // pred_check
      _
    $region19: #{tpu_custom_call.1} parent=1 // pred_check_branch
      %35 = sbr.rel (0) target = $region21
    $region20: #{tpu_custom_call.1} parent=1 // pred_region
      %s37 = ssub.s32 64, 64
      %38 = vsyncadd [#allocation6], %s37
      %s40 = sshll.u32 [#allocation5], 4
      %s41 = int_to_ptr.vmem [resolvable:$true] %s40
      %43 = dma.hbm_to_vmem [thread:$0]  %s4, 64, %s41, [#allocation6]
    $region21: #{tpu_custom_call.1} parent=1 // pred_fallthru
      _
    // Predicated region
    $region22: #{tpu_custom_call.1} parent=1 // pred_check
      _
    $region23: #{tpu_custom_call.1} parent=1 // pred_check_branch
      %45 = sbr.rel (0) target = $region25
    $region24: #{tpu_custom_call.1} parent=1 // pred_region
      _
    $region25: #{tpu_custom_call.1} parent=1 // pred_fallthru
      _
    // Predicated region
    $region26: #{tpu_custom_call.1} parent=1 // pred_check
      _
    $region27: #{tpu_custom_call.1} parent=1 // pred_check_branch
      %47 = sbr.rel (0) target = $region29
    $region28: #{tpu_custom_call.1} parent=1 // pred_region
      _
    $region29: #{tpu_custom_call.1} parent=1 // pred_fallthru
      _
    // Predicated region
    $region30: #{tpu_custom_call.1} parent=1 // pred_check
      _
    $region31: #{tpu_custom_call.1} parent=1 // pred_check_branch
      %49 = sbr.rel (0) target = $region33
    $region32: #{tpu_custom_call.1} parent=1 // pred_region
      _
    $region33: #{tpu_custom_call.1} parent=1 // pred_fallthru
      _
    // Predicated region
    $region34: #{tpu_custom_call.1} parent=1 // pred_check
      _
    $region35: #{tpu_custom_call.1} parent=1 // pred_check_branch
      %51 = sbr.rel (0) target = $region37
    $region36: #{tpu_custom_call.1} parent=1 // pred_region
      _
    $region37: #{tpu_custom_call.1} parent=1 // pred_fallthru
      _
    // Predicated region
    $region38: #{tpu_custom_call.1} parent=1 // pred_check
      _
    $region39: #{tpu_custom_call.1} parent=1 // pred_check_branch
      %53 = sbr.rel (0) target = $region41
    $region40: #{tpu_custom_call.1} parent=1 // pred_region
      _
    $region41: #{tpu_custom_call.1} parent=1 // pred_fallthru
      _
    // Predicated region
    $region42: #{tpu_custom_call.1} parent=1 // pred_check
      _
    $region43: #{tpu_custom_call.1} parent=1 // pred_check_branch
      %55 = sbr.rel (0) target = $region45
    $region44: #{tpu_custom_call.1} parent=1 // pred_region
      %56 = dma.done [#allocation3], 64
    $region45: #{tpu_custom_call.1} parent=1 // pred_fallthru
      _
    // Predicated region
    $region46: #{tpu_custom_call.1} parent=1 // pred_check
      _
    $region47: #{tpu_custom_call.1} parent=1 // pred_check_branch
      %58 = sbr.rel (0) target = $region49
    $region48: #{tpu_custom_call.1} parent=1 // pred_region
      %59 = dma.done [#allocation6], 64
    $region49: #{tpu_custom_call.1} parent=1 // pred_fallthru
      _
    %v61 = vld [vmem:[#allocation2] sm:$0xf]
    %v62 = vld [vmem:[%s2] sm:$0xf]
    %v63 = vld [vmem:[%s2 + $0x4] sm:$0xf]
    %v64 = vld [vmem:[#allocation5] sm:$0xf]
    %v65 = vld [vmem:[%s5] sm:$0xf]
    %v66 = vld [vmem:[%s5 + $0x4] sm:$0xf]
    %v67 = vld [vmem:[%s7] sm:$0xf]
    %v68 = vld [vmem:[%s7 + $0x4] sm:$0xf]
    %v69 = vld [vmem:[%s8] sm:$0xf]
    %v70 = vld [vmem:[%s8 + $0x4] sm:$0xf]
    %v71 = vld [vmem:[%s3] sm:$0x1]
    %v73 = vlaneseq
    %v74 = vshrl.u32 %v73, 7
    %v75 = vsub.s32 0, %v74
    %v76 = vrot.slane %v71, %v75
    %v78 = vld [vmem:[%s6] sm:$0x1]
    %v80 = vlaneseq
    %v81 = vshrl.u32 %v80, 7
    %v82 = vsub.s32 0, %v81
    %v83 = vrot.slane %v78, %v82
    %vm85 = vcmask 58368
    %86 = vst.msk [vmem:[#allocation7] sm:$0x3] %vm85, 0.0
    %87 = vst.msk [vmem:[#allocation7 + $0x2] sm:$0x3] %vm85, 0.0
    %88 = vst.msk [vmem:[#allocation7 + $0x4] sm:$0x3] %vm85, 0.0
    %89 = vst.msk [vmem:[#allocation7 + $0x6] sm:$0x3] %vm85, 0.0
    %90 = vst.msk [vmem:[#allocation7 + $0x8] sm:$0x3] %vm85, 0.0
    %91 = vst.msk [vmem:[#allocation7 + $0xa] sm:$0x3] %vm85, 0.0
    %92 = vst.msk [vmem:[#allocation7 + $0xc] sm:$0x3] %vm85, 0.0
    %93 = vst.msk [vmem:[#allocation7 + $0xe] sm:$0x3] %vm85, 0.0
    %v94 = vld [vmem:[%s0] sm:$0x1]
    %v97 = vunpack.c.l.b16 %v62
    %v98 = vunpack.c.l.b16 %v63
    %v99 = vpack.c.b16 %v98, %v97
    %vm101 = vcmask 130048
    %v103 = vsel %vm101, 0, 0
    %105 = vmatprep.subr.bf16.mxu0 0
    %106 = vmatpush1.bf16.msra.mxu0 0
    %107 = vmatprep.subr.bf16.mxu0 0
    %108 = vmatpush1.bf16.msra.mxu0 0
    %109 = vmatprep.subr.bf16.mxu0 0
    %110 = vmatpush1.bf16.msra.mxu0 0
    %111 = vmatprep.subr.bf16.mxu0 0
    %112 = vmatpush1.bf16.msra.mxu0 0
    %113 = vmatprep.subr.bf16.mxu0 0
    %114 = vmatpush1.bf16.msra.mxu0 0
    %115 = vmatprep.subr.bf16.mxu0 0
    %116 = vmatpush1.bf16.msra.mxu0 0
    %117 = vmatprep.subr.bf16.mxu0 0
    %118 = vmatpush1.bf16.msra.mxu0 0
    %119 = vmatprep.subr.bf16.mxu0 0
    %120 = vmatpush1.bf16.msra.mxu0 %v99
    %121 = vmatprep.subr.bf16.mxu0 0
    %122 = vmatpush2.bf16.msra.mxu0 0
    %123 = vmatprep.subr.bf16.mxu0 0
    %124 = vmatpush2.bf16.msra.mxu0 0
    %125 = vmatprep.subr.bf16.mxu0 0
    %126 = vmatpush2.bf16.msra.mxu0 0
    %127 = vmatprep.subr.bf16.mxu0 0
    %128 = vmatpush2.bf16.msra.mxu0 0
    %129 = vmatprep.subr.bf16.mxu0 0
    %130 = vmatpush2.bf16.msra.mxu0 0
    %131 = vmatprep.subr.bf16.mxu0 0
    %132 = vmatpush2.bf16.msra.mxu0 0
    %133 = vmatprep.subr.bf16.mxu0 0
    %134 = vmatpush2.bf16.msra.mxu0 0
    %135 = vmatprep.subr.bf16.mxu0 0
    %136 = vmatpush2.bf16.msra.mxu0 0
    %137 = vmatprep.mubr.bf16.mxu0 0
    %138 = vmatmul.mubr.bf16.gmra.mxu0 %v103
    %v139 = vpop.f32.mrf.mxu0
    %v140 = vadd.f32 0.0, %v139
    %v141 = vpop.f32.mrf.mxu0
    %v142 = vpop.f32.mrf.mxu0
    %v143 = vpop.f32.mrf.mxu0
    %144 = vdwg.mxu0
    %vm145 = vcmask 64512
    %v147 = vsel %vm145, %v94, 0
    %vm149 = vcmask 1043456
    %v151 = vsel %vm149, %v61, 0
    %153 = vmatprep.subr.bf16.mxu0 0
    %154 = vmatpush1.bf16.msra.mxu0 0
    %155 = vmatprep.subr.bf16.mxu0 0
    %156 = vmatpush1.bf16.msra.mxu0 0
    %157 = vmatprep.subr.bf16.mxu0 0
    %158 = vmatpush1.bf16.msra.mxu0 0
    %159 = vmatprep.subr.bf16.mxu0 0
    %160 = vmatpush1.bf16.msra.mxu0 0
    %161 = vmatprep.subr.bf16.mxu0 0
    %162 = vmatpush1.bf16.msra.mxu0 0
    %163 = vmatprep.subr.bf16.mxu0 0
    %164 = vmatpush1.bf16.msra.mxu0 0
    %165 = vmatprep.subr.bf16.mxu0 0
    %166 = vmatpush1.bf16.msra.mxu0 0
    %167 = vmatprep.subr.bf16.mxu0 0
    %168 = vmatpush1.bf16.msra.mxu0 %v151
    %169 = vmatprep.subr.bf16.mxu0 0
    %170 = vmatpush2.bf16.msra.mxu0 0
    %171 = vmatprep.subr.bf16.mxu0 0
    %172 = vmatpush2.bf16.msra.mxu0 0
    %173 = vmatprep.subr.bf16.mxu0 0
    %174 = vmatpush2.bf16.msra.mxu0 0
    %175 = vmatprep.subr.bf16.mxu0 0
    %176 = vmatpush2.bf16.msra.mxu0 0
    %177 = vmatprep.subr.bf16.mxu0 0
    %178 = vmatpush2.bf16.msra.mxu0 0
    %179 = vmatprep.subr.bf16.mxu0 0
    %180 = vmatpush2.bf16.msra.mxu0 0
    %181 = vmatprep.subr.bf16.mxu0 0
    %182 = vmatpush2.bf16.msra.mxu0 0
    %183 = vmatprep.subr.bf16.mxu0 0
    %184 = vmatpush2.bf16.msra.mxu0 0
    %185 = vmatprep.mubr.bf16.mxu0 0
    %186 = vmatmul.mubr.bf16.gmra.mxu0 %v147
    %v187 = vpop.f32.mrf.mxu0
    %v188 = vadd.f32 %v140, %v187
    %v189 = vpop.f32.mrf.mxu0
    %v190 = vpop.f32.mrf.mxu0
    %v191 = vpop.f32.mrf.mxu0
    %192 = vdwg.mxu0
    %v193 = vadd.f32 %v188, %v76
    %s194 = scalar_lea.vmem %s0, 7
    %v195 = vld [vmem:[%s194] sm:$0x1]
    %v198 = vunpack.c.l.b16 %v65
    %v199 = vunpack.c.l.b16 %v66
    %v200 = vpack.c.b16 %v199, %v198
    %202 = vmatprep.subr.bf16.mxu0 0
    %203 = vmatpush1.bf16.msra.mxu0 0
    %204 = vmatprep.subr.bf16.mxu0 0
    %205 = vmatpush1.bf16.msra.mxu0 0
    %206 = vmatprep.subr.bf16.mxu0 0
    %207 = vmatpush1.bf16.msra.mxu0 0
    %208 = vmatprep.subr.bf16.mxu0 0
    %209 = vmatpush1.bf16.msra.mxu0 0
    %210 = vmatprep.subr.bf16.mxu0 0
    %211 = vmatpush1.bf16.msra.mxu0 0
    %212 = vmatprep.subr.bf16.mxu0 0
    %213 = vmatpush1.bf16.msra.mxu0 0
    %214 = vmatprep.subr.bf16.mxu0 0
    %215 = vmatpush1.bf16.msra.mxu0 0
    %216 = vmatprep.subr.bf16.mxu0 0
    %217 = vmatpush1.bf16.msra.mxu0 %v200
    %218 = vmatprep.subr.bf16.mxu0 0
    %219 = vmatpush2.bf16.msra.mxu0 0
    %220 = vmatprep.subr.bf16.mxu0 0
    %221 = vmatpush2.bf16.msra.mxu0 0
    %222 = vmatprep.subr.bf16.mxu0 0
    %223 = vmatpush2.bf16.msra.mxu0 0
    %224 = vmatprep.subr.bf16.mxu0 0
    %225 = vmatpush2.bf16.msra.mxu0 0
    %226 = vmatprep.subr.bf16.mxu0 0
    %227 = vmatpush2.bf16.msra.mxu0 0
    %228 = vmatprep.subr.bf16.mxu0 0
    %229 = vmatpush2.bf16.msra.mxu0 0
    %230 = vmatprep.subr.bf16.mxu0 0
    %231 = vmatpush2.bf16.msra.mxu0 0
    %232 = vmatprep.subr.bf16.mxu0 0
    %233 = vmatpush2.bf16.msra.mxu0 0
    %234 = vmatprep.mubr.bf16.mxu0 0
    %235 = vmatmul.mubr.bf16.gmra.mxu0 %v103
    %v236 = vpop.f32.mrf.mxu0
    %v237 = vadd.f32 0.0, %v236
    %v238 = vpop.f32.mrf.mxu0
    %v239 = vpop.f32.mrf.mxu0
    %v240 = vpop.f32.mrf.mxu0
    %241 = vdwg.mxu0
    %v243 = vsel %vm145, %v195, 0
    %v246 = vsel %vm149, %v64, 0
    %248 = vmatprep.subr.bf16.mxu0 0
    %249 = vmatpush1.bf16.msra.mxu0 0
    %250 = vmatprep.subr.bf16.mxu0 0
    %251 = vmatpush1.bf16.msra.mxu0 0
    %252 = vmatprep.subr.bf16.mxu0 0
    %253 = vmatpush1.bf16.msra.mxu0 0
    %254 = vmatprep.subr.bf16.mxu0 0
    %255 = vmatpush1.bf16.msra.mxu0 0
    %256 = vmatprep.subr.bf16.mxu0 0
    %257 = vmatpush1.bf16.msra.mxu0 0
    %258 = vmatprep.subr.bf16.mxu0 0
    %259 = vmatpush1.bf16.msra.mxu0 0
    %260 = vmatprep.subr.bf16.mxu0 0
    %261 = vmatpush1.bf16.msra.mxu0 0
    %262 = vmatprep.subr.bf16.mxu0 0
    %263 = vmatpush1.bf16.msra.mxu0 %v246
    %264 = vmatprep.subr.bf16.mxu0 0
    %265 = vmatpush2.bf16.msra.mxu0 0
    %266 = vmatprep.subr.bf16.mxu0 0
    %267 = vmatpush2.bf16.msra.mxu0 0
    %268 = vmatprep.subr.bf16.mxu0 0
    %269 = vmatpush2.bf16.msra.mxu0 0
    %270 = vmatprep.subr.bf16.mxu0 0
    %271 = vmatpush2.bf16.msra.mxu0 0
    %272 = vmatprep.subr.bf16.mxu0 0
    %273 = vmatpush2.bf16.msra.mxu0 0
    %274 = vmatprep.subr.bf16.mxu0 0
    %275 = vmatpush2.bf16.msra.mxu0 0
    %276 = vmatprep.subr.bf16.mxu0 0
    %277 = vmatpush2.bf16.msra.mxu0 0
    %278 = vmatprep.subr.bf16.mxu0 0
    %279 = vmatpush2.bf16.msra.mxu0 0
    %280 = vmatprep.mubr.bf16.mxu0 0
    %281 = vmatmul.mubr.bf16.gmra.mxu0 %v243
    %v282 = vpop.f32.mrf.mxu0
    %v283 = vadd.f32 %v237, %v282
    %v284 = vpop.f32.mrf.mxu0
    %v285 = vpop.f32.mrf.mxu0
    %v286 = vpop.f32.mrf.mxu0
    %287 = vdwg.mxu0
    %v288 = vadd.f32 %v283, %v83
    %v289 = vxor.u32 %v193, 2147483648
    %v290 = vmul.f32 %v289, 1.442695
    %v291 = vpow.pop %v290
    %v292 = vadd.f32 %v291, 1.0
    %v293 = vrcp.pop %v292
    %v294 = vmul.f32 1.0, %v293
    %v295 = vtanh.pop %v193
    %v296 = vmul.f32 %v294, 0.0
    %298 = vrot.lane.b32.xlu0 %v295, 96
    %v299 = vpop.permute.xlu0 %298
    %v301 = vmul.f32 %v294, %v299
    %303 = vrot.lane.b32.xlu0 %v301, 16
    %v304 = vpop.permute.xlu0 %303
    %v306 = vadd.f32 %v296, %v304
    %v307 = vtanh.pop %v306
    %309 = vrot.lane.b32.xlu0 %v307, 32
    %v310 = vpop.permute.xlu0 %309
    %v312 = vmul.f32 %v294, %v310
    %v313 = vxor.u32 %v288, 2147483648
    %v314 = vmul.f32 %v313, 1.442695
    %v315 = vpow.pop %v314
    %v316 = vadd.f32 %v315, 1.0
    %v317 = vrcp.pop %v316
    %v318 = vmul.f32 1.0, %v317
    %v319 = vtanh.pop %v288
    %v320 = vmul.f32 %v318, 0.0
    %322 = vrot.lane.b32.xlu0 %v319, 96
    %v323 = vpop.permute.xlu0 %322
    %v325 = vmul.f32 %v318, %v323
    %327 = vrot.lane.b32.xlu0 %v325, 16
    %v328 = vpop.permute.xlu0 %327
    %v330 = vadd.f32 %v320, %v328
    %v331 = vtanh.pop %v330
    %333 = vrot.lane.b32.xlu0 %v331, 32
    %v334 = vpop.permute.xlu0 %333
    %v336 = vmul.f32 %v318, %v334
    %v337 = vpack.c.bf16 %v312, %v312
    %v338 = vpack.c.bf16 %v336, %v336
    %v339 = vld [vmem:[#allocation7] sm:$0x3]
    %341 = vrot.lane.b32.xlu0 %v337, 80
    %v342 = vpop.permute.xlu0 %341
    %v345 = vunpack.c.l.b16 %v67
    %v346 = vunpack.c.l.b16 %v68
    %v347 = vpack.c.b16 %v346, %v345
    %v350 = vsel %vm101, %v342, 0
    %352 = vmatprep.subr.bf16.mxu0 0
    %353 = vmatpush1.bf16.msra.mxu0 0
    %354 = vmatprep.subr.bf16.mxu0 0
    %355 = vmatpush1.bf16.msra.mxu0 0
    %356 = vmatprep.subr.bf16.mxu0 0
    %357 = vmatpush1.bf16.msra.mxu0 0
    %358 = vmatprep.subr.bf16.mxu0 0
    %359 = vmatpush1.bf16.msra.mxu0 0
    %360 = vmatprep.subr.bf16.mxu0 0
    %361 = vmatpush1.bf16.msra.mxu0 0
    %362 = vmatprep.subr.bf16.mxu0 0
    %363 = vmatpush1.bf16.msra.mxu0 0
    %364 = vmatprep.subr.bf16.mxu0 0
    %365 = vmatpush1.bf16.msra.mxu0 0
    %366 = vmatprep.subr.bf16.mxu0 0
    %367 = vmatpush1.bf16.msra.mxu0 %v347
    %368 = vmatprep.subr.bf16.mxu0 0
    %369 = vmatpush2.bf16.msra.mxu0 0
    %370 = vmatprep.subr.bf16.mxu0 0
    %371 = vmatpush2.bf16.msra.mxu0 0
    %372 = vmatprep.subr.bf16.mxu0 0
    %373 = vmatpush2.bf16.msra.mxu0 0
    %374 = vmatprep.subr.bf16.mxu0 0
    %375 = vmatpush2.bf16.msra.mxu0 0
    %376 = vmatprep.subr.bf16.mxu0 0
    %377 = vmatpush2.bf16.msra.mxu0 0
    %378 = vmatprep.subr.bf16.mxu0 0
    %379 = vmatpush2.bf16.msra.mxu0 0
    %380 = vmatprep.subr.bf16.mxu0 0
    %381 = vmatpush2.bf16.msra.mxu0 0
    %382 = vmatprep.subr.bf16.mxu0 0
    %383 = vmatpush2.bf16.msra.mxu0 0
    %384 = vmatprep.mubr.bf16.mxu0 0
    %385 = vmatmul.mubr.bf16.gmra.mxu0 %v350
    %v386 = vpop.f32.mrf.mxu0
    %v387 = vadd.f32 0.0, %v386
    %v388 = vpop.f32.mrf.mxu0
    %v389 = vpop.f32.mrf.mxu0
    %v390 = vpop.f32.mrf.mxu0
    %391 = vdwg.mxu0
    %v392 = vadd.f32 %v339, %v387
    %393 = vst.msk [vmem:[#allocation7] sm:$0x3] %vm85, %v392
    %s394 = scalar_lea.vmem [#allocation7], 14
    %v395 = vld [vmem:[%s394] sm:$0x3]
    %397 = vrot.lane.b32.xlu0 %v338, 80
    %v398 = vpop.permute.xlu0 %397
    %v401 = vunpack.c.l.b16 %v69
    %v402 = vunpack.c.l.b16 %v70
    %v403 = vpack.c.b16 %v402, %v401
    %v406 = vsel %vm101, %v398, 0
    %408 = vmatprep.subr.bf16.mxu0 0
    %409 = vmatpush1.bf16.msra.mxu0 0
    %410 = vmatprep.subr.bf16.mxu0 0
    %411 = vmatpush1.bf16.msra.mxu0 0
    %412 = vmatprep.subr.bf16.mxu0 0
    %413 = vmatpush1.bf16.msra.mxu0 0
    %414 = vmatprep.subr.bf16.mxu0 0
    %415 = vmatpush1.bf16.msra.mxu0 0
    %416 = vmatprep.subr.bf16.mxu0 0
    %417 = vmatpush1.bf16.msra.mxu0 0
    %418 = vmatprep.subr.bf16.mxu0 0
    %419 = vmatpush1.bf16.msra.mxu0 0
    %420 = vmatprep.subr.bf16.mxu0 0
    %421 = vmatpush1.bf16.msra.mxu0 0
    %422 = vmatprep.subr.bf16.mxu0 0
    %423 = vmatpush1.bf16.msra.mxu0 %v403
    %424 = vmatprep.subr.bf16.mxu0 0
    %425 = vmatpush2.bf16.msra.mxu0 0
    %426 = vmatprep.subr.bf16.mxu0 0
    %427 = vmatpush2.bf16.msra.mxu0 0
    %428 = vmatprep.subr.bf16.mxu0 0
    %429 = vmatpush2.bf16.msra.mxu0 0
    %430 = vmatprep.subr.bf16.mxu0 0
    %431 = vmatpush2.bf16.msra.mxu0 0
    %432 = vmatprep.subr.bf16.mxu0 0
    %433 = vmatpush2.bf16.msra.mxu0 0
    %434 = vmatprep.subr.bf16.mxu0 0
    %435 = vmatpush2.bf16.msra.mxu0 0
    %436 = vmatprep.subr.bf16.mxu0 0
    %437 = vmatpush2.bf16.msra.mxu0 0
    %438 = vmatprep.subr.bf16.mxu0 0
    %439 = vmatpush2.bf16.msra.mxu0 0
    %440 = vmatprep.mubr.bf16.mxu0 0
    %441 = vmatmul.mubr.bf16.gmra.mxu0 %v406
    %v442 = vpop.f32.mrf.mxu0
    %v443 = vadd.f32 0.0, %v442
    %v444 = vpop.f32.mrf.mxu0
    %v445 = vpop.f32.mrf.mxu0
    %v446 = vpop.f32.mrf.mxu0
    %447 = vdwg.mxu0
    %v448 = vadd.f32 %v395, %v443
    %449 = vst.msk [vmem:[%s394] sm:$0x3] %vm85, %v448
    %s450 = scalar_lea.vmem %s0, 1
    %v451 = vld [vmem:[%s450] sm:$0x1]
    %452 = vmatprep.subr.bf16.mxu0 0
    %453 = vmatpush1.bf16.msra.mxu0 0
    %454 = vmatprep.subr.bf16.mxu0 0
    %455 = vmatpush1.bf16.msra.mxu0 0
    %456 = vmatprep.subr.bf16.mxu0 0
    %457 = vmatpush1.bf16.msra.mxu0 0
    %458 = vmatprep.subr.bf16.mxu0 0
    %459 = vmatpush1.bf16.msra.mxu0 0
    %460 = vmatprep.subr.bf16.mxu0 0
    %461 = vmatpush1.bf16.msra.mxu0 0
    %462 = vmatprep.subr.bf16.mxu0 0
    %463 = vmatpush1.bf16.msra.mxu0 0
    %464 = vmatprep.subr.bf16.mxu0 0
    %465 = vmatpush1.bf16.msra.mxu0 0
    %466 = vmatprep.subr.bf16.mxu0 0
    %467 = vmatpush1.bf16.msra.mxu0 %v99
    %468 = vmatprep.subr.bf16.mxu0 0
    %469 = vmatpush2.bf16.msra.mxu0 0
    %470 = vmatprep.subr.bf16.mxu0 0
    %471 = vmatpush2.bf16.msra.mxu0 0
    %472 = vmatprep.subr.bf16.mxu0 0
    %473 = vmatpush2.bf16.msra.mxu0 0
    %474 = vmatprep.subr.bf16.mxu0 0
    %475 = vmatpush2.bf16.msra.mxu0 0
    %476 = vmatprep.subr.bf16.mxu0 0
    %477 = vmatpush2.bf16.msra.mxu0 0
    %478 = vmatprep.subr.bf16.mxu0 0
    %479 = vmatpush2.bf16.msra.mxu0 0
    %480 = vmatprep.subr.bf16.mxu0 0
    %481 = vmatpush2.bf16.msra.mxu0 0
    %482 = vmatprep.subr.bf16.mxu0 0
    %483 = vmatpush2.bf16.msra.mxu0 0
    %484 = vmatprep.mubr.bf16.mxu0 0
    %485 = vmatmul.mubr.bf16.gmra.mxu0 %v350
    %v486 = vpop.f32.mrf.mxu0
    %v487 = vadd.f32 0.0, %v486
    %v488 = vpop.f32.mrf.mxu0
    %v489 = vpop.f32.mrf.mxu0
    %v490 = vpop.f32.mrf.mxu0
    %491 = vdwg.mxu0
    %v493 = vsel %vm145, %v451, 0
    %495 = vmatprep.subr.bf16.mxu0 0
    %496 = vmatpush1.bf16.msra.mxu0 0
    %497 = vmatprep.subr.bf16.mxu0 0
    %498 = vmatpush1.bf16.msra.mxu0 0
    %499 = vmatprep.subr.bf16.mxu0 0
    %500 = vmatpush1.bf16.msra.mxu0 0
    %501 = vmatprep.subr.bf16.mxu0 0
    %502 = vmatpush1.bf16.msra.mxu0 0
    %503 = vmatprep.subr.bf16.mxu0 0
    %504 = vmatpush1.bf16.msra.mxu0 0
    %505 = vmatprep.subr.bf16.mxu0 0
    %506 = vmatpush1.bf16.msra.mxu0 0
    %507 = vmatprep.subr.bf16.mxu0 0
    %508 = vmatpush1.bf16.msra.mxu0 0
    %509 = vmatprep.subr.bf16.mxu0 0
    %510 = vmatpush1.bf16.msra.mxu0 %v151
    %511 = vmatprep.subr.bf16.mxu0 0
    %512 = vmatpush2.bf16.msra.mxu0 0
    %513 = vmatprep.subr.bf16.mxu0 0
    %514 = vmatpush2.bf16.msra.mxu0 0
    %515 = vmatprep.subr.bf16.mxu0 0
    %516 = vmatpush2.bf16.msra.mxu0 0
    %517 = vmatprep.subr.bf16.mxu0 0
    %518 = vmatpush2.bf16.msra.mxu0 0
    %519 = vmatprep.subr.bf16.mxu0 0
    %520 = vmatpush2.bf16.msra.mxu0 0
    %521 = vmatprep.subr.bf16.mxu0 0
    %522 = vmatpush2.bf16.msra.mxu0 0
    %523 = vmatprep.subr.bf16.mxu0 0
    %524 = vmatpush2.bf16.msra.mxu0 0
    %525 = vmatprep.subr.bf16.mxu0 0
    %526 = vmatpush2.bf16.msra.mxu0 0
    %527 = vmatprep.mubr.bf16.mxu0 0
    %528 = vmatmul.mubr.bf16.gmra.mxu0 %v493
    %v529 = vpop.f32.mrf.mxu0
    %v530 = vadd.f32 %v487, %v529
    %v531 = vpop.f32.mrf.mxu0
    %v532 = vpop.f32.mrf.mxu0
    %v533 = vpop.f32.mrf.mxu0
    %534 = vdwg.mxu0
    %v535 = vadd.f32 %v530, %v76
    %s536 = scalar_lea.vmem %s0, 6
    %v537 = vld [vmem:[%s536] sm:$0x1]
    %538 = vmatprep.subr.bf16.mxu0 0
    %539 = vmatpush1.bf16.msra.mxu0 0
    %540 = vmatprep.subr.bf16.mxu0 0
    %541 = vmatpush1.bf16.msra.mxu0 0
    %542 = vmatprep.subr.bf16.mxu0 0
    %543 = vmatpush1.bf16.msra.mxu0 0
    %544 = vmatprep.subr.bf16.mxu0 0
    %545 = vmatpush1.bf16.msra.mxu0 0
    %546 = vmatprep.subr.bf16.mxu0 0
    %547 = vmatpush1.bf16.msra.mxu0 0
    %548 = vmatprep.subr.bf16.mxu0 0
    %549 = vmatpush1.bf16.msra.mxu0 0
    %550 = vmatprep.subr.bf16.mxu0 0
    %551 = vmatpush1.bf16.msra.mxu0 0
    %552 = vmatprep.subr.bf16.mxu0 0
    %553 = vmatpush1.bf16.msra.mxu0 %v200
    %554 = vmatprep.subr.bf16.mxu0 0
    %555 = vmatpush2.bf16.msra.mxu0 0
    %556 = vmatprep.subr.bf16.mxu0 0
    %557 = vmatpush2.bf16.msra.mxu0 0
    %558 = vmatprep.subr.bf16.mxu0 0
    %559 = vmatpush2.bf16.msra.mxu0 0
    %560 = vmatprep.subr.bf16.mxu0 0
    %561 = vmatpush2.bf16.msra.mxu0 0
    %562 = vmatprep.subr.bf16.mxu0 0
    %563 = vmatpush2.bf16.msra.mxu0 0
    %564 = vmatprep.subr.bf16.mxu0 0
    %565 = vmatpush2.bf16.msra.mxu0 0
    %566 = vmatprep.subr.bf16.mxu0 0
    %567 = vmatpush2.bf16.msra.mxu0 0
    %568 = vmatprep.subr.bf16.mxu0 0
    %569 = vmatpush2.bf16.msra.mxu0 0
    %570 = vmatprep.mubr.bf16.mxu0 0
    %571 = vmatmul.mubr.bf16.gmra.mxu0 %v406
    %v572 = vpop.f32.mrf.mxu0
    %v573 = vadd.f32 0.0, %v572
    %v574 = vpop.f32.mrf.mxu0
    %v575 = vpop.f32.mrf.mxu0
    %v576 = vpop.f32.mrf.mxu0
    %577 = vdwg.mxu0
    %v579 = vsel %vm145, %v537, 0
    %581 = vmatprep.subr.bf16.mxu0 0
    %582 = vmatpush1.bf16.msra.mxu0 0
    %583 = vmatprep.subr.bf16.mxu0 0
    %584 = vmatpush1.bf16.msra.mxu0 0
    %585 = vmatprep.subr.bf16.mxu0 0
    %586 = vmatpush1.bf16.msra.mxu0 0
    %587 = vmatprep.subr.bf16.mxu0 0
    %588 = vmatpush1.bf16.msra.mxu0 0
    %589 = vmatprep.subr.bf16.mxu0 0
    %590 = vmatpush1.bf16.msra.mxu0 0
    %591 = vmatprep.subr.bf16.mxu0 0
    %592 = vmatpush1.bf16.msra.mxu0 0
    %593 = vmatprep.subr.bf16.mxu0 0
    %594 = vmatpush1.bf16.msra.mxu0 0
    %595 = vmatprep.subr.bf16.mxu0 0
    %596 = vmatpush1.bf16.msra.mxu0 %v246
    %597 = vmatprep.subr.bf16.mxu0 0
    %598 = vmatpush2.bf16.msra.mxu0 0
    %599 = vmatprep.subr.bf16.mxu0 0
    %600 = vmatpush2.bf16.msra.mxu0 0
    %601 = vmatprep.subr.bf16.mxu0 0
    %602 = vmatpush2.bf16.msra.mxu0 0
    %603 = vmatprep.subr.bf16.mxu0 0
    %604 = vmatpush2.bf16.msra.mxu0 0
    %605 = vmatprep.subr.bf16.mxu0 0
    %606 = vmatpush2.bf16.msra.mxu0 0
    %607 = vmatprep.subr.bf16.mxu0 0
    %608 = vmatpush2.bf16.msra.mxu0 0
    %609 = vmatprep.subr.bf16.mxu0 0
    %610 = vmatpush2.bf16.msra.mxu0 0
    %611 = vmatprep.subr.bf16.mxu0 0
    %612 = vmatpush2.bf16.msra.mxu0 0
    %613 = vmatprep.mubr.bf16.mxu0 0
    %614 = vmatmul.mubr.bf16.gmra.mxu0 %v579
    %v615 = vpop.f32.mrf.mxu0
    %v616 = vadd.f32 %v573, %v615
    %v617 = vpop.f32.mrf.mxu0
    %v618 = vpop.f32.mrf.mxu0
    %v619 = vpop.f32.mrf.mxu0
    %620 = vdwg.mxu0
    %v621 = vadd.f32 %v616, %v83
    %v622 = vxor.u32 %v535, 2147483648
    %v623 = vmul.f32 %v622, 1.442695
    %v624 = vpow.pop %v623
    %v625 = vadd.f32 %v624, 1.0
    %v626 = vrcp.pop %v625
    %v627 = vmul.f32 1.0, %v626
    %v628 = vtanh.pop %v535
    %v629 = vmul.f32 %v627, %v306
    %631 = vrot.lane.b32.xlu0 %v628, 96
    %v632 = vpop.permute.xlu0 %631
    %v634 = vmul.f32 %v627, %v632
    %636 = vrot.lane.b32.xlu0 %v634, 16
    %v637 = vpop.permute.xlu0 %636
    %v639 = vadd.f32 %v629, %v637
    %v640 = vtanh.pop %v639
    %642 = vrot.lane.b32.xlu0 %v640, 32
    %v643 = vpop.permute.xlu0 %642
    %v645 = vmul.f32 %v627, %v643
    %v646 = vxor.u32 %v621, 2147483648
    %v647 = vmul.f32 %v646, 1.442695
    %v648 = vpow.pop %v647
    %v649 = vadd.f32 %v648, 1.0
    %v650 = vrcp.pop %v649
    %v651 = vmul.f32 1.0, %v650
    %v652 = vtanh.pop %v621
    %v653 = vmul.f32 %v651, %v330
    %655 = vrot.lane.b32.xlu0 %v652, 96
    %v656 = vpop.permute.xlu0 %655
    %v658 = vmul.f32 %v651, %v656
    %660 = vrot.lane.b32.xlu0 %v658, 16
    %v661 = vpop.permute.xlu0 %660
    %v663 = vadd.f32 %v653, %v661
    %v664 = vtanh.pop %v663
    %666 = vrot.lane.b32.xlu0 %v664, 32
    %v667 = vpop.permute.xlu0 %666
    %v669 = vmul.f32 %v651, %v667
    %v670 = vpack.c.bf16 %v645, %v645
    %v671 = vpack.c.bf16 %v669, %v669
    %s672 = scalar_lea.vmem [#allocation7], 2
    %v673 = vld [vmem:[%s672] sm:$0x3]
    %675 = vrot.lane.b32.xlu0 %v670, 80
    %v676 = vpop.permute.xlu0 %675
    %v678 = vsel %vm101, %v676, 0
    %680 = vmatprep.subr.bf16.mxu0 0
    %681 = vmatpush1.bf16.msra.mxu0 0
    %682 = vmatprep.subr.bf16.mxu0 0
    %683 = vmatpush1.bf16.msra.mxu0 0
    %684 = vmatprep.subr.bf16.mxu0 0
    %685 = vmatpush1.bf16.msra.mxu0 0
    %686 = vmatprep.subr.bf16.mxu0 0
    %687 = vmatpush1.bf16.msra.mxu0 0
    %688 = vmatprep.subr.bf16.mxu0 0
    %689 = vmatpush1.bf16.msra.mxu0 0
    %690 = vmatprep.subr.bf16.mxu0 0
    %691 = vmatpush1.bf16.msra.mxu0 0
    %692 = vmatprep.subr.bf16.mxu0 0
    %693 = vmatpush1.bf16.msra.mxu0 0
    %694 = vmatprep.subr.bf16.mxu0 0
    %695 = vmatpush1.bf16.msra.mxu0 %v347
    %696 = vmatprep.subr.bf16.mxu0 0
    %697 = vmatpush2.bf16.msra.mxu0 0
    %698 = vmatprep.subr.bf16.mxu0 0
    %699 = vmatpush2.bf16.msra.mxu0 0
    %700 = vmatprep.subr.bf16.mxu0 0
    %701 = vmatpush2.bf16.msra.mxu0 0
    %702 = vmatprep.subr.bf16.mxu0 0
    %703 = vmatpush2.bf16.msra.mxu0 0
    %704 = vmatprep.subr.bf16.mxu0 0
    %705 = vmatpush2.bf16.msra.mxu0 0
    %706 = vmatprep.subr.bf16.mxu0 0
    %707 = vmatpush2.bf16.msra.mxu0 0
    %708 = vmatprep.subr.bf16.mxu0 0
    %709 = vmatpush2.bf16.msra.mxu0 0
    %710 = vmatprep.subr.bf16.mxu0 0
    %711 = vmatpush2.bf16.msra.mxu0 0
    %712 = vmatprep.mubr.bf16.mxu0 0
    %713 = vmatmul.mubr.bf16.gmra.mxu0 %v678
    %v714 = vpop.f32.mrf.mxu0
    %v715 = vadd.f32 0.0, %v714
    %v716 = vpop.f32.mrf.mxu0
    %v717 = vpop.f32.mrf.mxu0
    %v718 = vpop.f32.mrf.mxu0
    %719 = vdwg.mxu0
    %v720 = vadd.f32 %v673, %v715
    %721 = vst.msk [vmem:[%s672] sm:$0x3] %vm85, %v720
    %s722 = scalar_lea.vmem [#allocation7], 12
    %v723 = vld [vmem:[%s722] sm:$0x3]
    %725 = vrot.lane.b32.xlu0 %v671, 80
    %v726 = vpop.permute.xlu0 %725
    %v728 = vsel %vm101, %v726, 0
    %730 = vmatprep.subr.bf16.mxu0 0
    %731 = vmatpush1.bf16.msra.mxu0 0
    %732 = vmatprep.subr.bf16.mxu0 0
    %733 = vmatpush1.bf16.msra.mxu0 0
    %734 = vmatprep.subr.bf16.mxu0 0
    %735 = vmatpush1.bf16.msra.mxu0 0
    %736 = vmatprep.subr.bf16.mxu0 0
    %737 = vmatpush1.bf16.msra.mxu0 0
    %738 = vmatprep.subr.bf16.mxu0 0
    %739 = vmatpush1.bf16.msra.mxu0 0
    %740 = vmatprep.subr.bf16.mxu0 0
    %741 = vmatpush1.bf16.msra.mxu0 0
    %742 = vmatprep.subr.bf16.mxu0 0
    %743 = vmatpush1.bf16.msra.mxu0 0
    %744 = vmatprep.subr.bf16.mxu0 0
    %745 = vmatpush1.bf16.msra.mxu0 %v403
    %746 = vmatprep.subr.bf16.mxu0 0
    %747 = vmatpush2.bf16.msra.mxu0 0
    %748 = vmatprep.subr.bf16.mxu0 0
    %749 = vmatpush2.bf16.msra.mxu0 0
    %750 = vmatprep.subr.bf16.mxu0 0
    %751 = vmatpush2.bf16.msra.mxu0 0
    %752 = vmatprep.subr.bf16.mxu0 0
    %753 = vmatpush2.bf16.msra.mxu0 0
    %754 = vmatprep.subr.bf16.mxu0 0
    %755 = vmatpush2.bf16.msra.mxu0 0
    %756 = vmatprep.subr.bf16.mxu0 0
    %757 = vmatpush2.bf16.msra.mxu0 0
    %758 = vmatprep.subr.bf16.mxu0 0
    %759 = vmatpush2.bf16.msra.mxu0 0
    %760 = vmatprep.subr.bf16.mxu0 0
    %761 = vmatpush2.bf16.msra.mxu0 0
    %762 = vmatprep.mubr.bf16.mxu0 0
    %763 = vmatmul.mubr.bf16.gmra.mxu0 %v728
    %v764 = vpop.f32.mrf.mxu0
    %v765 = vadd.f32 0.0, %v764
    %v766 = vpop.f32.mrf.mxu0
    %v767 = vpop.f32.mrf.mxu0
    %v768 = vpop.f32.mrf.mxu0
    %769 = vdwg.mxu0
    %v770 = vadd.f32 %v723, %v765
    %771 = vst.msk [vmem:[%s722] sm:$0x3] %vm85, %v770
    %s772 = scalar_lea.vmem %s0, 2
    %v773 = vld [vmem:[%s772] sm:$0x1]
    %774 = vmatprep.subr.bf16.mxu0 0
    %775 = vmatpush1.bf16.msra.mxu0 0
    %776 = vmatprep.subr.bf16.mxu0 0
    %777 = vmatpush1.bf16.msra.mxu0 0
    %778 = vmatprep.subr.bf16.mxu0 0
    %779 = vmatpush1.bf16.msra.mxu0 0
    %780 = vmatprep.subr.bf16.mxu0 0
    %781 = vmatpush1.bf16.msra.mxu0 0
    %782 = vmatprep.subr.bf16.mxu0 0
    %783 = vmatpush1.bf16.msra.mxu0 0
    %784 = vmatprep.subr.bf16.mxu0 0
    %785 = vmatpush1.bf16.msra.mxu0 0
    %786 = vmatprep.subr.bf16.mxu0 0
    %787 = vmatpush1.bf16.msra.mxu0 0
    %788 = vmatprep.subr.bf16.mxu0 0
    %789 = vmatpush1.bf16.msra.mxu0 %v99
    %790 = vmatprep.subr.bf16.mxu0 0
    %791 = vmatpush2.bf16.msra.mxu0 0
    %792 = vmatprep.subr.bf16.mxu0 0
    %793 = vmatpush2.bf16.msra.mxu0 0
    %794 = vmatprep.subr.bf16.mxu0 0
    %795 = vmatpush2.bf16.msra.mxu0 0
    %796 = vmatprep.subr.bf16.mxu0 0
    %797 = vmatpush2.bf16.msra.mxu0 0
    %798 = vmatprep.subr.bf16.mxu0 0
    %799 = vmatpush2.bf16.msra.mxu0 0
    %800 = vmatprep.subr.bf16.mxu0 0
    %801 = vmatpush2.bf16.msra.mxu0 0
    %802 = vmatprep.subr.bf16.mxu0 0
    %803 = vmatpush2.bf16.msra.mxu0 0
    %804 = vmatprep.subr.bf16.mxu0 0
    %805 = vmatpush2.bf16.msra.mxu0 0
    %806 = vmatprep.mubr.bf16.mxu0 0
    %807 = vmatmul.mubr.bf16.gmra.mxu0 %v678
    %v808 = vpop.f32.mrf.mxu0
    %v809 = vadd.f32 0.0, %v808
    %v810 = vpop.f32.mrf.mxu0
    %v811 = vpop.f32.mrf.mxu0
    %v812 = vpop.f32.mrf.mxu0
    %813 = vdwg.mxu0
    %v815 = vsel %vm145, %v773, 0
    %817 = vmatprep.subr.bf16.mxu0 0
    %818 = vmatpush1.bf16.msra.mxu0 0
    %819 = vmatprep.subr.bf16.mxu0 0
    %820 = vmatpush1.bf16.msra.mxu0 0
    %821 = vmatprep.subr.bf16.mxu0 0
    %822 = vmatpush1.bf16.msra.mxu0 0
    %823 = vmatprep.subr.bf16.mxu0 0
    %824 = vmatpush1.bf16.msra.mxu0 0
    %825 = vmatprep.subr.bf16.mxu0 0
    %826 = vmatpush1.bf16.msra.mxu0 0
    %827 = vmatprep.subr.bf16.mxu0 0
    %828 = vmatpush1.bf16.msra.mxu0 0
    %829 = vmatprep.subr.bf16.mxu0 0
    %830 = vmatpush1.bf16.msra.mxu0 0
    %831 = vmatprep.subr.bf16.mxu0 0
    %832 = vmatpush1.bf16.msra.mxu0 %v151
    %833 = vmatprep.subr.bf16.mxu0 0
    %834 = vmatpush2.bf16.msra.mxu0 0
    %835 = vmatprep.subr.bf16.mxu0 0
    %836 = vmatpush2.bf16.msra.mxu0 0
    %837 = vmatprep.subr.bf16.mxu0 0
    %838 = vmatpush2.bf16.msra.mxu0 0
    %839 = vmatprep.subr.bf16.mxu0 0
    %840 = vmatpush2.bf16.msra.mxu0 0
    %841 = vmatprep.subr.bf16.mxu0 0
    %842 = vmatpush2.bf16.msra.mxu0 0
    %843 = vmatprep.subr.bf16.mxu0 0
    %844 = vmatpush2.bf16.msra.mxu0 0
    %845 = vmatprep.subr.bf16.mxu0 0
    %846 = vmatpush2.bf16.msra.mxu0 0
    %847 = vmatprep.subr.bf16.mxu0 0
    %848 = vmatpush2.bf16.msra.mxu0 0
    %849 = vmatprep.mubr.bf16.mxu0 0
    %850 = vmatmul.mubr.bf16.gmra.mxu0 %v815
    %v851 = vpop.f32.mrf.mxu0
    %v852 = vadd.f32 %v809, %v851
    %v853 = vpop.f32.mrf.mxu0
    %v854 = vpop.f32.mrf.mxu0
    %v855 = vpop.f32.mrf.mxu0
    %856 = vdwg.mxu0
    %v857 = vadd.f32 %v852, %v76
    %s858 = scalar_lea.vmem %s0, 5
    %v859 = vld [vmem:[%s858] sm:$0x1]
    %860 = vmatprep.subr.bf16.mxu0 0
    %861 = vmatpush1.bf16.msra.mxu0 0
    %862 = vmatprep.subr.bf16.mxu0 0
    %863 = vmatpush1.bf16.msra.mxu0 0
    %864 = vmatprep.subr.bf16.mxu0 0
    %865 = vmatpush1.bf16.msra.mxu0 0
    %866 = vmatprep.subr.bf16.mxu0 0
    %867 = vmatpush1.bf16.msra.mxu0 0
    %868 = vmatprep.subr.bf16.mxu0 0
    %869 = vmatpush1.bf16.msra.mxu0 0
    %870 = vmatprep.subr.bf16.mxu0 0
    %871 = vmatpush1.bf16.msra.mxu0 0
    %872 = vmatprep.subr.bf16.mxu0 0
    %873 = vmatpush1.bf16.msra.mxu0 0
    %874 = vmatprep.subr.bf16.mxu0 0
    %875 = vmatpush1.bf16.msra.mxu0 %v200
    %876 = vmatprep.subr.bf16.mxu0 0
    %877 = vmatpush2.bf16.msra.mxu0 0
    %878 = vmatprep.subr.bf16.mxu0 0
    %879 = vmatpush2.bf16.msra.mxu0 0
    %880 = vmatprep.subr.bf16.mxu0 0
    %881 = vmatpush2.bf16.msra.mxu0 0
    %882 = vmatprep.subr.bf16.mxu0 0
    %883 = vmatpush2.bf16.msra.mxu0 0
    %884 = vmatprep.subr.bf16.mxu0 0
    %885 = vmatpush2.bf16.msra.mxu0 0
    %886 = vmatprep.subr.bf16.mxu0 0
    %887 = vmatpush2.bf16.msra.mxu0 0
    %888 = vmatprep.subr.bf16.mxu0 0
    %889 = vmatpush2.bf16.msra.mxu0 0
    %890 = vmatprep.subr.bf16.mxu0 0
    %891 = vmatpush2.bf16.msra.mxu0 0
    %892 = vmatprep.mubr.bf16.mxu0 0
    %893 = vmatmul.mubr.bf16.gmra.mxu0 %v728
    %v894 = vpop.f32.mrf.mxu0
    %v895 = vadd.f32 0.0, %v894
    %v896 = vpop.f32.mrf.mxu0
    %v897 = vpop.f32.mrf.mxu0
    %v898 = vpop.f32.mrf.mxu0
    %899 = vdwg.mxu0
    %v901 = vsel %vm145, %v859, 0
    %903 = vmatprep.subr.bf16.mxu0 0
    %904 = vmatpush1.bf16.msra.mxu0 0
    %905 = vmatprep.subr.bf16.mxu0 0
    %906 = vmatpush1.bf16.msra.mxu0 0
    %907 = vmatprep.subr.bf16.mxu0 0
    %908 = vmatpush1.bf16.msra.mxu0 0
    %909 = vmatprep.subr.bf16.mxu0 0
    %910 = vmatpush1.bf16.msra.mxu0 0
    %911 = vmatprep.subr.bf16.mxu0 0
    %912 = vmatpush1.bf16.msra.mxu0 0
    %913 = vmatprep.subr.bf16.mxu0 0
    %914 = vmatpush1.bf16.msra.mxu0 0
    %915 = vmatprep.subr.bf16.mxu0 0
    %916 = vmatpush1.bf16.msra.mxu0 0
    %917 = vmatprep.subr.bf16.mxu0 0
    %918 = vmatpush1.bf16.msra.mxu0 %v246
    %919 = vmatprep.subr.bf16.mxu0 0
    %920 = vmatpush2.bf16.msra.mxu0 0
    %921 = vmatprep.subr.bf16.mxu0 0
    %922 = vmatpush2.bf16.msra.mxu0 0
    %923 = vmatprep.subr.bf16.mxu0 0
    %924 = vmatpush2.bf16.msra.mxu0 0
    %925 = vmatprep.subr.bf16.mxu0 0
    %926 = vmatpush2.bf16.msra.mxu0 0
    %927 = vmatprep.subr.bf16.mxu0 0
    %928 = vmatpush2.bf16.msra.mxu0 0
    %929 = vmatprep.subr.bf16.mxu0 0
    %930 = vmatpush2.bf16.msra.mxu0 0
    %931 = vmatprep.subr.bf16.mxu0 0
    %932 = vmatpush2.bf16.msra.mxu0 0
    %933 = vmatprep.subr.bf16.mxu0 0
    %934 = vmatpush2.bf16.msra.mxu0 0
    %935 = vmatprep.mubr.bf16.mxu0 0
    %936 = vmatmul.mubr.bf16.gmra.mxu0 %v901
    %v937 = vpop.f32.mrf.mxu0
    %v938 = vadd.f32 %v895, %v937
    %v939 = vpop.f32.mrf.mxu0
    %v940 = vpop.f32.mrf.mxu0
    %v941 = vpop.f32.mrf.mxu0
    %942 = vdwg.mxu0
    %v943 = vadd.f32 %v938, %v83
    %v944 = vxor.u32 %v857, 2147483648
    %v945 = vmul.f32 %v944, 1.442695
    %v946 = vpow.pop %v945
    %v947 = vadd.f32 %v946, 1.0
    %v948 = vrcp.pop %v947
    %v949 = vmul.f32 1.0, %v948
    %v950 = vtanh.pop %v857
    %v951 = vmul.f32 %v949, %v639
    %953 = vrot.lane.b32.xlu0 %v950, 96
    %v954 = vpop.permute.xlu0 %953
    %v956 = vmul.f32 %v949, %v954
    %958 = vrot.lane.b32.xlu0 %v956, 16
    %v959 = vpop.permute.xlu0 %958
    %v961 = vadd.f32 %v951, %v959
    %v962 = vtanh.pop %v961
    %964 = vrot.lane.b32.xlu0 %v962, 32
    %v965 = vpop.permute.xlu0 %964
    %v967 = vmul.f32 %v949, %v965
    %v968 = vxor.u32 %v943, 2147483648
    %v969 = vmul.f32 %v968, 1.442695
    %v970 = vpow.pop %v969
    %v971 = vadd.f32 %v970, 1.0
    %v972 = vrcp.pop %v971
    %v973 = vmul.f32 1.0, %v972
    %v974 = vtanh.pop %v943
    %v975 = vmul.f32 %v973, %v663
    %977 = vrot.lane.b32.xlu0 %v974, 96
    %v978 = vpop.permute.xlu0 %977
    %v980 = vmul.f32 %v973, %v978
    %982 = vrot.lane.b32.xlu0 %v980, 16
    %v983 = vpop.permute.xlu0 %982
    %v985 = vadd.f32 %v975, %v983
    %v986 = vtanh.pop %v985
    %988 = vrot.lane.b32.xlu0 %v986, 32
    %v989 = vpop.permute.xlu0 %988
    %v991 = vmul.f32 %v973, %v989
    %v992 = vpack.c.bf16 %v967, %v967
    %v993 = vpack.c.bf16 %v991, %v991
    %s994 = scalar_lea.vmem [#allocation7], 4
    %v995 = vld [vmem:[%s994] sm:$0x3]
    %997 = vrot.lane.b32.xlu0 %v992, 80
    %v998 = vpop.permute.xlu0 %997
    %v1000 = vsel %vm101, %v998, 0
    %1002 = vmatprep.subr.bf16.mxu0 0
    %1003 = vmatpush1.bf16.msra.mxu0 0
    %1004 = vmatprep.subr.bf16.mxu0 0
    %1005 = vmatpush1.bf16.msra.mxu0 0
    %1006 = vmatprep.subr.bf16.mxu0 0
    %1007 = vmatpush1.bf16.msra.mxu0 0
    %1008 = vmatprep.subr.bf16.mxu0 0
    %1009 = vmatpush1.bf16.msra.mxu0 0
    %1010 = vmatprep.subr.bf16.mxu0 0
    %1011 = vmatpush1.bf16.msra.mxu0 0
    %1012 = vmatprep.subr.bf16.mxu0 0
    %1013 = vmatpush1.bf16.msra.mxu0 0
    %1014 = vmatprep.subr.bf16.mxu0 0
    %1015 = vmatpush1.bf16.msra.mxu0 0
    %1016 = vmatprep.subr.bf16.mxu0 0
    %1017 = vmatpush1.bf16.msra.mxu0 %v347
    %1018 = vmatprep.subr.bf16.mxu0 0
    %1019 = vmatpush2.bf16.msra.mxu0 0
    %1020 = vmatprep.subr.bf16.mxu0 0
    %1021 = vmatpush2.bf16.msra.mxu0 0
    %1022 = vmatprep.subr.bf16.mxu0 0
    %1023 = vmatpush2.bf16.msra.mxu0 0
    %1024 = vmatprep.subr.bf16.mxu0 0
    %1025 = vmatpush2.bf16.msra.mxu0 0
    %1026 = vmatprep.subr.bf16.mxu0 0
    %1027 = vmatpush2.bf16.msra.mxu0 0
    %1028 = vmatprep.subr.bf16.mxu0 0
    %1029 = vmatpush2.bf16.msra.mxu0 0
    %1030 = vmatprep.subr.bf16.mxu0 0
    %1031 = vmatpush2.bf16.msra.mxu0 0
    %1032 = vmatprep.subr.bf16.mxu0 0
    %1033 = vmatpush2.bf16.msra.mxu0 0
    %1034 = vmatprep.mubr.bf16.mxu0 0
    %1035 = vmatmul.mubr.bf16.gmra.mxu0 %v1000
    %v1036 = vpop.f32.mrf.mxu0
    %v1037 = vadd.f32 0.0, %v1036
    %v1038 = vpop.f32.mrf.mxu0
    %v1039 = vpop.f32.mrf.mxu0
    %v1040 = vpop.f32.mrf.mxu0
    %1041 = vdwg.mxu0
    %v1042 = vadd.f32 %v995, %v1037
    %1043 = vst.msk [vmem:[%s994] sm:$0x3] %vm85, %v1042
    %s1044 = scalar_lea.vmem [#allocation7], 10
    %v1045 = vld [vmem:[%s1044] sm:$0x3]
    %1047 = vrot.lane.b32.xlu0 %v993, 80
    %v1048 = vpop.permute.xlu0 %1047
    %v1050 = vsel %vm101, %v1048, 0
    %1052 = vmatprep.subr.bf16.mxu0 0
    %1053 = vmatpush1.bf16.msra.mxu0 0
    %1054 = vmatprep.subr.bf16.mxu0 0
    %1055 = vmatpush1.bf16.msra.mxu0 0
    %1056 = vmatprep.subr.bf16.mxu0 0
    %1057 = vmatpush1.bf16.msra.mxu0 0
    %1058 = vmatprep.subr.bf16.mxu0 0
    %1059 = vmatpush1.bf16.msra.mxu0 0
    %1060 = vmatprep.subr.bf16.mxu0 0
    %1061 = vmatpush1.bf16.msra.mxu0 0
    %1062 = vmatprep.subr.bf16.mxu0 0
    %1063 = vmatpush1.bf16.msra.mxu0 0
    %1064 = vmatprep.subr.bf16.mxu0 0
    %1065 = vmatpush1.bf16.msra.mxu0 0
    %1066 = vmatprep.subr.bf16.mxu0 0
    %1067 = vmatpush1.bf16.msra.mxu0 %v403
    %1068 = vmatprep.subr.bf16.mxu0 0
    %1069 = vmatpush2.bf16.msra.mxu0 0
    %1070 = vmatprep.subr.bf16.mxu0 0
    %1071 = vmatpush2.bf16.msra.mxu0 0
    %1072 = vmatprep.subr.bf16.mxu0 0
    %1073 = vmatpush2.bf16.msra.mxu0 0
    %1074 = vmatprep.subr.bf16.mxu0 0
    %1075 = vmatpush2.bf16.msra.mxu0 0
    %1076 = vmatprep.subr.bf16.mxu0 0
    %1077 = vmatpush2.bf16.msra.mxu0 0
    %1078 = vmatprep.subr.bf16.mxu0 0
    %1079 = vmatpush2.bf16.msra.mxu0 0
    %1080 = vmatprep.subr.bf16.mxu0 0
    %1081 = vmatpush2.bf16.msra.mxu0 0
    %1082 = vmatprep.subr.bf16.mxu0 0
    %1083 = vmatpush2.bf16.msra.mxu0 0
    %1084 = vmatprep.mubr.bf16.mxu0 0
    %1085 = vmatmul.mubr.bf16.gmra.mxu0 %v1050
    %v1086 = vpop.f32.mrf.mxu0
    %v1087 = vadd.f32 0.0, %v1086
    %v1088 = vpop.f32.mrf.mxu0
    %v1089 = vpop.f32.mrf.mxu0
    %v1090 = vpop.f32.mrf.mxu0
    %1091 = vdwg.mxu0
    %v1092 = vadd.f32 %v1045, %v1087
    %1093 = vst.msk [vmem:[%s1044] sm:$0x3] %vm85, %v1092
    %s1094 = scalar_lea.vmem %s0, 3
    %v1095 = vld [vmem:[%s1094] sm:$0x1]
    %1096 = vmatprep.subr.bf16.mxu0 0
    %1097 = vmatpush1.bf16.msra.mxu0 0
    %1098 = vmatprep.subr.bf16.mxu0 0
    %1099 = vmatpush1.bf16.msra.mxu0 0
    %1100 = vmatprep.subr.bf16.mxu0 0
    %1101 = vmatpush1.bf16.msra.mxu0 0
    %1102 = vmatprep.subr.bf16.mxu0 0
    %1103 = vmatpush1.bf16.msra.mxu0 0
    %1104 = vmatprep.subr.bf16.mxu0 0
    %1105 = vmatpush1.bf16.msra.mxu0 0
    %1106 = vmatprep.subr.bf16.mxu0 0
    %1107 = vmatpush1.bf16.msra.mxu0 0
    %1108 = vmatprep.subr.bf16.mxu0 0
    %1109 = vmatpush1.bf16.msra.mxu0 0
    %1110 = vmatprep.subr.bf16.mxu0 0
    %1111 = vmatpush1.bf16.msra.mxu0 %v99
    %1112 = vmatprep.subr.bf16.mxu0 0
    %1113 = vmatpush2.bf16.msra.mxu0 0
    %1114 = vmatprep.subr.bf16.mxu0 0
    %1115 = vmatpush2.bf16.msra.mxu0 0
    %1116 = vmatprep.subr.bf16.mxu0 0
    %1117 = vmatpush2.bf16.msra.mxu0 0
    %1118 = vmatprep.subr.bf16.mxu0 0
    %1119 = vmatpush2.bf16.msra.mxu0 0
    %1120 = vmatprep.subr.bf16.mxu0 0
    %1121 = vmatpush2.bf16.msra.mxu0 0
    %1122 = vmatprep.subr.bf16.mxu0 0
    %1123 = vmatpush2.bf16.msra.mxu0 0
    %1124 = vmatprep.subr.bf16.mxu0 0
    %1125 = vmatpush2.bf16.msra.mxu0 0
    %1126 = vmatprep.subr.bf16.mxu0 0
    %1127 = vmatpush2.bf16.msra.mxu0 0
    %1128 = vmatprep.mubr.bf16.mxu0 0
    %1129 = vmatmul.mubr.bf16.gmra.mxu0 %v1000
    %v1130 = vpop.f32.mrf.mxu0
    %v1131 = vadd.f32 0.0, %v1130
    %v1132 = vpop.f32.mrf.mxu0
    %v1133 = vpop.f32.mrf.mxu0
    %v1134 = vpop.f32.mrf.mxu0
    %1135 = vdwg.mxu0
    %v1137 = vsel %vm145, %v1095, 0
    %1139 = vmatprep.subr.bf16.mxu0 0
    %1140 = vmatpush1.bf16.msra.mxu0 0
    %1141 = vmatprep.subr.bf16.mxu0 0
    %1142 = vmatpush1.bf16.msra.mxu0 0
    %1143 = vmatprep.subr.bf16.mxu0 0
    %1144 = vmatpush1.bf16.msra.mxu0 0
    %1145 = vmatprep.subr.bf16.mxu0 0
    %1146 = vmatpush1.bf16.msra.mxu0 0
    %1147 = vmatprep.subr.bf16.mxu0 0
    %1148 = vmatpush1.bf16.msra.mxu0 0
    %1149 = vmatprep.subr.bf16.mxu0 0
    %1150 = vmatpush1.bf16.msra.mxu0 0
    %1151 = vmatprep.subr.bf16.mxu0 0
    %1152 = vmatpush1.bf16.msra.mxu0 0
    %1153 = vmatprep.subr.bf16.mxu0 0
    %1154 = vmatpush1.bf16.msra.mxu0 %v151
    %1155 = vmatprep.subr.bf16.mxu0 0
    %1156 = vmatpush2.bf16.msra.mxu0 0
    %1157 = vmatprep.subr.bf16.mxu0 0
    %1158 = vmatpush2.bf16.msra.mxu0 0
    %1159 = vmatprep.subr.bf16.mxu0 0
    %1160 = vmatpush2.bf16.msra.mxu0 0
    %1161 = vmatprep.subr.bf16.mxu0 0
    %1162 = vmatpush2.bf16.msra.mxu0 0
    %1163 = vmatprep.subr.bf16.mxu0 0
    %1164 = vmatpush2.bf16.msra.mxu0 0
    %1165 = vmatprep.subr.bf16.mxu0 0
    %1166 = vmatpush2.bf16.msra.mxu0 0
    %1167 = vmatprep.subr.bf16.mxu0 0
    %1168 = vmatpush2.bf16.msra.mxu0 0
    %1169 = vmatprep.subr.bf16.mxu0 0
    %1170 = vmatpush2.bf16.msra.mxu0 0
    %1171 = vmatprep.mubr.bf16.mxu0 0
    %1172 = vmatmul.mubr.bf16.gmra.mxu0 %v1137
    %v1173 = vpop.f32.mrf.mxu0
    %v1174 = vadd.f32 %v1131, %v1173
    %v1175 = vpop.f32.mrf.mxu0
    %v1176 = vpop.f32.mrf.mxu0
    %v1177 = vpop.f32.mrf.mxu0
    %1178 = vdwg.mxu0
    %v1179 = vadd.f32 %v1174, %v76
    %s1180 = scalar_lea.vmem %s0, 4
    %v1181 = vld [vmem:[%s1180] sm:$0x1]
    %1182 = vmatprep.subr.bf16.mxu0 0
    %1183 = vmatpush1.bf16.msra.mxu0 0
    %1184 = vmatprep.subr.bf16.mxu0 0
    %1185 = vmatpush1.bf16.msra.mxu0 0
    %1186 = vmatprep.subr.bf16.mxu0 0
    %1187 = vmatpush1.bf16.msra.mxu0 0
    %1188 = vmatprep.subr.bf16.mxu0 0
    %1189 = vmatpush1.bf16.msra.mxu0 0
    %1190 = vmatprep.subr.bf16.mxu0 0
    %1191 = vmatpush1.bf16.msra.mxu0 0
    %1192 = vmatprep.subr.bf16.mxu0 0
    %1193 = vmatpush1.bf16.msra.mxu0 0
    %1194 = vmatprep.subr.bf16.mxu0 0
    %1195 = vmatpush1.bf16.msra.mxu0 0
    %1196 = vmatprep.subr.bf16.mxu0 0
    %1197 = vmatpush1.bf16.msra.mxu0 %v200
    %1198 = vmatprep.subr.bf16.mxu0 0
    %1199 = vmatpush2.bf16.msra.mxu0 0
    %1200 = vmatprep.subr.bf16.mxu0 0
    %1201 = vmatpush2.bf16.msra.mxu0 0
    %1202 = vmatprep.subr.bf16.mxu0 0
    %1203 = vmatpush2.bf16.msra.mxu0 0
    %1204 = vmatprep.subr.bf16.mxu0 0
    %1205 = vmatpush2.bf16.msra.mxu0 0
    %1206 = vmatprep.subr.bf16.mxu0 0
    %1207 = vmatpush2.bf16.msra.mxu0 0
    %1208 = vmatprep.subr.bf16.mxu0 0
    %1209 = vmatpush2.bf16.msra.mxu0 0
    %1210 = vmatprep.subr.bf16.mxu0 0
    %1211 = vmatpush2.bf16.msra.mxu0 0
    %1212 = vmatprep.subr.bf16.mxu0 0
    %1213 = vmatpush2.bf16.msra.mxu0 0
    %1214 = vmatprep.mubr.bf16.mxu0 0
    %1215 = vmatmul.mubr.bf16.gmra.mxu0 %v1050
    %v1216 = vpop.f32.mrf.mxu0
    %v1217 = vadd.f32 0.0, %v1216
    %v1218 = vpop.f32.mrf.mxu0
    %v1219 = vpop.f32.mrf.mxu0
    %v1220 = vpop.f32.mrf.mxu0
    %1221 = vdwg.mxu0
    %v1223 = vsel %vm145, %v1181, 0
    %1225 = vmatprep.subr.bf16.mxu0 0
    %1226 = vmatpush1.bf16.msra.mxu0 0
    %1227 = vmatprep.subr.bf16.mxu0 0
    %1228 = vmatpush1.bf16.msra.mxu0 0
    %1229 = vmatprep.subr.bf16.mxu0 0
    %1230 = vmatpush1.bf16.msra.mxu0 0
    %1231 = vmatprep.subr.bf16.mxu0 0
    %1232 = vmatpush1.bf16.msra.mxu0 0
    %1233 = vmatprep.subr.bf16.mxu0 0
    %1234 = vmatpush1.bf16.msra.mxu0 0
    %1235 = vmatprep.subr.bf16.mxu0 0
    %1236 = vmatpush1.bf16.msra.mxu0 0
    %1237 = vmatprep.subr.bf16.mxu0 0
    %1238 = vmatpush1.bf16.msra.mxu0 0
    %1239 = vmatprep.subr.bf16.mxu0 0
    %1240 = vmatpush1.bf16.msra.mxu0 %v246
    %1241 = vmatprep.subr.bf16.mxu0 0
    %1242 = vmatpush2.bf16.msra.mxu0 0
    %1243 = vmatprep.subr.bf16.mxu0 0
    %1244 = vmatpush2.bf16.msra.mxu0 0
    %1245 = vmatprep.subr.bf16.mxu0 0
    %1246 = vmatpush2.bf16.msra.mxu0 0
    %1247 = vmatprep.subr.bf16.mxu0 0
    %1248 = vmatpush2.bf16.msra.mxu0 0
    %1249 = vmatprep.subr.bf16.mxu0 0
    %1250 = vmatpush2.bf16.msra.mxu0 0
    %1251 = vmatprep.subr.bf16.mxu0 0
    %1252 = vmatpush2.bf16.msra.mxu0 0
    %1253 = vmatprep.subr.bf16.mxu0 0
    %1254 = vmatpush2.bf16.msra.mxu0 0
    %1255 = vmatprep.subr.bf16.mxu0 0
    %1256 = vmatpush2.bf16.msra.mxu0 0
    %1257 = vmatprep.mubr.bf16.mxu0 0
    %1258 = vmatmul.mubr.bf16.gmra.mxu0 %v1223
    %v1259 = vpop.f32.mrf.mxu0
    %v1260 = vadd.f32 %v1217, %v1259
    %v1261 = vpop.f32.mrf.mxu0
    %v1262 = vpop.f32.mrf.mxu0
    %v1263 = vpop.f32.mrf.mxu0
    %1264 = vdwg.mxu0
    %v1265 = vadd.f32 %v1260, %v83
    %v1266 = vxor.u32 %v1179, 2147483648
    %v1267 = vmul.f32 %v1266, 1.442695
    %v1268 = vpow.pop %v1267
    %v1269 = vadd.f32 %v1268, 1.0
    %v1270 = vrcp.pop %v1269
    %v1271 = vmul.f32 1.0, %v1270
    %v1272 = vtanh.pop %v1179
    %v1273 = vmul.f32 %v1271, %v961
    %1275 = vrot.lane.b32.xlu0 %v1272, 96
    %v1276 = vpop.permute.xlu0 %1275
    %v1278 = vmul.f32 %v1271, %v1276
    %1280 = vrot.lane.b32.xlu0 %v1278, 16
    %v1281 = vpop.permute.xlu0 %1280
    %v1283 = vadd.f32 %v1273, %v1281
    %v1284 = vtanh.pop %v1283
    %1286 = vrot.lane.b32.xlu0 %v1284, 32
    %v1287 = vpop.permute.xlu0 %1286
    %v1289 = vmul.f32 %v1271, %v1287
    %v1290 = vxor.u32 %v1265, 2147483648
    %v1291 = vmul.f32 %v1290, 1.442695
    %v1292 = vpow.pop %v1291
    %v1293 = vadd.f32 %v1292, 1.0
    %v1294 = vrcp.pop %v1293
    %v1295 = vmul.f32 1.0, %v1294
    %v1296 = vtanh.pop %v1265
    %v1297 = vmul.f32 %v1295, %v985
    %1299 = vrot.lane.b32.xlu0 %v1296, 96
    %v1300 = vpop.permute.xlu0 %1299
    %v1302 = vmul.f32 %v1295, %v1300
    %1304 = vrot.lane.b32.xlu0 %v1302, 16
    %v1305 = vpop.permute.xlu0 %1304
    %v1307 = vadd.f32 %v1297, %v1305
    %v1308 = vtanh.pop %v1307
    %1310 = vrot.lane.b32.xlu0 %v1308, 32
    %v1311 = vpop.permute.xlu0 %1310
    %v1313 = vmul.f32 %v1295, %v1311
    %v1314 = vpack.c.bf16 %v1289, %v1289
    %v1315 = vpack.c.bf16 %v1313, %v1313
    %s1316 = scalar_lea.vmem [#allocation7], 6
    %v1317 = vld [vmem:[%s1316] sm:$0x3]
    %1319 = vrot.lane.b32.xlu0 %v1314, 80
    %v1320 = vpop.permute.xlu0 %1319
    %v1322 = vsel %vm101, %v1320, 0
    %1324 = vmatprep.subr.bf16.mxu0 0
    %1325 = vmatpush1.bf16.msra.mxu0 0
    %1326 = vmatprep.subr.bf16.mxu0 0
    %1327 = vmatpush1.bf16.msra.mxu0 0
    %1328 = vmatprep.subr.bf16.mxu0 0
    %1329 = vmatpush1.bf16.msra.mxu0 0
    %1330 = vmatprep.subr.bf16.mxu0 0
    %1331 = vmatpush1.bf16.msra.mxu0 0
    %1332 = vmatprep.subr.bf16.mxu0 0
    %1333 = vmatpush1.bf16.msra.mxu0 0
    %1334 = vmatprep.subr.bf16.mxu0 0
    %1335 = vmatpush1.bf16.msra.mxu0 0
    %1336 = vmatprep.subr.bf16.mxu0 0
    %1337 = vmatpush1.bf16.msra.mxu0 0
    %1338 = vmatprep.subr.bf16.mxu0 0
    %1339 = vmatpush1.bf16.msra.mxu0 %v347
    %1340 = vmatprep.subr.bf16.mxu0 0
    %1341 = vmatpush2.bf16.msra.mxu0 0
    %1342 = vmatprep.subr.bf16.mxu0 0
    %1343 = vmatpush2.bf16.msra.mxu0 0
    %1344 = vmatprep.subr.bf16.mxu0 0
    %1345 = vmatpush2.bf16.msra.mxu0 0
    %1346 = vmatprep.subr.bf16.mxu0 0
    %1347 = vmatpush2.bf16.msra.mxu0 0
    %1348 = vmatprep.subr.bf16.mxu0 0
    %1349 = vmatpush2.bf16.msra.mxu0 0
    %1350 = vmatprep.subr.bf16.mxu0 0
    %1351 = vmatpush2.bf16.msra.mxu0 0
    %1352 = vmatprep.subr.bf16.mxu0 0
    %1353 = vmatpush2.bf16.msra.mxu0 0
    %1354 = vmatprep.subr.bf16.mxu0 0
    %1355 = vmatpush2.bf16.msra.mxu0 0
    %1356 = vmatprep.mubr.bf16.mxu0 0
    %1357 = vmatmul.mubr.bf16.gmra.mxu0 %v1322
    %v1358 = vpop.f32.mrf.mxu0
    %v1359 = vadd.f32 0.0, %v1358
    %v1360 = vpop.f32.mrf.mxu0
    %v1361 = vpop.f32.mrf.mxu0
    %v1362 = vpop.f32.mrf.mxu0
    %1363 = vdwg.mxu0
    %v1364 = vadd.f32 %v1317, %v1359
    %1365 = vst.msk [vmem:[%s1316] sm:$0x3] %vm85, %v1364
    %s1366 = scalar_lea.vmem [#allocation7], 8
    %v1367 = vld [vmem:[%s1366] sm:$0x3]
    %1369 = vrot.lane.b32.xlu0 %v1315, 80
    %v1370 = vpop.permute.xlu0 %1369
    %v1372 = vsel %vm101, %v1370, 0
    %1374 = vmatprep.subr.bf16.mxu0 0
    %1375 = vmatpush1.bf16.msra.mxu0 0
    %1376 = vmatprep.subr.bf16.mxu0 0
    %1377 = vmatpush1.bf16.msra.mxu0 0
    %1378 = vmatprep.subr.bf16.mxu0 0
    %1379 = vmatpush1.bf16.msra.mxu0 0
    %1380 = vmatprep.subr.bf16.mxu0 0
    %1381 = vmatpush1.bf16.msra.mxu0 0
    %1382 = vmatprep.subr.bf16.mxu0 0
    %1383 = vmatpush1.bf16.msra.mxu0 0
    %1384 = vmatprep.subr.bf16.mxu0 0
    %1385 = vmatpush1.bf16.msra.mxu0 0
    %1386 = vmatprep.subr.bf16.mxu0 0
    %1387 = vmatpush1.bf16.msra.mxu0 0
    %1388 = vmatprep.subr.bf16.mxu0 0
    %1389 = vmatpush1.bf16.msra.mxu0 %v403
    %1390 = vmatprep.subr.bf16.mxu0 0
    %1391 = vmatpush2.bf16.msra.mxu0 0
    %1392 = vmatprep.subr.bf16.mxu0 0
    %1393 = vmatpush2.bf16.msra.mxu0 0
    %1394 = vmatprep.subr.bf16.mxu0 0
    %1395 = vmatpush2.bf16.msra.mxu0 0
    %1396 = vmatprep.subr.bf16.mxu0 0
    %1397 = vmatpush2.bf16.msra.mxu0 0
    %1398 = vmatprep.subr.bf16.mxu0 0
    %1399 = vmatpush2.bf16.msra.mxu0 0
    %1400 = vmatprep.subr.bf16.mxu0 0
    %1401 = vmatpush2.bf16.msra.mxu0 0
    %1402 = vmatprep.subr.bf16.mxu0 0
    %1403 = vmatpush2.bf16.msra.mxu0 0
    %1404 = vmatprep.subr.bf16.mxu0 0
    %1405 = vmatpush2.bf16.msra.mxu0 0
    %1406 = vmatprep.mubr.bf16.mxu0 0
    %1407 = vmatmul.mubr.bf16.gmra.mxu0 %v1372
    %v1408 = vpop.f32.mrf.mxu0
    %v1409 = vadd.f32 0.0, %v1408
    %v1410 = vpop.f32.mrf.mxu0
    %v1411 = vpop.f32.mrf.mxu0
    %v1412 = vpop.f32.mrf.mxu0
    %1413 = vdwg.mxu0
    %v1414 = vadd.f32 %v1367, %v1409
    %1415 = vst.msk [vmem:[%s1366] sm:$0x3] %vm85, %v1414
    %v1416 = vld [vmem:[%s1180] sm:$0x1]
    %1417 = vmatprep.subr.bf16.mxu0 0
    %1418 = vmatpush1.bf16.msra.mxu0 0
    %1419 = vmatprep.subr.bf16.mxu0 0
    %1420 = vmatpush1.bf16.msra.mxu0 0
    %1421 = vmatprep.subr.bf16.mxu0 0
    %1422 = vmatpush1.bf16.msra.mxu0 0
    %1423 = vmatprep.subr.bf16.mxu0 0
    %1424 = vmatpush1.bf16.msra.mxu0 0
    %1425 = vmatprep.subr.bf16.mxu0 0
    %1426 = vmatpush1.bf16.msra.mxu0 0
    %1427 = vmatprep.subr.bf16.mxu0 0
    %1428 = vmatpush1.bf16.msra.mxu0 0
    %1429 = vmatprep.subr.bf16.mxu0 0
    %1430 = vmatpush1.bf16.msra.mxu0 0
    %1431 = vmatprep.subr.bf16.mxu0 0
    %1432 = vmatpush1.bf16.msra.mxu0 %v99
    %1433 = vmatprep.subr.bf16.mxu0 0
    %1434 = vmatpush2.bf16.msra.mxu0 0
    %1435 = vmatprep.subr.bf16.mxu0 0
    %1436 = vmatpush2.bf16.msra.mxu0 0
    %1437 = vmatprep.subr.bf16.mxu0 0
    %1438 = vmatpush2.bf16.msra.mxu0 0
    %1439 = vmatprep.subr.bf16.mxu0 0
    %1440 = vmatpush2.bf16.msra.mxu0 0
    %1441 = vmatprep.subr.bf16.mxu0 0
    %1442 = vmatpush2.bf16.msra.mxu0 0
    %1443 = vmatprep.subr.bf16.mxu0 0
    %1444 = vmatpush2.bf16.msra.mxu0 0
    %1445 = vmatprep.subr.bf16.mxu0 0
    %1446 = vmatpush2.bf16.msra.mxu0 0
    %1447 = vmatprep.subr.bf16.mxu0 0
    %1448 = vmatpush2.bf16.msra.mxu0 0
    %1449 = vmatprep.mubr.bf16.mxu0 0
    %1450 = vmatmul.mubr.bf16.gmra.mxu0 %v1322
    %v1451 = vpop.f32.mrf.mxu0
    %v1452 = vadd.f32 0.0, %v1451
    %v1453 = vpop.f32.mrf.mxu0
    %v1454 = vpop.f32.mrf.mxu0
    %v1455 = vpop.f32.mrf.mxu0
    %1456 = vdwg.mxu0
    %v1458 = vsel %vm145, %v1416, 0
    %1460 = vmatprep.subr.bf16.mxu0 0
    %1461 = vmatpush1.bf16.msra.mxu0 0
    %1462 = vmatprep.subr.bf16.mxu0 0
    %1463 = vmatpush1.bf16.msra.mxu0 0
    %1464 = vmatprep.subr.bf16.mxu0 0
    %1465 = vmatpush1.bf16.msra.mxu0 0
    %1466 = vmatprep.subr.bf16.mxu0 0
    %1467 = vmatpush1.bf16.msra.mxu0 0
    %1468 = vmatprep.subr.bf16.mxu0 0
    %1469 = vmatpush1.bf16.msra.mxu0 0
    %1470 = vmatprep.subr.bf16.mxu0 0
    %1471 = vmatpush1.bf16.msra.mxu0 0
    %1472 = vmatprep.subr.bf16.mxu0 0
    %1473 = vmatpush1.bf16.msra.mxu0 0
    %1474 = vmatprep.subr.bf16.mxu0 0
    %1475 = vmatpush1.bf16.msra.mxu0 %v151
    %1476 = vmatprep.subr.bf16.mxu0 0
    %1477 = vmatpush2.bf16.msra.mxu0 0
    %1478 = vmatprep.subr.bf16.mxu0 0
    %1479 = vmatpush2.bf16.msra.mxu0 0
    %1480 = vmatprep.subr.bf16.mxu0 0
    %1481 = vmatpush2.bf16.msra.mxu0 0
    %1482 = vmatprep.subr.bf16.mxu0 0
    %1483 = vmatpush2.bf16.msra.mxu0 0
    %1484 = vmatprep.subr.bf16.mxu0 0
    %1485 = vmatpush2.bf16.msra.mxu0 0
    %1486 = vmatprep.subr.bf16.mxu0 0
    %1487 = vmatpush2.bf16.msra.mxu0 0
    %1488 = vmatprep.subr.bf16.mxu0 0
    %1489 = vmatpush2.bf16.msra.mxu0 0
    %1490 = vmatprep.subr.bf16.mxu0 0
    %1491 = vmatpush2.bf16.msra.mxu0 0
    %1492 = vmatprep.mubr.bf16.mxu0 0
    %1493 = vmatmul.mubr.bf16.gmra.mxu0 %v1458
    %v1494 = vpop.f32.mrf.mxu0
    %v1495 = vadd.f32 %v1452, %v1494
    %v1496 = vpop.f32.mrf.mxu0
    %v1497 = vpop.f32.mrf.mxu0
    %v1498 = vpop.f32.mrf.mxu0
    %1499 = vdwg.mxu0
    %v1500 = vadd.f32 %v1495, %v76
    %v1501 = vld [vmem:[%s1094] sm:$0x1]
    %1502 = vmatprep.subr.bf16.mxu0 0
    %1503 = vmatpush1.bf16.msra.mxu0 0
    %1504 = vmatprep.subr.bf16.mxu0 0
    %1505 = vmatpush1.bf16.msra.mxu0 0
    %1506 = vmatprep.subr.bf16.mxu0 0
    %1507 = vmatpush1.bf16.msra.mxu0 0
    %1508 = vmatprep.subr.bf16.mxu0 0
    %1509 = vmatpush1.bf16.msra.mxu0 0
    %1510 = vmatprep.subr.bf16.mxu0 0
    %1511 = vmatpush1.bf16.msra.mxu0 0
    %1512 = vmatprep.subr.bf16.mxu0 0
    %1513 = vmatpush1.bf16.msra.mxu0 0
    %1514 = vmatprep.subr.bf16.mxu0 0
    %1515 = vmatpush1.bf16.msra.mxu0 0
    %1516 = vmatprep.subr.bf16.mxu0 0
    %1517 = vmatpush1.bf16.msra.mxu0 %v200
    %1518 = vmatprep.subr.bf16.mxu0 0
    %1519 = vmatpush2.bf16.msra.mxu0 0
    %1520 = vmatprep.subr.bf16.mxu0 0
    %1521 = vmatpush2.bf16.msra.mxu0 0
    %1522 = vmatprep.subr.bf16.mxu0 0
    %1523 = vmatpush2.bf16.msra.mxu0 0
    %1524 = vmatprep.subr.bf16.mxu0 0
    %1525 = vmatpush2.bf16.msra.mxu0 0
    %1526 = vmatprep.subr.bf16.mxu0 0
    %1527 = vmatpush2.bf16.msra.mxu0 0
    %1528 = vmatprep.subr.bf16.mxu0 0
    %1529 = vmatpush2.bf16.msra.mxu0 0
    %1530 = vmatprep.subr.bf16.mxu0 0
    %1531 = vmatpush2.bf16.msra.mxu0 0
    %1532 = vmatprep.subr.bf16.mxu0 0
    %1533 = vmatpush2.bf16.msra.mxu0 0
    %1534 = vmatprep.mubr.bf16.mxu0 0
    %1535 = vmatmul.mubr.bf16.gmra.mxu0 %v1372
    %v1536 = vpop.f32.mrf.mxu0
    %v1537 = vadd.f32 0.0, %v1536
    %v1538 = vpop.f32.mrf.mxu0
    %v1539 = vpop.f32.mrf.mxu0
    %v1540 = vpop.f32.mrf.mxu0
    %1541 = vdwg.mxu0
    %v1543 = vsel %vm145, %v1501, 0
    %1545 = vmatprep.subr.bf16.mxu0 0
    %1546 = vmatpush1.bf16.msra.mxu0 0
    %1547 = vmatprep.subr.bf16.mxu0 0
    %1548 = vmatpush1.bf16.msra.mxu0 0
    %1549 = vmatprep.subr.bf16.mxu0 0
    %1550 = vmatpush1.bf16.msra.mxu0 0
    %1551 = vmatprep.subr.bf16.mxu0 0
    %1552 = vmatpush1.bf16.msra.mxu0 0
    %1553 = vmatprep.subr.bf16.mxu0 0
    %1554 = vmatpush1.bf16.msra.mxu0 0
    %1555 = vmatprep.subr.bf16.mxu0 0
    %1556 = vmatpush1.bf16.msra.mxu0 0
    %1557 = vmatprep.subr.bf16.mxu0 0
    %1558 = vmatpush1.bf16.msra.mxu0 0
    %1559 = vmatprep.subr.bf16.mxu0 0
    %1560 = vmatpush1.bf16.msra.mxu0 %v246
    %1561 = vmatprep.subr.bf16.mxu0 0
    %1562 = vmatpush2.bf16.msra.mxu0 0
    %1563 = vmatprep.subr.bf16.mxu0 0
    %1564 = vmatpush2.bf16.msra.mxu0 0
    %1565 = vmatprep.subr.bf16.mxu0 0
    %1566 = vmatpush2.bf16.msra.mxu0 0
    %1567 = vmatprep.subr.bf16.mxu0 0
    %1568 = vmatpush2.bf16.msra.mxu0 0
    %1569 = vmatprep.subr.bf16.mxu0 0
    %1570 = vmatpush2.bf16.msra.mxu0 0
    %1571 = vmatprep.subr.bf16.mxu0 0
    %1572 = vmatpush2.bf16.msra.mxu0 0
    %1573 = vmatprep.subr.bf16.mxu0 0
    %1574 = vmatpush2.bf16.msra.mxu0 0
    %1575 = vmatprep.subr.bf16.mxu0 0
    %1576 = vmatpush2.bf16.msra.mxu0 0
    %1577 = vmatprep.mubr.bf16.mxu0 0
    %1578 = vmatmul.mubr.bf16.gmra.mxu0 %v1543
    %v1579 = vpop.f32.mrf.mxu0
    %v1580 = vadd.f32 %v1537, %v1579
    %v1581 = vpop.f32.mrf.mxu0
    %v1582 = vpop.f32.mrf.mxu0
    %v1583 = vpop.f32.mrf.mxu0
    %1584 = vdwg.mxu0
    %v1585 = vadd.f32 %v1580, %v83
    %v1586 = vxor.u32 %v1500, 2147483648
    %v1587 = vmul.f32 %v1586, 1.442695
    %v1588 = vpow.pop %v1587
    %v1589 = vadd.f32 %v1588, 1.0
    %v1590 = vrcp.pop %v1589
    %v1591 = vmul.f32 1.0, %v1590
    %v1592 = vtanh.pop %v1500
    %v1593 = vmul.f32 %v1591, %v1283
    %1595 = vrot.lane.b32.xlu0 %v1592, 96
    %v1596 = vpop.permute.xlu0 %1595
    %v1598 = vmul.f32 %v1591, %v1596
    %1600 = vrot.lane.b32.xlu0 %v1598, 16
    %v1601 = vpop.permute.xlu0 %1600
    %v1603 = vadd.f32 %v1593, %v1601
    %v1604 = vtanh.pop %v1603
    %1606 = vrot.lane.b32.xlu0 %v1604, 32
    %v1607 = vpop.permute.xlu0 %1606
    %v1609 = vmul.f32 %v1591, %v1607
    %v1610 = vxor.u32 %v1585, 2147483648
    %v1611 = vmul.f32 %v1610, 1.442695
    %v1612 = vpow.pop %v1611
    %v1613 = vadd.f32 %v1612, 1.0
    %v1614 = vrcp.pop %v1613
    %v1615 = vmul.f32 1.0, %v1614
    %v1616 = vtanh.pop %v1585
    %v1617 = vmul.f32 %v1615, %v1307
    %1619 = vrot.lane.b32.xlu0 %v1616, 96
    %v1620 = vpop.permute.xlu0 %1619
    %v1622 = vmul.f32 %v1615, %v1620
    %1624 = vrot.lane.b32.xlu0 %v1622, 16
    %v1625 = vpop.permute.xlu0 %1624
    %v1627 = vadd.f32 %v1617, %v1625
    %v1628 = vtanh.pop %v1627
    %1630 = vrot.lane.b32.xlu0 %v1628, 32
    %v1631 = vpop.permute.xlu0 %1630
    %v1633 = vmul.f32 %v1615, %v1631
    %v1634 = vpack.c.bf16 %v1609, %v1609
    %v1635 = vpack.c.bf16 %v1633, %v1633
    %v1636 = vld [vmem:[%s1366] sm:$0x3]
    %1638 = vrot.lane.b32.xlu0 %v1634, 80
    %v1639 = vpop.permute.xlu0 %1638
    %v1641 = vsel %vm101, %v1639, 0
    %1643 = vmatprep.subr.bf16.mxu0 0
    %1644 = vmatpush1.bf16.msra.mxu0 0
    %1645 = vmatprep.subr.bf16.mxu0 0
    %1646 = vmatpush1.bf16.msra.mxu0 0
    %1647 = vmatprep.subr.bf16.mxu0 0
    %1648 = vmatpush1.bf16.msra.mxu0 0
    %1649 = vmatprep.subr.bf16.mxu0 0
    %1650 = vmatpush1.bf16.msra.mxu0 0
    %1651 = vmatprep.subr.bf16.mxu0 0
    %1652 = vmatpush1.bf16.msra.mxu0 0
    %1653 = vmatprep.subr.bf16.mxu0 0
    %1654 = vmatpush1.bf16.msra.mxu0 0
    %1655 = vmatprep.subr.bf16.mxu0 0
    %1656 = vmatpush1.bf16.msra.mxu0 0
    %1657 = vmatprep.subr.bf16.mxu0 0
    %1658 = vmatpush1.bf16.msra.mxu0 %v347
    %1659 = vmatprep.subr.bf16.mxu0 0
    %1660 = vmatpush2.bf16.msra.mxu0 0
    %1661 = vmatprep.subr.bf16.mxu0 0
    %1662 = vmatpush2.bf16.msra.mxu0 0
    %1663 = vmatprep.subr.bf16.mxu0 0
    %1664 = vmatpush2.bf16.msra.mxu0 0
    %1665 = vmatprep.subr.bf16.mxu0 0
    %1666 = vmatpush2.bf16.msra.mxu0 0
    %1667 = vmatprep.subr.bf16.mxu0 0
    %1668 = vmatpush2.bf16.msra.mxu0 0
    %1669 = vmatprep.subr.bf16.mxu0 0
    %1670 = vmatpush2.bf16.msra.mxu0 0
    %1671 = vmatprep.subr.bf16.mxu0 0
    %1672 = vmatpush2.bf16.msra.mxu0 0
    %1673 = vmatprep.subr.bf16.mxu0 0
    %1674 = vmatpush2.bf16.msra.mxu0 0
    %1675 = vmatprep.mubr.bf16.mxu0 0
    %1676 = vmatmul.mubr.bf16.gmra.mxu0 %v1641
    %v1677 = vpop.f32.mrf.mxu0
    %v1678 = vadd.f32 0.0, %v1677
    %v1679 = vpop.f32.mrf.mxu0
    %v1680 = vpop.f32.mrf.mxu0
    %v1681 = vpop.f32.mrf.mxu0
    %1682 = vdwg.mxu0
    %v1683 = vadd.f32 %v1636, %v1678
    %1684 = vst.msk [vmem:[%s1366] sm:$0x3] %vm85, %v1683
    %v1685 = vld [vmem:[%s1316] sm:$0x3]
    %1687 = vrot.lane.b32.xlu0 %v1635, 80
    %v1688 = vpop.permute.xlu0 %1687
    %v1690 = vsel %vm101, %v1688, 0
    %1692 = vmatprep.subr.bf16.mxu0 0
    %1693 = vmatpush1.bf16.msra.mxu0 0
    %1694 = vmatprep.subr.bf16.mxu0 0
    %1695 = vmatpush1.bf16.msra.mxu0 0
    %1696 = vmatprep.subr.bf16.mxu0 0
    %1697 = vmatpush1.bf16.msra.mxu0 0
    %1698 = vmatprep.subr.bf16.mxu0 0
    %1699 = vmatpush1.bf16.msra.mxu0 0
    %1700 = vmatprep.subr.bf16.mxu0 0
    %1701 = vmatpush1.bf16.msra.mxu0 0
    %1702 = vmatprep.subr.bf16.mxu0 0
    %1703 = vmatpush1.bf16.msra.mxu0 0
    %1704 = vmatprep.subr.bf16.mxu0 0
    %1705 = vmatpush1.bf16.msra.mxu0 0
    %1706 = vmatprep.subr.bf16.mxu0 0
    %1707 = vmatpush1.bf16.msra.mxu0 %v403
    %1708 = vmatprep.subr.bf16.mxu0 0
    %1709 = vmatpush2.bf16.msra.mxu0 0
    %1710 = vmatprep.subr.bf16.mxu0 0
    %1711 = vmatpush2.bf16.msra.mxu0 0
    %1712 = vmatprep.subr.bf16.mxu0 0
    %1713 = vmatpush2.bf16.msra.mxu0 0
    %1714 = vmatprep.subr.bf16.mxu0 0
    %1715 = vmatpush2.bf16.msra.mxu0 0
    %1716 = vmatprep.subr.bf16.mxu0 0
    %1717 = vmatpush2.bf16.msra.mxu0 0
    %1718 = vmatprep.subr.bf16.mxu0 0
    %1719 = vmatpush2.bf16.msra.mxu0 0
    %1720 = vmatprep.subr.bf16.mxu0 0
    %1721 = vmatpush2.bf16.msra.mxu0 0
    %1722 = vmatprep.subr.bf16.mxu0 0
    %1723 = vmatpush2.bf16.msra.mxu0 0
    %1724 = vmatprep.mubr.bf16.mxu0 0
    %1725 = vmatmul.mubr.bf16.gmra.mxu0 %v1690
    %v1726 = vpop.f32.mrf.mxu0
    %v1727 = vadd.f32 0.0, %v1726
    %v1728 = vpop.f32.mrf.mxu0
    %v1729 = vpop.f32.mrf.mxu0
    %v1730 = vpop.f32.mrf.mxu0
    %1731 = vdwg.mxu0
    %v1732 = vadd.f32 %v1685, %v1727
    %1733 = vst.msk [vmem:[%s1316] sm:$0x3] %vm85, %v1732
    %v1734 = vld [vmem:[%s858] sm:$0x1]
    %1735 = vmatprep.subr.bf16.mxu0 0
    %1736 = vmatpush1.bf16.msra.mxu0 0
    %1737 = vmatprep.subr.bf16.mxu0 0
    %1738 = vmatpush1.bf16.msra.mxu0 0
    %1739 = vmatprep.subr.bf16.mxu0 0
    %1740 = vmatpush1.bf16.msra.mxu0 0
    %1741 = vmatprep.subr.bf16.mxu0 0
    %1742 = vmatpush1.bf16.msra.mxu0 0
    %1743 = vmatprep.subr.bf16.mxu0 0
    %1744 = vmatpush1.bf16.msra.mxu0 0
    %1745 = vmatprep.subr.bf16.mxu0 0
    %1746 = vmatpush1.bf16.msra.mxu0 0
    %1747 = vmatprep.subr.bf16.mxu0 0
    %1748 = vmatpush1.bf16.msra.mxu0 0
    %1749 = vmatprep.subr.bf16.mxu0 0
    %1750 = vmatpush1.bf16.msra.mxu0 %v99
    %1751 = vmatprep.subr.bf16.mxu0 0
    %1752 = vmatpush2.bf16.msra.mxu0 0
    %1753 = vmatprep.subr.bf16.mxu0 0
    %1754 = vmatpush2.bf16.msra.mxu0 0
    %1755 = vmatprep.subr.bf16.mxu0 0
    %1756 = vmatpush2.bf16.msra.mxu0 0
    %1757 = vmatprep.subr.bf16.mxu0 0
    %1758 = vmatpush2.bf16.msra.mxu0 0
    %1759 = vmatprep.subr.bf16.mxu0 0
    %1760 = vmatpush2.bf16.msra.mxu0 0
    %1761 = vmatprep.subr.bf16.mxu0 0
    %1762 = vmatpush2.bf16.msra.mxu0 0
    %1763 = vmatprep.subr.bf16.mxu0 0
    %1764 = vmatpush2.bf16.msra.mxu0 0
    %1765 = vmatprep.subr.bf16.mxu0 0
    %1766 = vmatpush2.bf16.msra.mxu0 0
    %1767 = vmatprep.mubr.bf16.mxu0 0
    %1768 = vmatmul.mubr.bf16.gmra.mxu0 %v1641
    %v1769 = vpop.f32.mrf.mxu0
    %v1770 = vadd.f32 0.0, %v1769
    %v1771 = vpop.f32.mrf.mxu0
    %v1772 = vpop.f32.mrf.mxu0
    %v1773 = vpop.f32.mrf.mxu0
    %1774 = vdwg.mxu0
    %v1776 = vsel %vm145, %v1734, 0
    %1778 = vmatprep.subr.bf16.mxu0 0
    %1779 = vmatpush1.bf16.msra.mxu0 0
    %1780 = vmatprep.subr.bf16.mxu0 0
    %1781 = vmatpush1.bf16.msra.mxu0 0
    %1782 = vmatprep.subr.bf16.mxu0 0
    %1783 = vmatpush1.bf16.msra.mxu0 0
    %1784 = vmatprep.subr.bf16.mxu0 0
    %1785 = vmatpush1.bf16.msra.mxu0 0
    %1786 = vmatprep.subr.bf16.mxu0 0
    %1787 = vmatpush1.bf16.msra.mxu0 0
    %1788 = vmatprep.subr.bf16.mxu0 0
    %1789 = vmatpush1.bf16.msra.mxu0 0
    %1790 = vmatprep.subr.bf16.mxu0 0
    %1791 = vmatpush1.bf16.msra.mxu0 0
    %1792 = vmatprep.subr.bf16.mxu0 0
    %1793 = vmatpush1.bf16.msra.mxu0 %v151
    %1794 = vmatprep.subr.bf16.mxu0 0
    %1795 = vmatpush2.bf16.msra.mxu0 0
    %1796 = vmatprep.subr.bf16.mxu0 0
    %1797 = vmatpush2.bf16.msra.mxu0 0
    %1798 = vmatprep.subr.bf16.mxu0 0
    %1799 = vmatpush2.bf16.msra.mxu0 0
    %1800 = vmatprep.subr.bf16.mxu0 0
    %1801 = vmatpush2.bf16.msra.mxu0 0
    %1802 = vmatprep.subr.bf16.mxu0 0
    %1803 = vmatpush2.bf16.msra.mxu0 0
    %1804 = vmatprep.subr.bf16.mxu0 0
    %1805 = vmatpush2.bf16.msra.mxu0 0
    %1806 = vmatprep.subr.bf16.mxu0 0
    %1807 = vmatpush2.bf16.msra.mxu0 0
    %1808 = vmatprep.subr.bf16.mxu0 0
    %1809 = vmatpush2.bf16.msra.mxu0 0
    %1810 = vmatprep.mubr.bf16.mxu0 0
    %1811 = vmatmul.mubr.bf16.gmra.mxu0 %v1776
    %v1812 = vpop.f32.mrf.mxu0
    %v1813 = vadd.f32 %v1770, %v1812
    %v1814 = vpop.f32.mrf.mxu0
    %v1815 = vpop.f32.mrf.mxu0
    %v1816 = vpop.f32.mrf.mxu0
    %1817 = vdwg.mxu0
    %v1818 = vadd.f32 %v1813, %v76
    %v1819 = vld [vmem:[%s772] sm:$0x1]
    %1820 = vmatprep.subr.bf16.mxu0 0
    %1821 = vmatpush1.bf16.msra.mxu0 0
    %1822 = vmatprep.subr.bf16.mxu0 0
    %1823 = vmatpush1.bf16.msra.mxu0 0
    %1824 = vmatprep.subr.bf16.mxu0 0
    %1825 = vmatpush1.bf16.msra.mxu0 0
    %1826 = vmatprep.subr.bf16.mxu0 0
    %1827 = vmatpush1.bf16.msra.mxu0 0
    %1828 = vmatprep.subr.bf16.mxu0 0
    %1829 = vmatpush1.bf16.msra.mxu0 0
    %1830 = vmatprep.subr.bf16.mxu0 0
    %1831 = vmatpush1.bf16.msra.mxu0 0
    %1832 = vmatprep.subr.bf16.mxu0 0
    %1833 = vmatpush1.bf16.msra.mxu0 0
    %1834 = vmatprep.subr.bf16.mxu0 0
    %1835 = vmatpush1.bf16.msra.mxu0 %v200
    %1836 = vmatprep.subr.bf16.mxu0 0
    %1837 = vmatpush2.bf16.msra.mxu0 0
    %1838 = vmatprep.subr.bf16.mxu0 0
    %1839 = vmatpush2.bf16.msra.mxu0 0
    %1840 = vmatprep.subr.bf16.mxu0 0
    %1841 = vmatpush2.bf16.msra.mxu0 0
    %1842 = vmatprep.subr.bf16.mxu0 0
    %1843 = vmatpush2.bf16.msra.mxu0 0
    %1844 = vmatprep.subr.bf16.mxu0 0
    %1845 = vmatpush2.bf16.msra.mxu0 0
    %1846 = vmatprep.subr.bf16.mxu0 0
    %1847 = vmatpush2.bf16.msra.mxu0 0
    %1848 = vmatprep.subr.bf16.mxu0 0
    %1849 = vmatpush2.bf16.msra.mxu0 0
    %1850 = vmatprep.subr.bf16.mxu0 0
    %1851 = vmatpush2.bf16.msra.mxu0 0
    %1852 = vmatprep.mubr.bf16.mxu0 0
    %1853 = vmatmul.mubr.bf16.gmra.mxu0 %v1690
    %v1854 = vpop.f32.mrf.mxu0
    %v1855 = vadd.f32 0.0, %v1854
    %v1856 = vpop.f32.mrf.mxu0
    %v1857 = vpop.f32.mrf.mxu0
    %v1858 = vpop.f32.mrf.mxu0
    %1859 = vdwg.mxu0
    %v1861 = vsel %vm145, %v1819, 0
    %1863 = vmatprep.subr.bf16.mxu0 0
    %1864 = vmatpush1.bf16.msra.mxu0 0
    %1865 = vmatprep.subr.bf16.mxu0 0
    %1866 = vmatpush1.bf16.msra.mxu0 0
    %1867 = vmatprep.subr.bf16.mxu0 0
    %1868 = vmatpush1.bf16.msra.mxu0 0
    %1869 = vmatprep.subr.bf16.mxu0 0
    %1870 = vmatpush1.bf16.msra.mxu0 0
    %1871 = vmatprep.subr.bf16.mxu0 0
    %1872 = vmatpush1.bf16.msra.mxu0 0
    %1873 = vmatprep.subr.bf16.mxu0 0
    %1874 = vmatpush1.bf16.msra.mxu0 0
    %1875 = vmatprep.subr.bf16.mxu0 0
    %1876 = vmatpush1.bf16.msra.mxu0 0
    %1877 = vmatprep.subr.bf16.mxu0 0
    %1878 = vmatpush1.bf16.msra.mxu0 %v246
    %1879 = vmatprep.subr.bf16.mxu0 0
    %1880 = vmatpush2.bf16.msra.mxu0 0
    %1881 = vmatprep.subr.bf16.mxu0 0
    %1882 = vmatpush2.bf16.msra.mxu0 0
    %1883 = vmatprep.subr.bf16.mxu0 0
    %1884 = vmatpush2.bf16.msra.mxu0 0
    %1885 = vmatprep.subr.bf16.mxu0 0
    %1886 = vmatpush2.bf16.msra.mxu0 0
    %1887 = vmatprep.subr.bf16.mxu0 0
    %1888 = vmatpush2.bf16.msra.mxu0 0
    %1889 = vmatprep.subr.bf16.mxu0 0
    %1890 = vmatpush2.bf16.msra.mxu0 0
    %1891 = vmatprep.subr.bf16.mxu0 0
    %1892 = vmatpush2.bf16.msra.mxu0 0
    %1893 = vmatprep.subr.bf16.mxu0 0
    %1894 = vmatpush2.bf16.msra.mxu0 0
    %1895 = vmatprep.mubr.bf16.mxu0 0
    %1896 = vmatmul.mubr.bf16.gmra.mxu0 %v1861
    %v1897 = vpop.f32.mrf.mxu0
    %v1898 = vadd.f32 %v1855, %v1897
    %v1899 = vpop.f32.mrf.mxu0
    %v1900 = vpop.f32.mrf.mxu0
    %v1901 = vpop.f32.mrf.mxu0
    %1902 = vdwg.mxu0
    %v1903 = vadd.f32 %v1898, %v83
    %v1904 = vxor.u32 %v1818, 2147483648
    %v1905 = vmul.f32 %v1904, 1.442695
    %v1906 = vpow.pop %v1905
    %v1907 = vadd.f32 %v1906, 1.0
    %v1908 = vrcp.pop %v1907
    %v1909 = vmul.f32 1.0, %v1908
    %v1910 = vtanh.pop %v1818
    %v1911 = vmul.f32 %v1909, %v1603
    %1913 = vrot.lane.b32.xlu0 %v1910, 96
    %v1914 = vpop.permute.xlu0 %1913
    %v1916 = vmul.f32 %v1909, %v1914
    %1918 = vrot.lane.b32.xlu0 %v1916, 16
    %v1919 = vpop.permute.xlu0 %1918
    %v1921 = vadd.f32 %v1911, %v1919
    %v1922 = vtanh.pop %v1921
    %1924 = vrot.lane.b32.xlu0 %v1922, 32
    %v1925 = vpop.permute.xlu0 %1924
    %v1927 = vmul.f32 %v1909, %v1925
    %v1928 = vxor.u32 %v1903, 2147483648
    %v1929 = vmul.f32 %v1928, 1.442695
    %v1930 = vpow.pop %v1929
    %v1931 = vadd.f32 %v1930, 1.0
    %v1932 = vrcp.pop %v1931
    %v1933 = vmul.f32 1.0, %v1932
    %v1934 = vtanh.pop %v1903
    %v1935 = vmul.f32 %v1933, %v1627
    %1937 = vrot.lane.b32.xlu0 %v1934, 96
    %v1938 = vpop.permute.xlu0 %1937
    %v1940 = vmul.f32 %v1933, %v1938
    %1942 = vrot.lane.b32.xlu0 %v1940, 16
    %v1943 = vpop.permute.xlu0 %1942
    %v1945 = vadd.f32 %v1935, %v1943
    %v1946 = vtanh.pop %v1945
    %1948 = vrot.lane.b32.xlu0 %v1946, 32
    %v1949 = vpop.permute.xlu0 %1948
    %v1951 = vmul.f32 %v1933, %v1949
    %v1952 = vpack.c.bf16 %v1927, %v1927
    %v1953 = vpack.c.bf16 %v1951, %v1951
    %v1954 = vld [vmem:[%s1044] sm:$0x3]
    %1956 = vrot.lane.b32.xlu0 %v1952, 80
    %v1957 = vpop.permute.xlu0 %1956
    %v1959 = vsel %vm101, %v1957, 0
    %1961 = vmatprep.subr.bf16.mxu0 0
    %1962 = vmatpush1.bf16.msra.mxu0 0
    %1963 = vmatprep.subr.bf16.mxu0 0
    %1964 = vmatpush1.bf16.msra.mxu0 0
    %1965 = vmatprep.subr.bf16.mxu0 0
    %1966 = vmatpush1.bf16.msra.mxu0 0
    %1967 = vmatprep.subr.bf16.mxu0 0
    %1968 = vmatpush1.bf16.msra.mxu0 0
    %1969 = vmatprep.subr.bf16.mxu0 0
    %1970 = vmatpush1.bf16.msra.mxu0 0
    %1971 = vmatprep.subr.bf16.mxu0 0
    %1972 = vmatpush1.bf16.msra.mxu0 0
    %1973 = vmatprep.subr.bf16.mxu0 0
    %1974 = vmatpush1.bf16.msra.mxu0 0
    %1975 = vmatprep.subr.bf16.mxu0 0
    %1976 = vmatpush1.bf16.msra.mxu0 %v347
    %1977 = vmatprep.subr.bf16.mxu0 0
    %1978 = vmatpush2.bf16.msra.mxu0 0
    %1979 = vmatprep.subr.bf16.mxu0 0
    %1980 = vmatpush2.bf16.msra.mxu0 0
    %1981 = vmatprep.subr.bf16.mxu0 0
    %1982 = vmatpush2.bf16.msra.mxu0 0
    %1983 = vmatprep.subr.bf16.mxu0 0
    %1984 = vmatpush2.bf16.msra.mxu0 0
    %1985 = vmatprep.subr.bf16.mxu0 0
    %1986 = vmatpush2.bf16.msra.mxu0 0
    %1987 = vmatprep.subr.bf16.mxu0 0
    %1988 = vmatpush2.bf16.msra.mxu0 0
    %1989 = vmatprep.subr.bf16.mxu0 0
    %1990 = vmatpush2.bf16.msra.mxu0 0
    %1991 = vmatprep.subr.bf16.mxu0 0
    %1992 = vmatpush2.bf16.msra.mxu0 0
    %1993 = vmatprep.mubr.bf16.mxu0 0
    %1994 = vmatmul.mubr.bf16.gmra.mxu0 %v1959
    %v1995 = vpop.f32.mrf.mxu0
    %v1996 = vadd.f32 0.0, %v1995
    %v1997 = vpop.f32.mrf.mxu0
    %v1998 = vpop.f32.mrf.mxu0
    %v1999 = vpop.f32.mrf.mxu0
    %2000 = vdwg.mxu0
    %v2001 = vadd.f32 %v1954, %v1996
    %2002 = vst.msk [vmem:[%s1044] sm:$0x3] %vm85, %v2001
    %v2003 = vld [vmem:[%s994] sm:$0x3]
    %2005 = vrot.lane.b32.xlu0 %v1953, 80
    %v2006 = vpop.permute.xlu0 %2005
    %v2008 = vsel %vm101, %v2006, 0
    %2010 = vmatprep.subr.bf16.mxu0 0
    %2011 = vmatpush1.bf16.msra.mxu0 0
    %2012 = vmatprep.subr.bf16.mxu0 0
    %2013 = vmatpush1.bf16.msra.mxu0 0
    %2014 = vmatprep.subr.bf16.mxu0 0
    %2015 = vmatpush1.bf16.msra.mxu0 0
    %2016 = vmatprep.subr.bf16.mxu0 0
    %2017 = vmatpush1.bf16.msra.mxu0 0
    %2018 = vmatprep.subr.bf16.mxu0 0
    %2019 = vmatpush1.bf16.msra.mxu0 0
    %2020 = vmatprep.subr.bf16.mxu0 0
    %2021 = vmatpush1.bf16.msra.mxu0 0
    %2022 = vmatprep.subr.bf16.mxu0 0
    %2023 = vmatpush1.bf16.msra.mxu0 0
    %2024 = vmatprep.subr.bf16.mxu0 0
    %2025 = vmatpush1.bf16.msra.mxu0 %v403
    %2026 = vmatprep.subr.bf16.mxu0 0
    %2027 = vmatpush2.bf16.msra.mxu0 0
    %2028 = vmatprep.subr.bf16.mxu0 0
    %2029 = vmatpush2.bf16.msra.mxu0 0
    %2030 = vmatprep.subr.bf16.mxu0 0
    %2031 = vmatpush2.bf16.msra.mxu0 0
    %2032 = vmatprep.subr.bf16.mxu0 0
    %2033 = vmatpush2.bf16.msra.mxu0 0
    %2034 = vmatprep.subr.bf16.mxu0 0
    %2035 = vmatpush2.bf16.msra.mxu0 0
    %2036 = vmatprep.subr.bf16.mxu0 0
    %2037 = vmatpush2.bf16.msra.mxu0 0
    %2038 = vmatprep.subr.bf16.mxu0 0
    %2039 = vmatpush2.bf16.msra.mxu0 0
    %2040 = vmatprep.subr.bf16.mxu0 0
    %2041 = vmatpush2.bf16.msra.mxu0 0
    %2042 = vmatprep.mubr.bf16.mxu0 0
    %2043 = vmatmul.mubr.bf16.gmra.mxu0 %v2008
    %v2044 = vpop.f32.mrf.mxu0
    %v2045 = vadd.f32 0.0, %v2044
    %v2046 = vpop.f32.mrf.mxu0
    %v2047 = vpop.f32.mrf.mxu0
    %v2048 = vpop.f32.mrf.mxu0
    %2049 = vdwg.mxu0
    %v2050 = vadd.f32 %v2003, %v2045
    %2051 = vst.msk [vmem:[%s994] sm:$0x3] %vm85, %v2050
    %v2052 = vld [vmem:[%s536] sm:$0x1]
    %2053 = vmatprep.subr.bf16.mxu0 0
    %2054 = vmatpush1.bf16.msra.mxu0 0
    %2055 = vmatprep.subr.bf16.mxu0 0
    %2056 = vmatpush1.bf16.msra.mxu0 0
    %2057 = vmatprep.subr.bf16.mxu0 0
    %2058 = vmatpush1.bf16.msra.mxu0 0
    %2059 = vmatprep.subr.bf16.mxu0 0
    %2060 = vmatpush1.bf16.msra.mxu0 0
    %2061 = vmatprep.subr.bf16.mxu0 0
    %2062 = vmatpush1.bf16.msra.mxu0 0
    %2063 = vmatprep.subr.bf16.mxu0 0
    %2064 = vmatpush1.bf16.msra.mxu0 0
    %2065 = vmatprep.subr.bf16.mxu0 0
    %2066 = vmatpush1.bf16.msra.mxu0 0
    %2067 = vmatprep.subr.bf16.mxu0 0
    %2068 = vmatpush1.bf16.msra.mxu0 %v99
    %2069 = vmatprep.subr.bf16.mxu0 0
    %2070 = vmatpush2.bf16.msra.mxu0 0
    %2071 = vmatprep.subr.bf16.mxu0 0
    %2072 = vmatpush2.bf16.msra.mxu0 0
    %2073 = vmatprep.subr.bf16.mxu0 0
    %2074 = vmatpush2.bf16.msra.mxu0 0
    %2075 = vmatprep.subr.bf16.mxu0 0
    %2076 = vmatpush2.bf16.msra.mxu0 0
    %2077 = vmatprep.subr.bf16.mxu0 0
    %2078 = vmatpush2.bf16.msra.mxu0 0
    %2079 = vmatprep.subr.bf16.mxu0 0
    %2080 = vmatpush2.bf16.msra.mxu0 0
    %2081 = vmatprep.subr.bf16.mxu0 0
    %2082 = vmatpush2.bf16.msra.mxu0 0
    %2083 = vmatprep.subr.bf16.mxu0 0
    %2084 = vmatpush2.bf16.msra.mxu0 0
    %2085 = vmatprep.mubr.bf16.mxu0 0
    %2086 = vmatmul.mubr.bf16.gmra.mxu0 %v1959
    %v2087 = vpop.f32.mrf.mxu0
    %v2088 = vadd.f32 0.0, %v2087
    %v2089 = vpop.f32.mrf.mxu0
    %v2090 = vpop.f32.mrf.mxu0
    %v2091 = vpop.f32.mrf.mxu0
    %2092 = vdwg.mxu0
    %v2094 = vsel %vm145, %v2052, 0
    %2096 = vmatprep.subr.bf16.mxu0 0
    %2097 = vmatpush1.bf16.msra.mxu0 0
    %2098 = vmatprep.subr.bf16.mxu0 0
    %2099 = vmatpush1.bf16.msra.mxu0 0
    %2100 = vmatprep.subr.bf16.mxu0 0
    %2101 = vmatpush1.bf16.msra.mxu0 0
    %2102 = vmatprep.subr.bf16.mxu0 0
    %2103 = vmatpush1.bf16.msra.mxu0 0
    %2104 = vmatprep.subr.bf16.mxu0 0
    %2105 = vmatpush1.bf16.msra.mxu0 0
    %2106 = vmatprep.subr.bf16.mxu0 0
    %2107 = vmatpush1.bf16.msra.mxu0 0
    %2108 = vmatprep.subr.bf16.mxu0 0
    %2109 = vmatpush1.bf16.msra.mxu0 0
    %2110 = vmatprep.subr.bf16.mxu0 0
    %2111 = vmatpush1.bf16.msra.mxu0 %v151
    %2112 = vmatprep.subr.bf16.mxu0 0
    %2113 = vmatpush2.bf16.msra.mxu0 0
    %2114 = vmatprep.subr.bf16.mxu0 0
    %2115 = vmatpush2.bf16.msra.mxu0 0
    %2116 = vmatprep.subr.bf16.mxu0 0
    %2117 = vmatpush2.bf16.msra.mxu0 0
    %2118 = vmatprep.subr.bf16.mxu0 0
    %2119 = vmatpush2.bf16.msra.mxu0 0
    %2120 = vmatprep.subr.bf16.mxu0 0
    %2121 = vmatpush2.bf16.msra.mxu0 0
    %2122 = vmatprep.subr.bf16.mxu0 0
    %2123 = vmatpush2.bf16.msra.mxu0 0
    %2124 = vmatprep.subr.bf16.mxu0 0
    %2125 = vmatpush2.bf16.msra.mxu0 0
    %2126 = vmatprep.subr.bf16.mxu0 0
    %2127 = vmatpush2.bf16.msra.mxu0 0
    %2128 = vmatprep.mubr.bf16.mxu0 0
    %2129 = vmatmul.mubr.bf16.gmra.mxu0 %v2094
    %v2130 = vpop.f32.mrf.mxu0
    %v2131 = vadd.f32 %v2088, %v2130
    %v2132 = vpop.f32.mrf.mxu0
    %v2133 = vpop.f32.mrf.mxu0
    %v2134 = vpop.f32.mrf.mxu0
    %2135 = vdwg.mxu0
    %v2136 = vadd.f32 %v2131, %v76
    %v2137 = vld [vmem:[%s450] sm:$0x1]
    %2138 = vmatprep.subr.bf16.mxu0 0
    %2139 = vmatpush1.bf16.msra.mxu0 0
    %2140 = vmatprep.subr.bf16.mxu0 0
    %2141 = vmatpush1.bf16.msra.mxu0 0
    %2142 = vmatprep.subr.bf16.mxu0 0
    %2143 = vmatpush1.bf16.msra.mxu0 0
    %2144 = vmatprep.subr.bf16.mxu0 0
    %2145 = vmatpush1.bf16.msra.mxu0 0
    %2146 = vmatprep.subr.bf16.mxu0 0
    %2147 = vmatpush1.bf16.msra.mxu0 0
    %2148 = vmatprep.subr.bf16.mxu0 0
    %2149 = vmatpush1.bf16.msra.mxu0 0
    %2150 = vmatprep.subr.bf16.mxu0 0
    %2151 = vmatpush1.bf16.msra.mxu0 0
    %2152 = vmatprep.subr.bf16.mxu0 0
    %2153 = vmatpush1.bf16.msra.mxu0 %v200
    %2154 = vmatprep.subr.bf16.mxu0 0
    %2155 = vmatpush2.bf16.msra.mxu0 0
    %2156 = vmatprep.subr.bf16.mxu0 0
    %2157 = vmatpush2.bf16.msra.mxu0 0
    %2158 = vmatprep.subr.bf16.mxu0 0
    %2159 = vmatpush2.bf16.msra.mxu0 0
    %2160 = vmatprep.subr.bf16.mxu0 0
    %2161 = vmatpush2.bf16.msra.mxu0 0
    %2162 = vmatprep.subr.bf16.mxu0 0
    %2163 = vmatpush2.bf16.msra.mxu0 0
    %2164 = vmatprep.subr.bf16.mxu0 0
    %2165 = vmatpush2.bf16.msra.mxu0 0
    %2166 = vmatprep.subr.bf16.mxu0 0
    %2167 = vmatpush2.bf16.msra.mxu0 0
    %2168 = vmatprep.subr.bf16.mxu0 0
    %2169 = vmatpush2.bf16.msra.mxu0 0
    %2170 = vmatprep.mubr.bf16.mxu0 0
    %2171 = vmatmul.mubr.bf16.gmra.mxu0 %v2008
    %v2172 = vpop.f32.mrf.mxu0
    %v2173 = vadd.f32 0.0, %v2172
    %v2174 = vpop.f32.mrf.mxu0
    %v2175 = vpop.f32.mrf.mxu0
    %v2176 = vpop.f32.mrf.mxu0
    %2177 = vdwg.mxu0
    %v2179 = vsel %vm145, %v2137, 0
    %2181 = vmatprep.subr.bf16.mxu0 0
    %2182 = vmatpush1.bf16.msra.mxu0 0
    %2183 = vmatprep.subr.bf16.mxu0 0
    %2184 = vmatpush1.bf16.msra.mxu0 0
    %2185 = vmatprep.subr.bf16.mxu0 0
    %2186 = vmatpush1.bf16.msra.mxu0 0
    %2187 = vmatprep.subr.bf16.mxu0 0
    %2188 = vmatpush1.bf16.msra.mxu0 0
    %2189 = vmatprep.subr.bf16.mxu0 0
    %2190 = vmatpush1.bf16.msra.mxu0 0
    %2191 = vmatprep.subr.bf16.mxu0 0
    %2192 = vmatpush1.bf16.msra.mxu0 0
    %2193 = vmatprep.subr.bf16.mxu0 0
    %2194 = vmatpush1.bf16.msra.mxu0 0
    %2195 = vmatprep.subr.bf16.mxu0 0
    %2196 = vmatpush1.bf16.msra.mxu0 %v246
    %2197 = vmatprep.subr.bf16.mxu0 0
    %2198 = vmatpush2.bf16.msra.mxu0 0
    %2199 = vmatprep.subr.bf16.mxu0 0
    %2200 = vmatpush2.bf16.msra.mxu0 0
    %2201 = vmatprep.subr.bf16.mxu0 0
    %2202 = vmatpush2.bf16.msra.mxu0 0
    %2203 = vmatprep.subr.bf16.mxu0 0
    %2204 = vmatpush2.bf16.msra.mxu0 0
    %2205 = vmatprep.subr.bf16.mxu0 0
    %2206 = vmatpush2.bf16.msra.mxu0 0
    %2207 = vmatprep.subr.bf16.mxu0 0
    %2208 = vmatpush2.bf16.msra.mxu0 0
    %2209 = vmatprep.subr.bf16.mxu0 0
    %2210 = vmatpush2.bf16.msra.mxu0 0
    %2211 = vmatprep.subr.bf16.mxu0 0
    %2212 = vmatpush2.bf16.msra.mxu0 0
    %2213 = vmatprep.mubr.bf16.mxu0 0
    %2214 = vmatmul.mubr.bf16.gmra.mxu0 %v2179
    %v2215 = vpop.f32.mrf.mxu0
    %v2216 = vadd.f32 %v2173, %v2215
    %v2217 = vpop.f32.mrf.mxu0
    %v2218 = vpop.f32.mrf.mxu0
    %v2219 = vpop.f32.mrf.mxu0
    %2220 = vdwg.mxu0
    %v2221 = vadd.f32 %v2216, %v83
    %v2222 = vxor.u32 %v2136, 2147483648
    %v2223 = vmul.f32 %v2222, 1.442695
    %v2224 = vpow.pop %v2223
    %v2225 = vadd.f32 %v2224, 1.0
    %v2226 = vrcp.pop %v2225
    %v2227 = vmul.f32 1.0, %v2226
    %v2228 = vtanh.pop %v2136
    %v2229 = vmul.f32 %v2227, %v1921
    %2231 = vrot.lane.b32.xlu0 %v2228, 96
    %v2232 = vpop.permute.xlu0 %2231
    %v2234 = vmul.f32 %v2227, %v2232
    %2236 = vrot.lane.b32.xlu0 %v2234, 16
    %v2237 = vpop.permute.xlu0 %2236
    %v2239 = vadd.f32 %v2229, %v2237
    %v2240 = vtanh.pop %v2239
    %2242 = vrot.lane.b32.xlu0 %v2240, 32
    %v2243 = vpop.permute.xlu0 %2242
    %v2245 = vmul.f32 %v2227, %v2243
    %v2246 = vxor.u32 %v2221, 2147483648
    %v2247 = vmul.f32 %v2246, 1.442695
    %v2248 = vpow.pop %v2247
    %v2249 = vadd.f32 %v2248, 1.0
    %v2250 = vrcp.pop %v2249
    %v2251 = vmul.f32 1.0, %v2250
    %v2252 = vtanh.pop %v2221
    %v2253 = vmul.f32 %v2251, %v1945
    %2255 = vrot.lane.b32.xlu0 %v2252, 96
    %v2256 = vpop.permute.xlu0 %2255
    %v2258 = vmul.f32 %v2251, %v2256
    %2260 = vrot.lane.b32.xlu0 %v2258, 16
    %v2261 = vpop.permute.xlu0 %2260
    %v2263 = vadd.f32 %v2253, %v2261
    %v2264 = vtanh.pop %v2263
    %2266 = vrot.lane.b32.xlu0 %v2264, 32
    %v2267 = vpop.permute.xlu0 %2266
    %v2269 = vmul.f32 %v2251, %v2267
    %v2270 = vpack.c.bf16 %v2245, %v2245
    %v2271 = vpack.c.bf16 %v2269, %v2269
    %v2272 = vld [vmem:[%s722] sm:$0x3]
    %2274 = vrot.lane.b32.xlu0 %v2270, 80
    %v2275 = vpop.permute.xlu0 %2274
    %v2277 = vsel %vm101, %v2275, 0
    %2279 = vmatprep.subr.bf16.mxu0 0
    %2280 = vmatpush1.bf16.msra.mxu0 0
    %2281 = vmatprep.subr.bf16.mxu0 0
    %2282 = vmatpush1.bf16.msra.mxu0 0
    %2283 = vmatprep.subr.bf16.mxu0 0
    %2284 = vmatpush1.bf16.msra.mxu0 0
    %2285 = vmatprep.subr.bf16.mxu0 0
    %2286 = vmatpush1.bf16.msra.mxu0 0
    %2287 = vmatprep.subr.bf16.mxu0 0
    %2288 = vmatpush1.bf16.msra.mxu0 0
    %2289 = vmatprep.subr.bf16.mxu0 0
    %2290 = vmatpush1.bf16.msra.mxu0 0
    %2291 = vmatprep.subr.bf16.mxu0 0
    %2292 = vmatpush1.bf16.msra.mxu0 0
    %2293 = vmatprep.subr.bf16.mxu0 0
    %2294 = vmatpush1.bf16.msra.mxu0 %v347
    %2295 = vmatprep.subr.bf16.mxu0 0
    %2296 = vmatpush2.bf16.msra.mxu0 0
    %2297 = vmatprep.subr.bf16.mxu0 0
    %2298 = vmatpush2.bf16.msra.mxu0 0
    %2299 = vmatprep.subr.bf16.mxu0 0
    %2300 = vmatpush2.bf16.msra.mxu0 0
    %2301 = vmatprep.subr.bf16.mxu0 0
    %2302 = vmatpush2.bf16.msra.mxu0 0
    %2303 = vmatprep.subr.bf16.mxu0 0
    %2304 = vmatpush2.bf16.msra.mxu0 0
    %2305 = vmatprep.subr.bf16.mxu0 0
    %2306 = vmatpush2.bf16.msra.mxu0 0
    %2307 = vmatprep.subr.bf16.mxu0 0
    %2308 = vmatpush2.bf16.msra.mxu0 0
    %2309 = vmatprep.subr.bf16.mxu0 0
    %2310 = vmatpush2.bf16.msra.mxu0 0
    %2311 = vmatprep.mubr.bf16.mxu0 0
    %2312 = vmatmul.mubr.bf16.gmra.mxu0 %v2277
    %v2313 = vpop.f32.mrf.mxu0
    %v2314 = vadd.f32 0.0, %v2313
    %v2315 = vpop.f32.mrf.mxu0
    %v2316 = vpop.f32.mrf.mxu0
    %v2317 = vpop.f32.mrf.mxu0
    %2318 = vdwg.mxu0
    %v2319 = vadd.f32 %v2272, %v2314
    %2320 = vst.msk [vmem:[%s722] sm:$0x3] %vm85, %v2319
    %v2321 = vld [vmem:[%s672] sm:$0x3]
    %2323 = vrot.lane.b32.xlu0 %v2271, 80
    %v2324 = vpop.permute.xlu0 %2323
    %v2326 = vsel %vm101, %v2324, 0
    %2328 = vmatprep.subr.bf16.mxu0 0
    %2329 = vmatpush1.bf16.msra.mxu0 0
    %2330 = vmatprep.subr.bf16.mxu0 0
    %2331 = vmatpush1.bf16.msra.mxu0 0
    %2332 = vmatprep.subr.bf16.mxu0 0
    %2333 = vmatpush1.bf16.msra.mxu0 0
    %2334 = vmatprep.subr.bf16.mxu0 0
    %2335 = vmatpush1.bf16.msra.mxu0 0
    %2336 = vmatprep.subr.bf16.mxu0 0
    %2337 = vmatpush1.bf16.msra.mxu0 0
    %2338 = vmatprep.subr.bf16.mxu0 0
    %2339 = vmatpush1.bf16.msra.mxu0 0
    %2340 = vmatprep.subr.bf16.mxu0 0
    %2341 = vmatpush1.bf16.msra.mxu0 0
    %2342 = vmatprep.subr.bf16.mxu0 0
    %2343 = vmatpush1.bf16.msra.mxu0 %v403
    %2344 = vmatprep.subr.bf16.mxu0 0
    %2345 = vmatpush2.bf16.msra.mxu0 0
    %2346 = vmatprep.subr.bf16.mxu0 0
    %2347 = vmatpush2.bf16.msra.mxu0 0
    %2348 = vmatprep.subr.bf16.mxu0 0
    %2349 = vmatpush2.bf16.msra.mxu0 0
    %2350 = vmatprep.subr.bf16.mxu0 0
    %2351 = vmatpush2.bf16.msra.mxu0 0
    %2352 = vmatprep.subr.bf16.mxu0 0
    %2353 = vmatpush2.bf16.msra.mxu0 0
    %2354 = vmatprep.subr.bf16.mxu0 0
    %2355 = vmatpush2.bf16.msra.mxu0 0
    %2356 = vmatprep.subr.bf16.mxu0 0
    %2357 = vmatpush2.bf16.msra.mxu0 0
    %2358 = vmatprep.subr.bf16.mxu0 0
    %2359 = vmatpush2.bf16.msra.mxu0 0
    %2360 = vmatprep.mubr.bf16.mxu0 0
    %2361 = vmatmul.mubr.bf16.gmra.mxu0 %v2326
    %v2362 = vpop.f32.mrf.mxu0
    %v2363 = vadd.f32 0.0, %v2362
    %v2364 = vpop.f32.mrf.mxu0
    %v2365 = vpop.f32.mrf.mxu0
    %v2366 = vpop.f32.mrf.mxu0
    %2367 = vdwg.mxu0
    %v2368 = vadd.f32 %v2321, %v2363
    %2369 = vst.msk [vmem:[%s672] sm:$0x3] %vm85, %v2368
    %v2370 = vld [vmem:[%s194] sm:$0x1]
    %2371 = vmatprep.subr.bf16.mxu0 0
    %2372 = vmatpush1.bf16.msra.mxu0 0
    %2373 = vmatprep.subr.bf16.mxu0 0
    %2374 = vmatpush1.bf16.msra.mxu0 0
    %2375 = vmatprep.subr.bf16.mxu0 0
    %2376 = vmatpush1.bf16.msra.mxu0 0
    %2377 = vmatprep.subr.bf16.mxu0 0
    %2378 = vmatpush1.bf16.msra.mxu0 0
    %2379 = vmatprep.subr.bf16.mxu0 0
    %2380 = vmatpush1.bf16.msra.mxu0 0
    %2381 = vmatprep.subr.bf16.mxu0 0
    %2382 = vmatpush1.bf16.msra.mxu0 0
    %2383 = vmatprep.subr.bf16.mxu0 0
    %2384 = vmatpush1.bf16.msra.mxu0 0
    %2385 = vmatprep.subr.bf16.mxu0 0
    %2386 = vmatpush1.bf16.msra.mxu0 %v99
    %2387 = vmatprep.subr.bf16.mxu0 0
    %2388 = vmatpush2.bf16.msra.mxu0 0
    %2389 = vmatprep.subr.bf16.mxu0 0
    %2390 = vmatpush2.bf16.msra.mxu0 0
    %2391 = vmatprep.subr.bf16.mxu0 0
    %2392 = vmatpush2.bf16.msra.mxu0 0
    %2393 = vmatprep.subr.bf16.mxu0 0
    %2394 = vmatpush2.bf16.msra.mxu0 0
    %2395 = vmatprep.subr.bf16.mxu0 0
    %2396 = vmatpush2.bf16.msra.mxu0 0
    %2397 = vmatprep.subr.bf16.mxu0 0
    %2398 = vmatpush2.bf16.msra.mxu0 0
    %2399 = vmatprep.subr.bf16.mxu0 0
    %2400 = vmatpush2.bf16.msra.mxu0 0
    %2401 = vmatprep.subr.bf16.mxu0 0
    %2402 = vmatpush2.bf16.msra.mxu0 0
    %2403 = vmatprep.mubr.bf16.mxu0 0
    %2404 = vmatmul.mubr.bf16.gmra.mxu0 %v2277
    %v2405 = vpop.f32.mrf.mxu0
    %v2406 = vadd.f32 0.0, %v2405
    %v2407 = vpop.f32.mrf.mxu0
    %v2408 = vpop.f32.mrf.mxu0
    %v2409 = vpop.f32.mrf.mxu0
    %2410 = vdwg.mxu0
    %v2412 = vsel %vm145, %v2370, 0
    %2414 = vmatprep.subr.bf16.mxu0 0
    %2415 = vmatpush1.bf16.msra.mxu0 0
    %2416 = vmatprep.subr.bf16.mxu0 0
    %2417 = vmatpush1.bf16.msra.mxu0 0
    %2418 = vmatprep.subr.bf16.mxu0 0
    %2419 = vmatpush1.bf16.msra.mxu0 0
    %2420 = vmatprep.subr.bf16.mxu0 0
    %2421 = vmatpush1.bf16.msra.mxu0 0
    %2422 = vmatprep.subr.bf16.mxu0 0
    %2423 = vmatpush1.bf16.msra.mxu0 0
    %2424 = vmatprep.subr.bf16.mxu0 0
    %2425 = vmatpush1.bf16.msra.mxu0 0
    %2426 = vmatprep.subr.bf16.mxu0 0
    %2427 = vmatpush1.bf16.msra.mxu0 0
    %2428 = vmatprep.subr.bf16.mxu0 0
    %2429 = vmatpush1.bf16.msra.mxu0 %v151
    %2430 = vmatprep.subr.bf16.mxu0 0
    %2431 = vmatpush2.bf16.msra.mxu0 0
    %2432 = vmatprep.subr.bf16.mxu0 0
    %2433 = vmatpush2.bf16.msra.mxu0 0
    %2434 = vmatprep.subr.bf16.mxu0 0
    %2435 = vmatpush2.bf16.msra.mxu0 0
    %2436 = vmatprep.subr.bf16.mxu0 0
    %2437 = vmatpush2.bf16.msra.mxu0 0
    %2438 = vmatprep.subr.bf16.mxu0 0
    %2439 = vmatpush2.bf16.msra.mxu0 0
    %2440 = vmatprep.subr.bf16.mxu0 0
    %2441 = vmatpush2.bf16.msra.mxu0 0
    %2442 = vmatprep.subr.bf16.mxu0 0
    %2443 = vmatpush2.bf16.msra.mxu0 0
    %2444 = vmatprep.subr.bf16.mxu0 0
    %2445 = vmatpush2.bf16.msra.mxu0 0
    %2446 = vmatprep.mubr.bf16.mxu0 0
    %2447 = vmatmul.mubr.bf16.gmra.mxu0 %v2412
    %v2448 = vpop.f32.mrf.mxu0
    %v2449 = vadd.f32 %v2406, %v2448
    %v2450 = vpop.f32.mrf.mxu0
    %v2451 = vpop.f32.mrf.mxu0
    %v2452 = vpop.f32.mrf.mxu0
    %2453 = vdwg.mxu0
    %v2454 = vadd.f32 %v2449, %v76
    %v2455 = vld [vmem:[%s0] sm:$0x1]
    %2456 = vmatprep.subr.bf16.mxu0 0
    %2457 = vmatpush1.bf16.msra.mxu0 0
    %2458 = vmatprep.subr.bf16.mxu0 0
    %2459 = vmatpush1.bf16.msra.mxu0 0
    %2460 = vmatprep.subr.bf16.mxu0 0
    %2461 = vmatpush1.bf16.msra.mxu0 0
    %2462 = vmatprep.subr.bf16.mxu0 0
    %2463 = vmatpush1.bf16.msra.mxu0 0
    %2464 = vmatprep.subr.bf16.mxu0 0
    %2465 = vmatpush1.bf16.msra.mxu0 0
    %2466 = vmatprep.subr.bf16.mxu0 0
    %2467 = vmatpush1.bf16.msra.mxu0 0
    %2468 = vmatprep.subr.bf16.mxu0 0
    %2469 = vmatpush1.bf16.msra.mxu0 0
    %2470 = vmatprep.subr.bf16.mxu0 0
    %2471 = vmatpush1.bf16.msra.mxu0 %v200
    %2472 = vmatprep.subr.bf16.mxu0 0
    %2473 = vmatpush2.bf16.msra.mxu0 0
    %2474 = vmatprep.subr.bf16.mxu0 0
    %2475 = vmatpush2.bf16.msra.mxu0 0
    %2476 = vmatprep.subr.bf16.mxu0 0
    %2477 = vmatpush2.bf16.msra.mxu0 0
    %2478 = vmatprep.subr.bf16.mxu0 0
    %2479 = vmatpush2.bf16.msra.mxu0 0
    %2480 = vmatprep.subr.bf16.mxu0 0
    %2481 = vmatpush2.bf16.msra.mxu0 0
    %2482 = vmatprep.subr.bf16.mxu0 0
    %2483 = vmatpush2.bf16.msra.mxu0 0
    %2484 = vmatprep.subr.bf16.mxu0 0
    %2485 = vmatpush2.bf16.msra.mxu0 0
    %2486 = vmatprep.subr.bf16.mxu0 0
    %2487 = vmatpush2.bf16.msra.mxu0 0
    %2488 = vmatprep.mubr.bf16.mxu0 0
    %2489 = vmatmul.mubr.bf16.gmra.mxu0 %v2326
    %v2490 = vpop.f32.mrf.mxu0
    %v2491 = vadd.f32 0.0, %v2490
    %v2492 = vpop.f32.mrf.mxu0
    %v2493 = vpop.f32.mrf.mxu0
    %v2494 = vpop.f32.mrf.mxu0
    %2495 = vdwg.mxu0
    %v2497 = vsel %vm145, %v2455, 0
    %2499 = vmatprep.subr.bf16.mxu0 0
    %2500 = vmatpush1.bf16.msra.mxu0 0
    %2501 = vmatprep.subr.bf16.mxu0 0
    %2502 = vmatpush1.bf16.msra.mxu0 0
    %2503 = vmatprep.subr.bf16.mxu0 0
    %2504 = vmatpush1.bf16.msra.mxu0 0
    %2505 = vmatprep.subr.bf16.mxu0 0
    %2506 = vmatpush1.bf16.msra.mxu0 0
    %2507 = vmatprep.subr.bf16.mxu0 0
    %2508 = vmatpush1.bf16.msra.mxu0 0
    %2509 = vmatprep.subr.bf16.mxu0 0
    %2510 = vmatpush1.bf16.msra.mxu0 0
    %2511 = vmatprep.subr.bf16.mxu0 0
    %2512 = vmatpush1.bf16.msra.mxu0 0
    %2513 = vmatprep.subr.bf16.mxu0 0
    %2514 = vmatpush1.bf16.msra.mxu0 %v246
    %2515 = vmatprep.subr.bf16.mxu0 0
    %2516 = vmatpush2.bf16.msra.mxu0 0
    %2517 = vmatprep.subr.bf16.mxu0 0
    %2518 = vmatpush2.bf16.msra.mxu0 0
    %2519 = vmatprep.subr.bf16.mxu0 0
    %2520 = vmatpush2.bf16.msra.mxu0 0
    %2521 = vmatprep.subr.bf16.mxu0 0
    %2522 = vmatpush2.bf16.msra.mxu0 0
    %2523 = vmatprep.subr.bf16.mxu0 0
    %2524 = vmatpush2.bf16.msra.mxu0 0
    %2525 = vmatprep.subr.bf16.mxu0 0
    %2526 = vmatpush2.bf16.msra.mxu0 0
    %2527 = vmatprep.subr.bf16.mxu0 0
    %2528 = vmatpush2.bf16.msra.mxu0 0
    %2529 = vmatprep.subr.bf16.mxu0 0
    %2530 = vmatpush2.bf16.msra.mxu0 0
    %2531 = vmatprep.mubr.bf16.mxu0 0
    %2532 = vmatmul.mubr.bf16.gmra.mxu0 %v2497
    %v2533 = vpop.f32.mrf.mxu0
    %v2534 = vadd.f32 %v2491, %v2533
    %v2535 = vpop.f32.mrf.mxu0
    %v2536 = vpop.f32.mrf.mxu0
    %v2537 = vpop.f32.mrf.mxu0
    %2538 = vdwg.mxu0
    %v2539 = vadd.f32 %v2534, %v83
    %v2540 = vxor.u32 %v2454, 2147483648
    %v2541 = vmul.f32 %v2540, 1.442695
    %v2542 = vpow.pop %v2541
    %v2543 = vadd.f32 %v2542, 1.0
    %v2544 = vrcp.pop %v2543
    %v2545 = vmul.f32 1.0, %v2544
    %v2546 = vtanh.pop %v2454
    %v2547 = vmul.f32 %v2545, %v2239
    %2549 = vrot.lane.b32.xlu0 %v2546, 96
    %v2550 = vpop.permute.xlu0 %2549
    %v2552 = vmul.f32 %v2545, %v2550
    %2554 = vrot.lane.b32.xlu0 %v2552, 16
    %v2555 = vpop.permute.xlu0 %2554
    %v2557 = vadd.f32 %v2547, %v2555
    %v2558 = vtanh.pop %v2557
    %2560 = vrot.lane.b32.xlu0 %v2558, 32
    %v2561 = vpop.permute.xlu0 %2560
    %v2563 = vmul.f32 %v2545, %v2561
    %v2564 = vxor.u32 %v2539, 2147483648
    %v2565 = vmul.f32 %v2564, 1.442695
    %v2566 = vpow.pop %v2565
    %v2567 = vadd.f32 %v2566, 1.0
    %v2568 = vrcp.pop %v2567
    %v2569 = vmul.f32 1.0, %v2568
    %v2570 = vtanh.pop %v2539
    %v2571 = vmul.f32 %v2569, %v2263
    %2573 = vrot.lane.b32.xlu0 %v2570, 96
    %v2574 = vpop.permute.xlu0 %2573
    %v2576 = vmul.f32 %v2569, %v2574
    %2578 = vrot.lane.b32.xlu0 %v2576, 16
    %v2579 = vpop.permute.xlu0 %2578
    %v2581 = vadd.f32 %v2571, %v2579
    %v2582 = vtanh.pop %v2581
    %2584 = vrot.lane.b32.xlu0 %v2582, 32
    %v2585 = vpop.permute.xlu0 %2584
    %v2587 = vmul.f32 %v2569, %v2585
    %v2588 = vpack.c.bf16 %v2563, %v2563
    %v2589 = vpack.c.bf16 %v2587, %v2587
    %v2590 = vld [vmem:[%s394] sm:$0x3]
    %2592 = vrot.lane.b32.xlu0 %v2588, 80
    %v2593 = vpop.permute.xlu0 %2592
    %v2595 = vsel %vm101, %v2593, 0
    %2597 = vmatprep.subr.bf16.mxu0 0
    %2598 = vmatpush1.bf16.msra.mxu0 0
    %2599 = vmatprep.subr.bf16.mxu0 0
    %2600 = vmatpush1.bf16.msra.mxu0 0
    %2601 = vmatprep.subr.bf16.mxu0 0
    %2602 = vmatpush1.bf16.msra.mxu0 0
    %2603 = vmatprep.subr.bf16.mxu0 0
    %2604 = vmatpush1.bf16.msra.mxu0 0
    %2605 = vmatprep.subr.bf16.mxu0 0
    %2606 = vmatpush1.bf16.msra.mxu0 0
    %2607 = vmatprep.subr.bf16.mxu0 0
    %2608 = vmatpush1.bf16.msra.mxu0 0
    %2609 = vmatprep.subr.bf16.mxu0 0
    %2610 = vmatpush1.bf16.msra.mxu0 0
    %2611 = vmatprep.subr.bf16.mxu0 0
    %2612 = vmatpush1.bf16.msra.mxu0 %v347
    %2613 = vmatprep.subr.bf16.mxu0 0
    %2614 = vmatpush2.bf16.msra.mxu0 0
    %2615 = vmatprep.subr.bf16.mxu0 0
    %2616 = vmatpush2.bf16.msra.mxu0 0
    %2617 = vmatprep.subr.bf16.mxu0 0
    %2618 = vmatpush2.bf16.msra.mxu0 0
    %2619 = vmatprep.subr.bf16.mxu0 0
    %2620 = vmatpush2.bf16.msra.mxu0 0
    %2621 = vmatprep.subr.bf16.mxu0 0
    %2622 = vmatpush2.bf16.msra.mxu0 0
    %2623 = vmatprep.subr.bf16.mxu0 0
    %2624 = vmatpush2.bf16.msra.mxu0 0
    %2625 = vmatprep.subr.bf16.mxu0 0
    %2626 = vmatpush2.bf16.msra.mxu0 0
    %2627 = vmatprep.subr.bf16.mxu0 0
    %2628 = vmatpush2.bf16.msra.mxu0 0
    %2629 = vmatprep.mubr.bf16.mxu0 0
    %2630 = vmatmul.mubr.bf16.gmra.mxu0 %v2595
    %v2631 = vpop.f32.mrf.mxu0
    %v2632 = vadd.f32 0.0, %v2631
    %v2633 = vpop.f32.mrf.mxu0
    %v2634 = vpop.f32.mrf.mxu0
    %v2635 = vpop.f32.mrf.mxu0
    %2636 = vdwg.mxu0
    %v2637 = vadd.f32 %v2590, %v2632
    %2638 = vst.msk [vmem:[%s394] sm:$0x3] %vm85, %v2637
    %v2639 = vld [vmem:[#allocation7] sm:$0x3]
    %2641 = vrot.lane.b32.xlu0 %v2589, 80
    %v2642 = vpop.permute.xlu0 %2641
    %v2644 = vsel %vm101, %v2642, 0
    %2646 = vmatprep.subr.bf16.mxu0 0
    %2647 = vmatpush1.bf16.msra.mxu0 0
    %2648 = vmatprep.subr.bf16.mxu0 0
    %2649 = vmatpush1.bf16.msra.mxu0 0
    %2650 = vmatprep.subr.bf16.mxu0 0
    %2651 = vmatpush1.bf16.msra.mxu0 0
    %2652 = vmatprep.subr.bf16.mxu0 0
    %2653 = vmatpush1.bf16.msra.mxu0 0
    %2654 = vmatprep.subr.bf16.mxu0 0
    %2655 = vmatpush1.bf16.msra.mxu0 0
    %2656 = vmatprep.subr.bf16.mxu0 0
    %2657 = vmatpush1.bf16.msra.mxu0 0
    %2658 = vmatprep.subr.bf16.mxu0 0
    %2659 = vmatpush1.bf16.msra.mxu0 0
    %2660 = vmatprep.subr.bf16.mxu0 0
    %2661 = vmatpush1.bf16.msra.mxu0 %v403
    %2662 = vmatprep.subr.bf16.mxu0 0
    %2663 = vmatpush2.bf16.msra.mxu0 0
    %2664 = vmatprep.subr.bf16.mxu0 0
    %2665 = vmatpush2.bf16.msra.mxu0 0
    %2666 = vmatprep.subr.bf16.mxu0 0
    %2667 = vmatpush2.bf16.msra.mxu0 0
    %2668 = vmatprep.subr.bf16.mxu0 0
    %2669 = vmatpush2.bf16.msra.mxu0 0
    %2670 = vmatprep.subr.bf16.mxu0 0
    %2671 = vmatpush2.bf16.msra.mxu0 0
    %2672 = vmatprep.subr.bf16.mxu0 0
    %2673 = vmatpush2.bf16.msra.mxu0 0
    %2674 = vmatprep.subr.bf16.mxu0 0
    %2675 = vmatpush2.bf16.msra.mxu0 0
    %2676 = vmatprep.subr.bf16.mxu0 0
    %2677 = vmatpush2.bf16.msra.mxu0 0
    %2678 = vmatprep.mubr.bf16.mxu0 0
    %2679 = vmatmul.mubr.bf16.gmra.mxu0 %v2644
    %v2680 = vpop.f32.mrf.mxu0
    %v2681 = vadd.f32 0.0, %v2680
    %v2682 = vpop.f32.mrf.mxu0
    %v2683 = vpop.f32.mrf.mxu0
    %v2684 = vpop.f32.mrf.mxu0
    %2685 = vdwg.mxu0
    %v2686 = vadd.f32 %v2639, %v2681
    %2687 = vst.msk [vmem:[#allocation7] sm:$0x3] %vm85, %v2686
    %v2688 = vld [vmem:[#allocation7] sm:$0x3]
    %v2689 = vld [vmem:[#allocation7 + $0x2] sm:$0x3]
    %v2690 = vld [vmem:[#allocation7 + $0x4] sm:$0x3]
    %v2691 = vld [vmem:[#allocation7 + $0x6] sm:$0x3]
    %v2692 = vld [vmem:[#allocation7 + $0x8] sm:$0x3]
    %v2693 = vld [vmem:[#allocation7 + $0xa] sm:$0x3]
    %v2694 = vld [vmem:[#allocation7 + $0xc] sm:$0x3]
    %v2695 = vld [vmem:[#allocation7 + $0xe] sm:$0x3]
    %v2696 = vld [vmem:[%s9] sm:$0x1]
    %v2698 = vlaneseq
    %v2699 = vshrl.u32 %v2698, 7
    %v2700 = vsub.s32 0, %v2699
    %v2701 = vrot.slane %v2696, %v2700
    %v2703 = vadd.f32 %v2688, %v2701
    %v2704 = vadd.f32 %v2689, %v2701
    %v2705 = vadd.f32 %v2690, %v2701
    %v2706 = vadd.f32 %v2691, %v2701
    %v2707 = vadd.f32 %v2692, %v2701
    %v2708 = vadd.f32 %v2693, %v2701
    %v2709 = vadd.f32 %v2694, %v2701
    %v2710 = vadd.f32 %v2695, %v2701
    %v2711 = vsel %vm85, %v2703, -inf
    %2712 = vmax.xlane.f32.xlu0 %v2711
    %v2713 = vpop.xlane.xlu0 %2712
    %v2714 = vsel %vm85, %v2704, -inf
    %2715 = vmax.xlane.f32.xlu0 %v2714
    %v2716 = vpop.xlane.xlu0 %2715
    %v2717 = vsel %vm85, %v2705, -inf
    %2718 = vmax.xlane.f32.xlu0 %v2717
    %v2719 = vpop.xlane.xlu0 %2718
    %v2720 = vsel %vm85, %v2706, -inf
    %2721 = vmax.xlane.f32.xlu0 %v2720
    %v2722 = vpop.xlane.xlu0 %2721
    %v2723 = vsel %vm85, %v2707, -inf
    %2724 = vmax.xlane.f32.xlu0 %v2723
    %v2725 = vpop.xlane.xlu0 %2724
    %v2726 = vsel %vm85, %v2708, -inf
    %2727 = vmax.xlane.f32.xlu0 %v2726
    %v2728 = vpop.xlane.xlu0 %2727
    %v2729 = vsel %vm85, %v2709, -inf
    %2730 = vmax.xlane.f32.xlu0 %v2729
    %v2731 = vpop.xlane.xlu0 %2730
    %v2732 = vsel %vm85, %v2710, -inf
    %2733 = vmax.xlane.f32.xlu0 %v2732
    %v2734 = vpop.xlane.xlu0 %2733
    %v2735 = vsub.f32 %v2703, %v2713
    %v2736 = vsub.f32 %v2704, %v2716
    %v2737 = vsub.f32 %v2705, %v2719
    %v2738 = vsub.f32 %v2706, %v2722
    %v2739 = vsub.f32 %v2707, %v2725
    %v2740 = vsub.f32 %v2708, %v2728
    %v2741 = vsub.f32 %v2709, %v2731
    %v2742 = vsub.f32 %v2710, %v2734
    %v2743 = vmul.f32 %v2735, 1.442695
    %v2744 = vpow.pop %v2743
    %v2745 = vmul.f32 %v2736, 1.442695
    %v2746 = vpow.pop %v2745
    %v2747 = vmul.f32 %v2737, 1.442695
    %v2748 = vpow.pop %v2747
    %v2749 = vmul.f32 %v2738, 1.442695
    %v2750 = vpow.pop %v2749
    %v2751 = vmul.f32 %v2739, 1.442695
    %v2752 = vpow.pop %v2751
    %v2753 = vmul.f32 %v2740, 1.442695
    %v2754 = vpow.pop %v2753
    %v2755 = vmul.f32 %v2741, 1.442695
    %v2756 = vpow.pop %v2755
    %v2757 = vmul.f32 %v2742, 1.442695
    %v2758 = vpow.pop %v2757
    %v2759 = vsel %vm85, %v2744, 0.0
    %2760 = vadd.xlane.f32.xlu0 %v2759
    %v2761 = vpop.xlane.xlu0 %2760
    %v2762 = vsel %vm85, %v2746, 0.0
    %2763 = vadd.xlane.f32.xlu0 %v2762
    %v2764 = vpop.xlane.xlu0 %2763
    %v2765 = vsel %vm85, %v2748, 0.0
    %2766 = vadd.xlane.f32.xlu0 %v2765
    %v2767 = vpop.xlane.xlu0 %2766
    %v2768 = vsel %vm85, %v2750, 0.0
    %2769 = vadd.xlane.f32.xlu0 %v2768
    %v2770 = vpop.xlane.xlu0 %2769
    %v2771 = vsel %vm85, %v2752, 0.0
    %2772 = vadd.xlane.f32.xlu0 %v2771
    %v2773 = vpop.xlane.xlu0 %2772
    %v2774 = vsel %vm85, %v2754, 0.0
    %2775 = vadd.xlane.f32.xlu0 %v2774
    %v2776 = vpop.xlane.xlu0 %2775
    %v2777 = vsel %vm85, %v2756, 0.0
    %2778 = vadd.xlane.f32.xlu0 %v2777
    %v2779 = vpop.xlane.xlu0 %2778
    %v2780 = vsel %vm85, %v2758, 0.0
    %2781 = vadd.xlane.f32.xlu0 %v2780
    %v2782 = vpop.xlane.xlu0 %2781
    %v2783 = vlog2.pop %v2761
    %v2784 = vmul.f32 %v2783, 0.6931472
    %v2785 = vlog2.pop %v2764
    %v2786 = vmul.f32 %v2785, 0.6931472
    %v2787 = vlog2.pop %v2767
    %v2788 = vmul.f32 %v2787, 0.6931472
    %v2789 = vlog2.pop %v2770
    %v2790 = vmul.f32 %v2789, 0.6931472
    %v2791 = vlog2.pop %v2773
    %v2792 = vmul.f32 %v2791, 0.6931472
    %v2793 = vlog2.pop %v2776
    %v2794 = vmul.f32 %v2793, 0.6931472
    %v2795 = vlog2.pop %v2779
    %v2796 = vmul.f32 %v2795, 0.6931472
    %v2797 = vlog2.pop %v2782
    %v2798 = vmul.f32 %v2797, 0.6931472
    %v2799 = vadd.f32 %v2784, %v2713
    %v2800 = vadd.f32 %v2786, %v2716
    %v2801 = vadd.f32 %v2788, %v2719
    %v2802 = vadd.f32 %v2790, %v2722
    %v2803 = vadd.f32 %v2792, %v2725
    %v2804 = vadd.f32 %v2794, %v2728
    %v2805 = vadd.f32 %v2796, %v2731
    %v2806 = vadd.f32 %v2798, %v2734
    %v2807 = vsub.f32 %v2703, %v2799
    %v2808 = vsub.f32 %v2704, %v2800
    %v2809 = vsub.f32 %v2705, %v2801
    %v2810 = vsub.f32 %v2706, %v2802
    %v2811 = vsub.f32 %v2707, %v2803
    %v2812 = vsub.f32 %v2708, %v2804
    %v2813 = vsub.f32 %v2709, %v2805
    %v2814 = vsub.f32 %v2710, %v2806
    %2815 = vst.msk [vmem:[#allocation7] sm:$0x3] %vm85, %v2807
    %2816 = vst.msk [vmem:[#allocation7 + $0x2] sm:$0x3] %vm85, %v2808
    %2817 = vst.msk [vmem:[#allocation7 + $0x4] sm:$0x3] %vm85, %v2809
    %2818 = vst.msk [vmem:[#allocation7 + $0x6] sm:$0x3] %vm85, %v2810
    %2819 = vst.msk [vmem:[#allocation7 + $0x8] sm:$0x3] %vm85, %v2811
    %2820 = vst.msk [vmem:[#allocation7 + $0xa] sm:$0x3] %vm85, %v2812
    %2821 = vst.msk [vmem:[#allocation7 + $0xc] sm:$0x3] %vm85, %v2813
    %2822 = vst.msk [vmem:[#allocation7 + $0xe] sm:$0x3] %vm85, %v2814
    // Predicated region
    $region50: #{tpu_custom_call.1} parent=1 // pred_check
      _
    $region51: #{tpu_custom_call.1} parent=1 // pred_check_branch
      %2824 = sbr.rel (0) target = $region53
    $region52: #{tpu_custom_call.1} parent=1 // pred_region
      %s2826 = ssub.s32 256, 256
      %2827 = vsyncadd [#allocation4], %s2826
      %s2828 = sshll.u32 [#allocation7], 4
      %s2829 = int_to_ptr.vmem [resolvable:$true] %s2828
      %2834 = dma.vmem_to_hbm [thread:$0]  %s2829, 256, %s10, [#allocation4], 32, 32, 2
    $region53: #{tpu_custom_call.1} parent=1 // pred_fallthru
      _
    // Predicated region
    $region54: #{tpu_custom_call.1} parent=1 // pred_check
      _
    $region55: #{tpu_custom_call.1} parent=1 // pred_check_branch
      %2836 = sbr.rel (0) target = $region57
    $region56: #{tpu_custom_call.1} parent=1 // pred_region
      %2837 = dma.done [#allocation4], 256
    $region57: #{tpu_custom_call.1} parent=1 // pred_fallthru
      _
    %2838 = vsyncpa [#allocation3], 1
    %2839 = vsyncpa [#allocation6], 1
    %2840 = vsyncpa [#allocation4], 1

</llo_original>
